<compile_context>
chip_gen: v7x
topology: tpu7x:2x2x1
jax: 0.10.0
libtpu: 0.0.40
codegen_flags: <defaults>
</compile_context>

<pallas_src>
import functools

import jax
import jax.numpy as jnp
from jax.experimental import pallas as pl
from jax.experimental.pallas import tpu as pltpu

_BN_EPS = 1e-5


def _vmem_limit_bytes():
    """~75% of physical VMEM (128 MiB on v5e/v6e, 64 MiB on v7x), capped."""
    try:
        cap = int(pltpu.get_tpu_info().vmem_capacity_bytes)
    except Exception:  # no device / query unsupported -> conservative default
        cap = 64 * 1024 * 1024
    return max(32 * 1024 * 1024, min(cap * 3 // 4, 100 * 1024 * 1024))


def _pick_tile_h(H, W, cmax, vmem_limit):
    """Largest H-tile (preferring >=2 tiles) whose per-step buffers fit."""
    img = 2 * 2 * H * W * cmax                       # double-buffered bf16 image block
    budget = max(vmem_limit - img, 4 * 1024 * 1024)
    for th in (512, 256, 128, 64, 32, 16, 8, 4, 2):
        per_tile = (2 * 2 * th * W * cmax            # double-buffered bf16 out tile
                    + 10 * (th + 2) * W * cmax * 4)  # in-kernel f32/bf16 temporaries
        if H % th == 0 and H // th >= 2 and per_tile < budget // 2:
            return th
    return H


# --------------------------------------------------------------------------
# Kernel 1: [optional fused BN+ReLU of previous stage] -> 3x3 SAME conv
#           (halo built in-kernel) -> bf16 conv-output tile + per-n BN stats.
# --------------------------------------------------------------------------
def _conv3x3_stats_kernel(scale_ref, shift_ref, x_ref, wf_ref,
                          y_ref, ssum_ref, ssq_ref, *, apply_act):
    h = pl.program_id(1)
    n_h = pl.num_programs(1)
    _, H, W, Cin = x_ref.shape           # full (unpadded) image of one batch el
    _, TH, _, Cout = y_ref.shape         # output tile
    start = pl.multiple_of(h * TH, TH)

    def prep(rows):
        rows = rows.astype(jnp.float32)
        if apply_act:
            # Fused BN(prev stats) + ReLU of the previous stage, in f32.
            rows = jnp.maximum(rows * scale_ref[...] + shift_ref[...], 0.0)
        return rows

    # Row halo: clamped single-row loads, zeroed at the image border (= SAME
    # padding).  Only two tiny 1-row selects; no full-band masking.
    main = prep(x_ref[0, pl.ds(start, TH), :, :])                       # (TH, W, Cin)
    top = prep(x_ref[0, pl.ds(jnp.maximum(start - 1, 0), 1), :, :])     # (1, W, Cin)
    bot = prep(x_ref[0, pl.ds(jnp.minimum(start + TH, H - 1), 1), :, :])
    top = jnp.where(h > 0, top, 0.0)
    bot = jnp.where(h < n_h - 1, bot, 0.0)
    band = jnp.concatenate([top, main, bot], axis=0)                    # (TH+2, W, Cin)

    # Column halo + kx-fold: lane-concatenate the three column-shifted views so
    # the contraction depth becomes K = 3*Cin (3 matmuls instead of 9).
    zcol = jnp.zeros((TH + 2, 1, Cin), jnp.float32)
    left = jnp.concatenate([zcol, band[:, :W - 1, :]], axis=1)          # x[:, j-1]
    right = jnp.concatenate([band[:, 1:, :], zcol], axis=1)             # x[:, j+1]
    xk = jnp.concatenate([left, band, right], axis=-1).astype(jnp.bfloat16)

    acc = jnp.zeros((TH, W, Cout), jnp.float32)
    for ky in range(3):
        acc += jax.lax.dot_general(
            xk[ky:ky + TH], wf_ref[ky],
            dimension_numbers=(((2,), (0,)), ((), ())),
            preferred_element_type=jnp.float32)

    y_ref[...] = acc[None].astype(y_ref.dtype)                          # bf16 store

    # BN partial stats, accumulated in the VMEM-resident output block across
    # the h axis; written back to HBM once per batch element.
    @pl.when(h == 0)
    def _():
        ssum_ref[...] = jnp.zeros_like(ssum_ref)
        ssq_ref[...] = jnp.zeros_like(ssq_ref)

    ssum_ref[...] += jnp.sum(acc, axis=(0, 1), keepdims=True)
    ssq_ref[...] += jnp.sum(acc * acc, axis=(0, 1), keepdims=True)


def _conv3x3_stats(scale, shift, x, wf, *, apply_act, th, vmem_limit):
    N, H, W, Cin = x.shape
    Cout = wf.shape[-1]
    assert H % th == 0
    n_h = H // th

    flops = 2 * N * H * W * 9 * Cin * Cout
    bytes_accessed = (x.size * x.dtype.itemsize + wf.size * wf.dtype.itemsize
                      + N * H * W * Cout * 2 + 2 * N * Cout * 4)

    kernel = functools.partial(_conv3x3_stats_kernel, apply_act=apply_act)
    return pl.pallas_call(
        kernel,
        out_shape=(
            jax.ShapeDtypeStruct((N, H, W, Cout), jnp.bfloat16),   # conv output
            jax.ShapeDtypeStruct((N, 1, Cout), jnp.float32),        # sum
            jax.ShapeDtypeStruct((N, 1, Cout), jnp.float32),        # sumsq
        ),
        grid=(N, n_h),
        in_specs=[
            pl.BlockSpec((1, Cin), lambda n, h: (0, 0)),            # prev scale
            pl.BlockSpec((1, Cin), lambda n, h: (0, 0)),            # prev shift
            # Image of one batch element; block index constant in h, so it is
            # DMA'd once per n and halo bands are sliced in-kernel with pl.ds.
            pl.BlockSpec((1, H, W, Cin), lambda n, h: (n, 0, 0, 0)),
            pl.BlockSpec((3, 3 * Cin, Cout), lambda n, h: (0, 0, 0)),
        ],
        out_specs=(
            pl.BlockSpec((1, th, W, Cout), lambda n, h: (n, h, 0, 0)),
            pl.BlockSpec((1, 1, Cout), lambda n, h: (n, 0, 0)),      # resident over h
            pl.BlockSpec((1, 1, Cout), lambda n, h: (n, 0, 0)),
        ),
        compiler_params=pltpu.CompilerParams(
            dimension_semantics=("parallel", "arbitrary"),
            vmem_limit_bytes=vmem_limit),
        cost_estimate=pl.CostEstimate(
            flops=flops, transcendentals=0, bytes_accessed=bytes_accessed),
    )(scale, shift, x, wf)


# --------------------------------------------------------------------------
# Kernel 2: final BN-apply + ReLU (tiled pointwise pass, bf16 in / f32 out).
# --------------------------------------------------------------------------
def _bn_relu_kernel(scale_ref, shift_ref, y_ref, o_ref):
    o_ref[...] = jnp.maximum(
        y_ref[...].astype(jnp.float32) * scale_ref[...] + shift_ref[...], 0.0)


def _bn_relu_apply(scale, shift, y, *, th, vmem_limit):
    N, H, W, C = y.shape
    n_h = H // th
    return pl.pallas_call(
        _bn_relu_kernel,
        out_shape=jax.ShapeDtypeStruct((N, H, W, C), jnp.float32),
        grid=(N, n_h),
        in_specs=[
            pl.BlockSpec((1, C), lambda n, h: (0, 0)),
            pl.BlockSpec((1, C), lambda n, h: (0, 0)),
            pl.BlockSpec((1, th, W, C), lambda n, h: (n, h, 0, 0)),
        ],
        out_specs=pl.BlockSpec((1, th, W, C), lambda n, h: (n, h, 0, 0)),
        compiler_params=pltpu.CompilerParams(
            dimension_semantics=("parallel", "parallel"),
            vmem_limit_bytes=vmem_limit),
        cost_estimate=pl.CostEstimate(
            flops=2 * y.size, transcendentals=0,
            bytes_accessed=y.size * (y.dtype.itemsize + 4)),
    )(scale, shift, y)


# --------------------------------------------------------------------------
# Glue
# --------------------------------------------------------------------------
def _bn_scale_shift(ssum, ssq, gamma, beta, count):
    """Training-mode BN (biased variance) from per-batch-element partial stats."""
    total = jnp.sum(ssum, axis=(0, 1))             # (C,)
    total_sq = jnp.sum(ssq, axis=(0, 1))           # (C,)
    mean = total / count
    # TODO(synk): E[x^2]-E[x]^2 in f32 can cancel for large-mean activations;
    # switch to a shifted / Welford-style combine if that regime is hit.
    var = jnp.maximum(total_sq / count - mean * mean, 0.0)
    istd = jax.lax.rsqrt(var + _BN_EPS)
    scale = gamma * istd
    shift = beta - mean * scale
    return (scale.reshape(1, -1).astype(jnp.float32),
            shift.reshape(1, -1).astype(jnp.float32))


@jax.jit
def double_conv(x_nchw, w1_oihw, g1, be1, w2_oihw, b2, g2, be2):
    """Pallas implementation of DoubleConv.forward (NCHW in / NCHW out)."""
    N, Cin, H, W = x_nchw.shape
    Cout = w1_oihw.shape[0]
    vmem_limit = _vmem_limit_bytes()
    th = _pick_tile_h(H, W, max(Cin, Cout), vmem_limit)
    count = N * H * W

    # TODO(synk): fuse these NCHW<->NHWC transposes into the first conv / final
    # BN-apply kernels to remove two wrapper-side activation round trips.
    x = jnp.transpose(x_nchw, (0, 2, 3, 1)).astype(jnp.bfloat16)        # NHWC bf16
    # HWIO, kx folded into the contraction dim -> (3, 3*Cin, Cout).
    w1 = jnp.transpose(w1_oihw, (2, 3, 1, 0)).astype(jnp.bfloat16)
    w1 = w1.reshape(3, 3 * Cin, Cout)
    w2 = jnp.transpose(w2_oihw, (2, 3, 1, 0)).astype(jnp.bfloat16)
    w2 = w2.reshape(3, 3 * Cout, Cout)
    del b2  # cancelled exactly by the training-mode BN2 mean subtraction

    # Stage 1: conv1 (+ partial BN1 stats); raw input, no fused activation.
    one = jnp.ones((1, Cin), jnp.float32)
    zero = jnp.zeros((1, Cin), jnp.float32)
    y1, s1, q1 = _conv3x3_stats(one, zero, x, w1, apply_act=False, th=th,
                                vmem_limit=vmem_limit)
    scale1, shift1 = _bn_scale_shift(s1, q1, g1, be1, count)

    # Stage 2: BN1-apply + ReLU fused into conv2 (+ partial BN2 stats).
    y2, s2, q2 = _conv3x3_stats(scale1, shift1, y1, w2, apply_act=True, th=th,
                                vmem_limit=vmem_limit)
    scale2, shift2 = _bn_scale_shift(s2, q2, g2, be2, count)

    # Final BN2-apply + ReLU.
    out = _bn_relu_apply(scale2, shift2, y2, th=th, vmem_limit=vmem_limit)
    return jnp.transpose(out, (0, 3, 1, 2))                             # -> NCHW


# --------------------------------------------------------------------------
# References (mirror the PyTorch forward in training mode).
# --------------------------------------------------------------------------
def _reference_f32(x, w1, g1, be1, w2, b2, g2, be2):
    dn = ("NCHW", "OIHW", "NCHW")

    def conv(a, w):
        return jax.lax.conv_general_dilated(
            a, w, (1, 1), "SAME", dimension_numbers=dn,
            preferred_element_type=jnp.float32)

    def bn_relu(y, g, b):
        mean = y.mean(axis=(0, 2, 3), keepdims=True)
        var = ((y - mean) ** 2).mean(axis=(0, 2, 3), keepdims=True)
        yn = (y - mean) * jax.lax.rsqrt(var + _BN_EPS)
        return jnp.maximum(yn * g.reshape(1, -1, 1, 1)
                           + b.reshape(1, -1, 1, 1), 0.0)

    y = bn_relu(conv(x, w1), g1, be1)
    y = conv(y, w2) + b2.reshape(1, -1, 1, 1)
    return bn_relu(y, g2, be2)


def _reference_bf16_matched(x, w1, g1, be1, w2, g2, be2):
    """Mirrors the kernel's precision: bf16 MXU operands and bf16 activation
    storage, f32 accumulation / BN statistics, conv2 bias dropped."""
    dn = ("NCHW", "OIHW", "NCHW")

    def conv(a, w):
        return jax.lax.conv_general_dilated(
            a.astype(jnp.bfloat16), w.astype(jnp.bfloat16), (1, 1), "SAME",
            dimension_numbers=dn, preferred_element_type=jnp.float32)

    def bn_params(y, g, b):
        mean = y.mean(axis=(0, 2, 3), keepdims=True)
        var = ((y - mean) ** 2).mean(axis=(0, 2, 3), keepdims=True)
        scale = g.reshape(1, -1, 1, 1) * jax.lax.rsqrt(var + _BN_EPS)
        shift = b.reshape(1, -1, 1, 1) - mean * scale
        return scale, shift

    y1 = conv(x, w1)
    s1, t1 = bn_params(y1, g1, be1)
    a1 = jnp.maximum(y1.astype(jnp.bfloat16).astype(jnp.float32) * s1 + t1, 0.0)
    y2 = conv(a1, w2)
    s2, t2 = bn_params(y2, g2, be2)
    return jnp.maximum(y2.astype(jnp.bfloat16).astype(jnp.float32) * s2 + t2, 0.0)


if __name__ == "__main__":
    # DoubleConv(in_channels=4, out_channels=8) at small shapes.
    N, Cin, Cout, H, W = 2, 4, 8, 16, 16

    key = jax.random.PRNGKey(0)
    k_x, k_w1, k_w2, k_b2 = jax.random.split(key, 4)

    x = jax.random.normal(k_x, (N, Cin, H, W), jnp.float32)
    w1 = 0.1 * jax.random.normal(k_w1, (Cout, Cin, 3, 3), jnp.float32)   # bias=False
    w2 = 0.1 * jax.random.normal(k_w2, (Cout, Cout, 3, 3), jnp.float32)
    b2 = 0.1 * jax.random.normal(k_b2, (Cout,), jnp.float32)
    g1 = jnp.ones((Cout,), jnp.float32)
    be1 = jnp.zeros((Cout,), jnp.float32)
    g2 = jnp.ones((Cout,), jnp.float32)
    be2 = jnp.zeros((Cout,), jnp.float32)

    out = jax.block_until_ready(double_conv(x, w1, g1, be1, w2, b2, g2, be2))
    assert out.shape == (N, Cout, H, W), out.shape

    # Tight check vs a reference that matches the kernel's precision choices.
    ref_bf16 = _reference_bf16_matched(x, w1, g1, be1, w2, g2, be2)
    err_bf16 = float(jnp.max(jnp.abs(out - ref_bf16)))
    assert err_bf16 < 2e-2, f"bf16-matched reference mismatch: {err_bf16}"

    # Loose check vs the pure-f32 PyTorch-equivalent reference (bf16 operands
    # and bf16 activation storage trade a little precision for HBM/MXU rate).
    ref_f32 = _reference_f32(x, w1, g1, be1, w2, b2, g2, be2)
    err_f32 = float(jnp.max(jnp.abs(out - ref_f32)))
    assert err_f32 < 1e-1, f"f32 reference mismatch: {err_f32}"

    print("KERNEL_OK")
</pallas_src>

<mosaic_0001>
module attributes {stable_mosaic.version = 11 : i64} {
  func.func @_conv3x3_stats_kernel(%arg0: i32, %arg1: i32, %arg2: memref<1x4xf32, #tpu.memory_space<vmem>>, %arg3: memref<1x4xf32, #tpu.memory_space<vmem>>, %arg4: memref<1x16x16x4xbf16, #tpu.memory_space<vmem>>, %arg5: memref<3x12x8xbf16, #tpu.memory_space<vmem>>, %arg6: memref<1x8x16x8xbf16, #tpu.memory_space<vmem>>, %arg7: memref<1x1x8xf32, #tpu.memory_space<vmem>>, %arg8: memref<1x1x8xf32, #tpu.memory_space<vmem>>) attributes {dimension_semantics = [#tpu.dimension_semantics<parallel>, #tpu.dimension_semantics<arbitrary>], iteration_bounds = array<i64: 2, 2>, scalar_prefetch = 0 : i64, scratch_operands = 0 : i64, tpu.core_type = #tpu.core_type<tc>, window_params = [{pipeline_mode = #tpu.pipeline_mode<synchronous>, transform_indices = @transform_0, window_bounds = array<i64: 1, 4>}, {pipeline_mode = #tpu.pipeline_mode<synchronous>, transform_indices = @transform_1, window_bounds = array<i64: 1, 4>}, {transform_indices = @transform_2, window_bounds = array<i64: 1, 16, 16, 4>}, {pipeline_mode = #tpu.pipeline_mode<synchronous>, transform_indices = @transform_3, window_bounds = array<i64: 3, 12, 8>}, {transform_indices = @transform_4, window_bounds = array<i64: 1, 8, 16, 8>}, {transform_indices = @transform_5, window_bounds = array<i64: 1, 1, 8>}, {transform_indices = @transform_6, window_bounds = array<i64: 1, 1, 8>}]} {
    %c8_i32 = arith.constant 8 : i32
    %0 = arith.muli %arg1, %c8_i32 : i32
    %1 = tpu.assume_multiple %0, 8 : i32
    %c0 = arith.constant 0 : index
    %2 = arith.index_cast %1 : i32 to index
    %c0_0 = arith.constant 0 : index
    %c0_1 = arith.constant 0 : index
    %3 = vector.load %arg4[%c0, %2, %c0_0, %c0_1] : memref<1x16x16x4xbf16, #tpu.memory_space<vmem>>, vector<1x8x16x4xbf16>
    %4 = vector.shape_cast %3 : vector<1x8x16x4xbf16> to vector<8x16x4xbf16>
    %5 = arith.extf %4 : vector<8x16x4xbf16> to vector<8x16x4xf32>
    %c1_i32 = arith.constant 1 : i32
    %6 = arith.subi %1, %c1_i32 : i32
    %c0_i32 = arith.constant 0 : i32
    %7 = arith.maxsi %6, %c0_i32 : i32
    %c0_2 = arith.constant 0 : index
    %8 = arith.index_cast %7 : i32 to index
    %c0_3 = arith.constant 0 : index
    %c0_4 = arith.constant 0 : index
    %9 = vector.load %arg4[%c0_2, %8, %c0_3, %c0_4] : memref<1x16x16x4xbf16, #tpu.memory_space<vmem>>, vector<1x1x16x4xbf16>
    %10 = vector.shape_cast %9 : vector<1x1x16x4xbf16> to vector<1x16x4xbf16>
    %11 = arith.extf %10 : vector<1x16x4xbf16> to vector<1x16x4xf32>
    %c8_i32_5 = arith.constant 8 : i32
    %12 = arith.addi %1, %c8_i32_5 : i32
    %c15_i32 = arith.constant 15 : i32
    %13 = arith.minsi %12, %c15_i32 : i32
    %c0_6 = arith.constant 0 : index
    %14 = arith.index_cast %13 : i32 to index
    %c0_7 = arith.constant 0 : index
    %c0_8 = arith.constant 0 : index
    %15 = vector.load %arg4[%c0_6, %14, %c0_7, %c0_8] : memref<1x16x16x4xbf16, #tpu.memory_space<vmem>>, vector<1x1x16x4xbf16>
    %16 = vector.shape_cast %15 : vector<1x1x16x4xbf16> to vector<1x16x4xbf16>
    %17 = arith.extf %16 : vector<1x16x4xbf16> to vector<1x16x4xf32>
    %c0_i32_9 = arith.constant 0 : i32
    %18 = arith.cmpi sgt, %arg1, %c0_i32_9 : i32
    %cst = arith.constant 0.000000e+00 : f32
    %19 = vector.broadcast %cst : f32 to vector<1x16x4xf32>
    %20 = arith.select %18, %11, %19 : vector<1x16x4xf32>
    %c1_i32_10 = arith.constant 1 : i32
    %21 = arith.cmpi slt, %arg1, %c1_i32_10 : i32
    %cst_11 = arith.constant 0.000000e+00 : f32
    %22 = vector.broadcast %cst_11 : f32 to vector<1x16x4xf32>
    %23 = arith.select %21, %17, %22 : vector<1x16x4xf32>
    %24 = tpu.concatenate %20, %5, %23 in 0 : vector<1x16x4xf32>, vector<8x16x4xf32>, vector<1x16x4xf32> -> vector<10x16x4xf32>
    %cst_12 = arith.constant 0.000000e+00 : f32
    %25 = vector.broadcast %cst_12 : f32 to vector<10x1x4xf32>
    %26 = vector.extract_strided_slice %24 {offsets = [0, 0, 0], sizes = [10, 15, 4], strides = [1, 1, 1]} : vector<10x16x4xf32> to vector<10x15x4xf32>
    %27 = tpu.concatenate %25, %26 in 1 : vector<10x1x4xf32>, vector<10x15x4xf32> -> vector<10x16x4xf32>
    %28 = vector.extract_strided_slice %24 {offsets = [0, 1, 0], sizes = [10, 15, 4], strides = [1, 1, 1]} : vector<10x16x4xf32> to vector<10x15x4xf32>
    %29 = tpu.concatenate %28, %25 in 1 : vector<10x15x4xf32>, vector<10x1x4xf32> -> vector<10x16x4xf32>
    %30 = tpu.concatenate %27, %24, %29 in 2 : vector<10x16x4xf32>, vector<10x16x4xf32>, vector<10x16x4xf32> -> vector<10x16x12xf32>
    %31 = arith.truncf %30 : vector<10x16x12xf32> to vector<10x16x12xbf16>
    %cst_13 = arith.constant 0.000000e+00 : f32
    %32 = vector.broadcast %cst_13 : f32 to vector<8x16x8xf32>
    %33 = vector.extract_strided_slice %31 {offsets = [0, 0, 0], sizes = [8, 16, 12], strides = [1, 1, 1]} : vector<10x16x12xbf16> to vector<8x16x12xbf16>
    %c0_14 = arith.constant 0 : index
    %c0_15 = arith.constant 0 : index
    %c0_16 = arith.constant 0 : index
    %34 = vector.load %arg5[%c0_14, %c0_15, %c0_16] : memref<3x12x8xbf16, #tpu.memory_space<vmem>>, vector<1x12x8xbf16>
    %35 = vector.shape_cast %34 : vector<1x12x8xbf16> to vector<12x8xbf16>
    %cst_17 = arith.constant dense<0.000000e+00> : vector<8x16x8xf32>
    %36 = tpu.matmul %33, %35, %cst_17 {dimension_numbers = #tpu.dot_dimension_numbers<[2], [0], [0, 1], [1], [0, 0, 0, 1, 1, 1], [], []>} : vector<8x16x12xbf16>, vector<12x8xbf16>, vector<8x16x8xf32> -> vector<8x16x8xf32>
    %37 = arith.addf %32, %36 : vector<8x16x8xf32>
    %38 = vector.extract_strided_slice %31 {offsets = [1, 0, 0], sizes = [8, 16, 12], strides = [1, 1, 1]} : vector<10x16x12xbf16> to vector<8x16x12xbf16>
    %c1 = arith.constant 1 : index
    %c0_18 = arith.constant 0 : index
    %c0_19 = arith.constant 0 : index
    %39 = vector.load %arg5[%c1, %c0_18, %c0_19] : memref<3x12x8xbf16, #tpu.memory_space<vmem>>, vector<1x12x8xbf16>
    %40 = vector.shape_cast %39 : vector<1x12x8xbf16> to vector<12x8xbf16>
    %cst_20 = arith.constant dense<0.000000e+00> : vector<8x16x8xf32>
    %41 = tpu.matmul %38, %40, %cst_20 {dimension_numbers = #tpu.dot_dimension_numbers<[2], [0], [0, 1], [1], [0, 0, 0, 1, 1, 1], [], []>} : vector<8x16x12xbf16>, vector<12x8xbf16>, vector<8x16x8xf32> -> vector<8x16x8xf32>
    %42 = arith.addf %37, %41 : vector<8x16x8xf32>
    %43 = vector.extract_strided_slice %31 {offsets = [2, 0, 0], sizes = [8, 16, 12], strides = [1, 1, 1]} : vector<10x16x12xbf16> to vector<8x16x12xbf16>
    %c2 = arith.constant 2 : index
    %c0_21 = arith.constant 0 : index
    %c0_22 = arith.constant 0 : index
    %44 = vector.load %arg5[%c2, %c0_21, %c0_22] : memref<3x12x8xbf16, #tpu.memory_space<vmem>>, vector<1x12x8xbf16>
    %45 = vector.shape_cast %44 : vector<1x12x8xbf16> to vector<12x8xbf16>
    %cst_23 = arith.constant dense<0.000000e+00> : vector<8x16x8xf32>
    %46 = tpu.matmul %43, %45, %cst_23 {dimension_numbers = #tpu.dot_dimension_numbers<[2], [0], [0, 1], [1], [0, 0, 0, 1, 1, 1], [], []>} : vector<8x16x12xbf16>, vector<12x8xbf16>, vector<8x16x8xf32> -> vector<8x16x8xf32>
    %47 = arith.addf %42, %46 : vector<8x16x8xf32>
    %48 = vector.shape_cast %47 : vector<8x16x8xf32> to vector<1x8x16x8xf32>
    %49 = arith.truncf %48 : vector<1x8x16x8xf32> to vector<1x8x16x8xbf16>
    %c0_24 = arith.constant 0 : index
    %c0_25 = arith.constant 0 : index
    %c0_26 = arith.constant 0 : index
    %c0_27 = arith.constant 0 : index
    %50 = vector.load %arg6[%c0_24, %c0_25, %c0_26, %c0_27] : memref<1x8x16x8xbf16, #tpu.memory_space<vmem>>, vector<1x8x16x8xbf16>
    tpu.vector_store %arg6[%c0_24, %c0_25, %c0_26, %c0_27], %49 {strides = array<i32>} : memref<1x8x16x8xbf16, #tpu.memory_space<vmem>>, vector<1x8x16x8xbf16>,
    %c0_i32_28 = arith.constant 0 : i32
    %51 = arith.cmpi eq, %arg1, %c0_i32_28 : i32
    %52 = arith.extui %51 : i1 to i32
    %c0_i32_29 = arith.constant 0 : i32
    %53 = arith.cmpi ne, %52, %c0_i32_29 : i32
    scf.if %53 {
      %cst_44 = arith.constant 0.000000e+00 : f32
      %65 = vector.broadcast %cst_44 : f32 to vector<1x1x8xf32>
      %c0_45 = arith.constant 0 : index
      %c0_46 = arith.constant 0 : index
      %c0_47 = arith.constant 0 : index
      %66 = vector.load %arg7[%c0_45, %c0_46, %c0_47] : memref<1x1x8xf32, #tpu.memory_space<vmem>>, vector<1x1x8xf32>
      tpu.vector_store %arg7[%c0_45, %c0_46, %c0_47], %65 {strides = array<i32>} : memref<1x1x8xf32, #tpu.memory_space<vmem>>, vector<1x1x8xf32>,
      %cst_48 = arith.constant 0.000000e+00 : f32
      %67 = vector.broadcast %cst_48 : f32 to vector<1x1x8xf32>
      %c0_49 = arith.constant 0 : index
      %c0_50 = arith.constant 0 : index
      %c0_51 = arith.constant 0 : index
      %68 = vector.load %arg8[%c0_49, %c0_50, %c0_51] : memref<1x1x8xf32, #tpu.memory_space<vmem>>, vector<1x1x8xf32>
      tpu.vector_store %arg8[%c0_49, %c0_50, %c0_51], %67 {strides = array<i32>} : memref<1x1x8xf32, #tpu.memory_space<vmem>>, vector<1x1x8xf32>,
    } else {
    }
    %c0_30 = arith.constant 0 : index
    %c0_31 = arith.constant 0 : index
    %c0_32 = arith.constant 0 : index
    %54 = vector.load %arg7[%c0_30, %c0_31, %c0_32] : memref<1x1x8xf32, #tpu.memory_space<vmem>>, vector<1x1x8xf32>
    %cst_33 = arith.constant dense<0.000000e+00> : vector<8xf32>
    %55 = vector.multi_reduction <add>, %47, %cst_33 [0, 1] : vector<8x16x8xf32> to vector<8xf32>
    %56 = vector.shape_cast %55 : vector<8xf32> to vector<1x1x8xf32>
    %57 = arith.addf %54, %56 : vector<1x1x8xf32>
    %c0_34 = arith.constant 0 : index
    %c0_35 = arith.constant 0 : index
    %c0_36 = arith.constant 0 : index
    %58 = vector.load %arg7[%c0_34, %c0_35, %c0_36] : memref<1x1x8xf32, #tpu.memory_space<vmem>>, vector<1x1x8xf32>
    tpu.vector_store %arg7[%c0_34, %c0_35, %c0_36], %57 {strides = array<i32>} : memref<1x1x8xf32, #tpu.memory_space<vmem>>, vector<1x1x8xf32>,
    %c0_37 = arith.constant 0 : index
    %c0_38 = arith.constant 0 : index
    %c0_39 = arith.constant 0 : index
    %59 = vector.load %arg8[%c0_37, %c0_38, %c0_39] : memref<1x1x8xf32, #tpu.memory_space<vmem>>, vector<1x1x8xf32>
    %60 = arith.mulf %47, %47 : vector<8x16x8xf32>
    %cst_40 = arith.constant dense<0.000000e+00> : vector<8xf32>
    %61 = vector.multi_reduction <add>, %60, %cst_40 [0, 1] : vector<8x16x8xf32> to vector<8xf32>
    %62 = vector.shape_cast %61 : vector<8xf32> to vector<1x1x8xf32>
    %63 = arith.addf %59, %62 : vector<1x1x8xf32>
    %c0_41 = arith.constant 0 : index
    %c0_42 = arith.constant 0 : index
    %c0_43 = arith.constant 0 : index
    %64 = vector.load %arg8[%c0_41, %c0_42, %c0_43] : memref<1x1x8xf32, #tpu.memory_space<vmem>>, vector<1x1x8xf32>
    tpu.vector_store %arg8[%c0_41, %c0_42, %c0_43], %63 {strides = array<i32>} : memref<1x1x8xf32, #tpu.memory_space<vmem>>, vector<1x1x8xf32>,
    return
  }
  func.func @transform_0(%arg0: i32, %arg1: i32) -> (i32, i32) {
    %c0_i32 = arith.constant 0 : i32
    %c0_i32_0 = arith.constant 0 : i32
    %c0_i32_1 = arith.constant 0 : i32
    return %c0_i32, %c0_i32_0 : i32, i32
  }
  func.func @transform_1(%arg0: i32, %arg1: i32) -> (i32, i32) {
    %c0_i32 = arith.constant 0 : i32
    %c0_i32_0 = arith.constant 0 : i32
    %c0_i32_1 = arith.constant 0 : i32
    return %c0_i32, %c0_i32_0 : i32, i32
  }
  func.func @transform_2(%arg0: i32, %arg1: i32) -> (i32, i32, i32, i32) {
    %c0_i32 = arith.constant 0 : i32
    %c0_i32_0 = arith.constant 0 : i32
    %c0_i32_1 = arith.constant 0 : i32
    %c0_i32_2 = arith.constant 0 : i32
    return %arg0, %c0_i32, %c0_i32_0, %c0_i32_1 : i32, i32, i32, i32
  }
  func.func @transform_3(%arg0: i32, %arg1: i32) -> (i32, i32, i32) {
    %c0_i32 = arith.constant 0 : i32
    %c0_i32_0 = arith.constant 0 : i32
    %c0_i32_1 = arith.constant 0 : i32
    %c0_i32_2 = arith.constant 0 : i32
    return %c0_i32, %c0_i32_0, %c0_i32_1 : i32, i32, i32
  }
  func.func @transform_4(%arg0: i32, %arg1: i32) -> (i32, i32, i32, i32) {
    %c0_i32 = arith.constant 0 : i32
    %c0_i32_0 = arith.constant 0 : i32
    %c0_i32_1 = arith.constant 0 : i32
    return %arg0, %arg1, %c0_i32, %c0_i32_0 : i32, i32, i32, i32
  }
  func.func @transform_5(%arg0: i32, %arg1: i32) -> (i32, i32, i32) {
    %c0_i32 = arith.constant 0 : i32
    %c0_i32_0 = arith.constant 0 : i32
    %c0_i32_1 = arith.constant 0 : i32
    return %arg0, %c0_i32, %c0_i32_0 : i32, i32, i32
  }
  func.func @transform_6(%arg0: i32, %arg1: i32) -> (i32, i32, i32) {
    %c0_i32 = arith.constant 0 : i32
    %c0_i32_0 = arith.constant 0 : i32
    %c0_i32_1 = arith.constant 0 : i32
    return %arg0, %c0_i32, %c0_i32_0 : i32, i32, i32
  }
}

module attributes {stable_mosaic.version = 11 : i64} {
  func.func @_conv3x3_stats_kernel(%arg0: i32, %arg1: i32, %arg2: memref<1x8xf32, #tpu.memory_space<vmem>>, %arg3: memref<1x8xf32, #tpu.memory_space<vmem>>, %arg4: memref<1x16x16x8xbf16, #tpu.memory_space<vmem>>, %arg5: memref<3x24x8xbf16, #tpu.memory_space<vmem>>, %arg6: memref<1x8x16x8xbf16, #tpu.memory_space<vmem>>, %arg7: memref<1x1x8xf32, #tpu.memory_space<vmem>>, %arg8: memref<1x1x8xf32, #tpu.memory_space<vmem>>) attributes {dimension_semantics = [#tpu.dimension_semantics<parallel>, #tpu.dimension_semantics<arbitrary>], iteration_bounds = array<i64: 2, 2>, scalar_prefetch = 0 : i64, scratch_operands = 0 : i64, tpu.core_type = #tpu.core_type<tc>, window_params = [{pipeline_mode = #tpu.pipeline_mode<synchronous>, transform_indices = @transform_0, window_bounds = array<i64: 1, 8>}, {pipeline_mode = #tpu.pipeline_mode<synchronous>, transform_indices = @transform_1, window_bounds = array<i64: 1, 8>}, {transform_indices = @transform_2, window_bounds = array<i64: 1, 16, 16, 8>}, {pipeline_mode = #tpu.pipeline_mode<synchronous>, transform_indices = @transform_3, window_bounds = array<i64: 3, 24, 8>}, {transform_indices = @transform_4, window_bounds = array<i64: 1, 8, 16, 8>}, {transform_indices = @transform_5, window_bounds = array<i64: 1, 1, 8>}, {transform_indices = @transform_6, window_bounds = array<i64: 1, 1, 8>}]} {
    %c8_i32 = arith.constant 8 : i32
    %0 = arith.muli %arg1, %c8_i32 : i32
    %1 = tpu.assume_multiple %0, 8 : i32
    %c0 = arith.constant 0 : index
    %2 = arith.index_cast %1 : i32 to index
    %c0_0 = arith.constant 0 : index
    %c0_1 = arith.constant 0 : index
    %3 = vector.load %arg4[%c0, %2, %c0_0, %c0_1] : memref<1x16x16x8xbf16, #tpu.memory_space<vmem>>, vector<1x8x16x8xbf16>
    %4 = vector.shape_cast %3 : vector<1x8x16x8xbf16> to vector<8x16x8xbf16>
    %5 = arith.extf %4 : vector<8x16x8xbf16> to vector<8x16x8xf32>
    %c0_2 = arith.constant 0 : index
    %c0_3 = arith.constant 0 : index
    %6 = vector.load %arg2[%c0_2, %c0_3] : memref<1x8xf32, #tpu.memory_space<vmem>>, vector<1x8xf32>
    %7 = vector.shape_cast %6 : vector<1x8xf32> to vector<1x1x8xf32>
    %8 = vector.broadcast %7 : vector<1x1x8xf32> to vector<8x16x8xf32>
    %9 = arith.mulf %5, %8 : vector<8x16x8xf32>
    %c0_4 = arith.constant 0 : index
    %c0_5 = arith.constant 0 : index
    %10 = vector.load %arg3[%c0_4, %c0_5] : memref<1x8xf32, #tpu.memory_space<vmem>>, vector<1x8xf32>
    %11 = vector.shape_cast %10 : vector<1x8xf32> to vector<1x1x8xf32>
    %12 = vector.broadcast %11 : vector<1x1x8xf32> to vector<8x16x8xf32>
    %13 = arith.addf %9, %12 : vector<8x16x8xf32>
    %cst = arith.constant 0.000000e+00 : f32
    %14 = vector.broadcast %cst : f32 to vector<8x16x8xf32>
    %15 = arith.maximumf %13, %14 : vector<8x16x8xf32>
    %c1_i32 = arith.constant 1 : i32
    %16 = arith.subi %1, %c1_i32 : i32
    %c0_i32 = arith.constant 0 : i32
    %17 = arith.maxsi %16, %c0_i32 : i32
    %c0_6 = arith.constant 0 : index
    %18 = arith.index_cast %17 : i32 to index
    %c0_7 = arith.constant 0 : index
    %c0_8 = arith.constant 0 : index
    %19 = vector.load %arg4[%c0_6, %18, %c0_7, %c0_8] : memref<1x16x16x8xbf16, #tpu.memory_space<vmem>>, vector<1x1x16x8xbf16>
    %20 = vector.shape_cast %19 : vector<1x1x16x8xbf16> to vector<1x16x8xbf16>
    %21 = arith.extf %20 : vector<1x16x8xbf16> to vector<1x16x8xf32>
    %c0_9 = arith.constant 0 : index
    %c0_10 = arith.constant 0 : index
    %22 = vector.load %arg2[%c0_9, %c0_10] : memref<1x8xf32, #tpu.memory_space<vmem>>, vector<1x8xf32>
    %23 = vector.shape_cast %22 : vector<1x8xf32> to vector<1x1x8xf32>
    %24 = vector.broadcast %23 : vector<1x1x8xf32> to vector<1x16x8xf32>
    %25 = arith.mulf %21, %24 : vector<1x16x8xf32>
    %c0_11 = arith.constant 0 : index
    %c0_12 = arith.constant 0 : index
    %26 = vector.load %arg3[%c0_11, %c0_12] : memref<1x8xf32, #tpu.memory_space<vmem>>, vector<1x8xf32>
    %27 = vector.shape_cast %26 : vector<1x8xf32> to vector<1x1x8xf32>
    %28 = vector.broadcast %27 : vector<1x1x8xf32> to vector<1x16x8xf32>
    %29 = arith.addf %25, %28 : vector<1x16x8xf32>
    %cst_13 = arith.constant 0.000000e+00 : f32
    %30 = vector.broadcast %cst_13 : f32 to vector<1x16x8xf32>
    %31 = arith.maximumf %29, %30 : vector<1x16x8xf32>
    %c8_i32_14 = arith.constant 8 : i32
    %32 = arith.addi %1, %c8_i32_14 : i32
    %c15_i32 = arith.constant 15 : i32
    %33 = arith.minsi %32, %c15_i32 : i32
    %c0_15 = arith.constant 0 : index
    %34 = arith.index_cast %33 : i32 to index
    %c0_16 = arith.constant 0 : index
    %c0_17 = arith.constant 0 : index
    %35 = vector.load %arg4[%c0_15, %34, %c0_16, %c0_17] : memref<1x16x16x8xbf16, #tpu.memory_space<vmem>>, vector<1x1x16x8xbf16>
    %36 = vector.shape_cast %35 : vector<1x1x16x8xbf16> to vector<1x16x8xbf16>
    %37 = arith.extf %36 : vector<1x16x8xbf16> to vector<1x16x8xf32>
    %c0_18 = arith.constant 0 : index
    %c0_19 = arith.constant 0 : index
    %38 = vector.load %arg2[%c0_18, %c0_19] : memref<1x8xf32, #tpu.memory_space<vmem>>, vector<1x8xf32>
    %39 = vector.shape_cast %38 : vector<1x8xf32> to vector<1x1x8xf32>
    %40 = vector.broadcast %39 : vector<1x1x8xf32> to vector<1x16x8xf32>
    %41 = arith.mulf %37, %40 : vector<1x16x8xf32>
    %c0_20 = arith.constant 0 : index
    %c0_21 = arith.constant 0 : index
    %42 = vector.load %arg3[%c0_20, %c0_21] : memref<1x8xf32, #tpu.memory_space<vmem>>, vector<1x8xf32>
    %43 = vector.shape_cast %42 : vector<1x8xf32> to vector<1x1x8xf32>
    %44 = vector.broadcast %43 : vector<1x1x8xf32> to vector<1x16x8xf32>
    %45 = arith.addf %41, %44 : vector<1x16x8xf32>
    %cst_22 = arith.constant 0.000000e+00 : f32
    %46 = vector.broadcast %cst_22 : f32 to vector<1x16x8xf32>
    %47 = arith.maximumf %45, %46 : vector<1x16x8xf32>
    %c0_i32_23 = arith.constant 0 : i32
    %48 = arith.cmpi sgt, %arg1, %c0_i32_23 : i32
    %cst_24 = arith.constant 0.000000e+00 : f32
    %49 = vector.broadcast %cst_24 : f32 to vector<1x16x8xf32>
    %50 = arith.select %48, %31, %49 : vector<1x16x8xf32>
    %c1_i32_25 = arith.constant 1 : i32
    %51 = arith.cmpi slt, %arg1, %c1_i32_25 : i32
    %cst_26 = arith.constant 0.000000e+00 : f32
    %52 = vector.broadcast %cst_26 : f32 to vector<1x16x8xf32>
    %53 = arith.select %51, %47, %52 : vector<1x16x8xf32>
    %54 = tpu.concatenate %50, %15, %53 in 0 : vector<1x16x8xf32>, vector<8x16x8xf32>, vector<1x16x8xf32> -> vector<10x16x8xf32>
    %cst_27 = arith.constant 0.000000e+00 : f32
    %55 = vector.broadcast %cst_27 : f32 to vector<10x1x8xf32>
    %56 = vector.extract_strided_slice %54 {offsets = [0, 0, 0], sizes = [10, 15, 8], strides = [1, 1, 1]} : vector<10x16x8xf32> to vector<10x15x8xf32>
    %57 = tpu.concatenate %55, %56 in 1 : vector<10x1x8xf32>, vector<10x15x8xf32> -> vector<10x16x8xf32>
    %58 = vector.extract_strided_slice %54 {offsets = [0, 1, 0], sizes = [10, 15, 8], strides = [1, 1, 1]} : vector<10x16x8xf32> to vector<10x15x8xf32>
    %59 = tpu.concatenate %58, %55 in 1 : vector<10x15x8xf32>, vector<10x1x8xf32> -> vector<10x16x8xf32>
    %60 = tpu.concatenate %57, %54, %59 in 2 : vector<10x16x8xf32>, vector<10x16x8xf32>, vector<10x16x8xf32> -> vector<10x16x24xf32>
    %61 = arith.truncf %60 : vector<10x16x24xf32> to vector<10x16x24xbf16>
    %cst_28 = arith.constant 0.000000e+00 : f32
    %62 = vector.broadcast %cst_28 : f32 to vector<8x16x8xf32>
    %63 = vector.extract_strided_slice %61 {offsets = [0, 0, 0], sizes = [8, 16, 24], strides = [1, 1, 1]} : vector<10x16x24xbf16> to vector<8x16x24xbf16>
    %c0_29 = arith.constant 0 : index
    %c0_30 = arith.constant 0 : index
    %c0_31 = arith.constant 0 : index
    %64 = vector.load %arg5[%c0_29, %c0_30, %c0_31] : memref<3x24x8xbf16, #tpu.memory_space<vmem>>, vector<1x24x8xbf16>
    %65 = vector.shape_cast %64 : vector<1x24x8xbf16> to vector<24x8xbf16>
    %cst_32 = arith.constant dense<0.000000e+00> : vector<8x16x8xf32>
    %66 = tpu.matmul %63, %65, %cst_32 {dimension_numbers = #tpu.dot_dimension_numbers<[2], [0], [0, 1], [1], [0, 0, 0, 1, 1, 1], [], []>} : vector<8x16x24xbf16>, vector<24x8xbf16>, vector<8x16x8xf32> -> vector<8x16x8xf32>
    %67 = arith.addf %62, %66 : vector<8x16x8xf32>
    %68 = vector.extract_strided_slice %61 {offsets = [1, 0, 0], sizes = [8, 16, 24], strides = [1, 1, 1]} : vector<10x16x24xbf16> to vector<8x16x24xbf16>
    %c1 = arith.constant 1 : index
    %c0_33 = arith.constant 0 : index
    %c0_34 = arith.constant 0 : index
    %69 = vector.load %arg5[%c1, %c0_33, %c0_34] : memref<3x24x8xbf16, #tpu.memory_space<vmem>>, vector<1x24x8xbf16>
    %70 = vector.shape_cast %69 : vector<1x24x8xbf16> to vector<24x8xbf16>
    %cst_35 = arith.constant dense<0.000000e+00> : vector<8x16x8xf32>
    %71 = tpu.matmul %68, %70, %cst_35 {dimension_numbers = #tpu.dot_dimension_numbers<[2], [0], [0, 1], [1], [0, 0, 0, 1, 1, 1], [], []>} : vector<8x16x24xbf16>, vector<24x8xbf16>, vector<8x16x8xf32> -> vector<8x16x8xf32>
    %72 = arith.addf %67, %71 : vector<8x16x8xf32>
    %73 = vector.extract_strided_slice %61 {offsets = [2, 0, 0], sizes = [8, 16, 24], strides = [1, 1, 1]} : vector<10x16x24xbf16> to vector<8x16x24xbf16>
    %c2 = arith.constant 2 : index
    %c0_36 = arith.constant 0 : index
    %c0_37 = arith.constant 0 : index
    %74 = vector.load %arg5[%c2, %c0_36, %c0_37] : memref<3x24x8xbf16, #tpu.memory_space<vmem>>, vector<1x24x8xbf16>
    %75 = vector.shape_cast %74 : vector<1x24x8xbf16> to vector<24x8xbf16>
    %cst_38 = arith.constant dense<0.000000e+00> : vector<8x16x8xf32>
    %76 = tpu.matmul %73, %75, %cst_38 {dimension_numbers = #tpu.dot_dimension_numbers<[2], [0], [0, 1], [1], [0, 0, 0, 1, 1, 1], [], []>} : vector<8x16x24xbf16>, vector<24x8xbf16>, vector<8x16x8xf32> -> vector<8x16x8xf32>
    %77 = arith.addf %72, %76 : vector<8x16x8xf32>
    %78 = vector.shape_cast %77 : vector<8x16x8xf32> to vector<1x8x16x8xf32>
    %79 = arith.truncf %78 : vector<1x8x16x8xf32> to vector<1x8x16x8xbf16>
    %c0_39 = arith.constant 0 : index
    %c0_40 = arith.constant 0 : index
    %c0_41 = arith.constant 0 : index
    %c0_42 = arith.constant 0 : index
    %80 = vector.load %arg6[%c0_39, %c0_40, %c0_41, %c0_42] : memref<1x8x16x8xbf16, #tpu.memory_space<vmem>>, vector<1x8x16x8xbf16>
    tpu.vector_store %arg6[%c0_39, %c0_40, %c0_41, %c0_42], %79 {strides = array<i32>} : memref<1x8x16x8xbf16, #tpu.memory_space<vmem>>, vector<1x8x16x8xbf16>,
    %c0_i32_43 = arith.constant 0 : i32
    %81 = arith.cmpi eq, %arg1, %c0_i32_43 : i32
    %82 = arith.extui %81 : i1 to i32
    %c0_i32_44 = arith.constant 0 : i32
    %83 = arith.cmpi ne, %82, %c0_i32_44 : i32
    scf.if %83 {
      %cst_59 = arith.constant 0.000000e+00 : f32
      %95 = vector.broadcast %cst_59 : f32 to vector<1x1x8xf32>
      %c0_60 = arith.constant 0 : index
      %c0_61 = arith.constant 0 : index
      %c0_62 = arith.constant 0 : index
      %96 = vector.load %arg7[%c0_60, %c0_61, %c0_62] : memref<1x1x8xf32, #tpu.memory_space<vmem>>, vector<1x1x8xf32>
      tpu.vector_store %arg7[%c0_60, %c0_61, %c0_62], %95 {strides = array<i32>} : memref<1x1x8xf32, #tpu.memory_space<vmem>>, vector<1x1x8xf32>,
      %cst_63 = arith.constant 0.000000e+00 : f32
      %97 = vector.broadcast %cst_63 : f32 to vector<1x1x8xf32>
      %c0_64 = arith.constant 0 : index
      %c0_65 = arith.constant 0 : index
      %c0_66 = arith.constant 0 : index
      %98 = vector.load %arg8[%c0_64, %c0_65, %c0_66] : memref<1x1x8xf32, #tpu.memory_space<vmem>>, vector<1x1x8xf32>
      tpu.vector_store %arg8[%c0_64, %c0_65, %c0_66], %97 {strides = array<i32>} : memref<1x1x8xf32, #tpu.memory_space<vmem>>, vector<1x1x8xf32>,
    } else {
    }
    %c0_45 = arith.constant 0 : index
    %c0_46 = arith.constant 0 : index
    %c0_47 = arith.constant 0 : index
    %84 = vector.load %arg7[%c0_45, %c0_46, %c0_47] : memref<1x1x8xf32, #tpu.memory_space<vmem>>, vector<1x1x8xf32>
    %cst_48 = arith.constant dense<0.000000e+00> : vector<8xf32>
    %85 = vector.multi_reduction <add>, %77, %cst_48 [0, 1] : vector<8x16x8xf32> to vector<8xf32>
    %86 = vector.shape_cast %85 : vector<8xf32> to vector<1x1x8xf32>
    %87 = arith.addf %84, %86 : vector<1x1x8xf32>
    %c0_49 = arith.constant 0 : index
    %c0_50 = arith.constant 0 : index
    %c0_51 = arith.constant 0 : index
    %88 = vector.load %arg7[%c0_49, %c0_50, %c0_51] : memref<1x1x8xf32, #tpu.memory_space<vmem>>, vector<1x1x8xf32>
    tpu.vector_store %arg7[%c0_49, %c0_50, %c0_51], %87 {strides = array<i32>} : memref<1x1x8xf32, #tpu.memory_space<vmem>>, vector<1x1x8xf32>,
    %c0_52 = arith.constant 0 : index
    %c0_53 = arith.constant 0 : index
    %c0_54 = arith.constant 0 : index
    %89 = vector.load %arg8[%c0_52, %c0_53, %c0_54] : memref<1x1x8xf32, #tpu.memory_space<vmem>>, vector<1x1x8xf32>
    %90 = arith.mulf %77, %77 : vector<8x16x8xf32>
    %cst_55 = arith.constant dense<0.000000e+00> : vector<8xf32>
    %91 = vector.multi_reduction <add>, %90, %cst_55 [0, 1] : vector<8x16x8xf32> to vector<8xf32>
    %92 = vector.shape_cast %91 : vector<8xf32> to vector<1x1x8xf32>
    %93 = arith.addf %89, %92 : vector<1x1x8xf32>
    %c0_56 = arith.constant 0 : index
    %c0_57 = arith.constant 0 : index
    %c0_58 = arith.constant 0 : index
    %94 = vector.load %arg8[%c0_56, %c0_57, %c0_58] : memref<1x1x8xf32, #tpu.memory_space<vmem>>, vector<1x1x8xf32>
    tpu.vector_store %arg8[%c0_56, %c0_57, %c0_58], %93 {strides = array<i32>} : memref<1x1x8xf32, #tpu.memory_space<vmem>>, vector<1x1x8xf32>,
    return
  }
  func.func @transform_0(%arg0: i32, %arg1: i32) -> (i32, i32) {
    %c0_i32 = arith.constant 0 : i32
    %c0_i32_0 = arith.constant 0 : i32
    %c0_i32_1 = arith.constant 0 : i32
    return %c0_i32, %c0_i32_0 : i32, i32
  }
  func.func @transform_1(%arg0: i32, %arg1: i32) -> (i32, i32) {
    %c0_i32 = arith.constant 0 : i32
    %c0_i32_0 = arith.constant 0 : i32
    %c0_i32_1 = arith.constant 0 : i32
    return %c0_i32, %c0_i32_0 : i32, i32
  }
  func.func @transform_2(%arg0: i32, %arg1: i32) -> (i32, i32, i32, i32) {
    %c0_i32 = arith.constant 0 : i32
    %c0_i32_0 = arith.constant 0 : i32
    %c0_i32_1 = arith.constant 0 : i32
    %c0_i32_2 = arith.constant 0 : i32
    return %arg0, %c0_i32, %c0_i32_0, %c0_i32_1 : i32, i32, i32, i32
  }
  func.func @transform_3(%arg0: i32, %arg1: i32) -> (i32, i32, i32) {
    %c0_i32 = arith.constant 0 : i32
    %c0_i32_0 = arith.constant 0 : i32
    %c0_i32_1 = arith.constant 0 : i32
    %c0_i32_2 = arith.constant 0 : i32
    return %c0_i32, %c0_i32_0, %c0_i32_1 : i32, i32, i32
  }
  func.func @transform_4(%arg0: i32, %arg1: i32) -> (i32, i32, i32, i32) {
    %c0_i32 = arith.constant 0 : i32
    %c0_i32_0 = arith.constant 0 : i32
    %c0_i32_1 = arith.constant 0 : i32
    return %arg0, %arg1, %c0_i32, %c0_i32_0 : i32, i32, i32, i32
  }
  func.func @transform_5(%arg0: i32, %arg1: i32) -> (i32, i32, i32) {
    %c0_i32 = arith.constant 0 : i32
    %c0_i32_0 = arith.constant 0 : i32
    %c0_i32_1 = arith.constant 0 : i32
    return %arg0, %c0_i32, %c0_i32_0 : i32, i32, i32
  }
  func.func @transform_6(%arg0: i32, %arg1: i32) -> (i32, i32, i32) {
    %c0_i32 = arith.constant 0 : i32
    %c0_i32_0 = arith.constant 0 : i32
    %c0_i32_1 = arith.constant 0 : i32
    return %arg0, %c0_i32, %c0_i32_0 : i32, i32, i32
  }
}

module attributes {stable_mosaic.version = 11 : i64} {
  func.func @_bn_relu_kernel(%arg0: i32, %arg1: i32, %arg2: memref<1x8xf32, #tpu.memory_space<vmem>>, %arg3: memref<1x8xf32, #tpu.memory_space<vmem>>, %arg4: memref<1x8x16x8xbf16, #tpu.memory_space<vmem>>, %arg5: memref<1x8x16x8xf32, #tpu.memory_space<vmem>>) attributes {dimension_semantics = [#tpu.dimension_semantics<parallel>, #tpu.dimension_semantics<parallel>], iteration_bounds = array<i64: 2, 2>, scalar_prefetch = 0 : i64, scratch_operands = 0 : i64, tpu.core_type = #tpu.core_type<tc>, window_params = [{pipeline_mode = #tpu.pipeline_mode<synchronous>, transform_indices = @transform_0, window_bounds = array<i64: 1, 8>}, {pipeline_mode = #tpu.pipeline_mode<synchronous>, transform_indices = @transform_1, window_bounds = array<i64: 1, 8>}, {transform_indices = @transform_2, window_bounds = array<i64: 1, 8, 16, 8>}, {transform_indices = @transform_3, window_bounds = array<i64: 1, 8, 16, 8>}]} {
    %c0 = arith.constant 0 : index
    %c0_0 = arith.constant 0 : index
    %c0_1 = arith.constant 0 : index
    %c0_2 = arith.constant 0 : index
    %0 = vector.load %arg4[%c0, %c0_0, %c0_1, %c0_2] : memref<1x8x16x8xbf16, #tpu.memory_space<vmem>>, vector<1x8x16x8xbf16>
    %1 = arith.extf %0 : vector<1x8x16x8xbf16> to vector<1x8x16x8xf32>
    %c0_3 = arith.constant 0 : index
    %c0_4 = arith.constant 0 : index
    %2 = vector.load %arg2[%c0_3, %c0_4] : memref<1x8xf32, #tpu.memory_space<vmem>>, vector<1x8xf32>
    %3 = vector.shape_cast %2 : vector<1x8xf32> to vector<1x1x1x8xf32>
    %4 = vector.broadcast %3 : vector<1x1x1x8xf32> to vector<1x8x16x8xf32>
    %5 = arith.mulf %1, %4 : vector<1x8x16x8xf32>
    %c0_5 = arith.constant 0 : index
    %c0_6 = arith.constant 0 : index
    %6 = vector.load %arg3[%c0_5, %c0_6] : memref<1x8xf32, #tpu.memory_space<vmem>>, vector<1x8xf32>
    %7 = vector.shape_cast %6 : vector<1x8xf32> to vector<1x1x1x8xf32>
    %8 = vector.broadcast %7 : vector<1x1x1x8xf32> to vector<1x8x16x8xf32>
    %9 = arith.addf %5, %8 : vector<1x8x16x8xf32>
    %cst = arith.constant 0.000000e+00 : f32
    %10 = vector.broadcast %cst : f32 to vector<1x8x16x8xf32>
    %11 = arith.maximumf %9, %10 : vector<1x8x16x8xf32>
    %c0_7 = arith.constant 0 : index
    %c0_8 = arith.constant 0 : index
    %c0_9 = arith.constant 0 : index
    %c0_10 = arith.constant 0 : index
    %12 = vector.load %arg5[%c0_7, %c0_8, %c0_9, %c0_10] : memref<1x8x16x8xf32, #tpu.memory_space<vmem>>, vector<1x8x16x8xf32>
    tpu.vector_store %arg5[%c0_7, %c0_8, %c0_9, %c0_10], %11 {strides = array<i32>} : memref<1x8x16x8xf32, #tpu.memory_space<vmem>>, vector<1x8x16x8xf32>,
    return
  }
  func.func @transform_0(%arg0: i32, %arg1: i32) -> (i32, i32) {
    %c0_i32 = arith.constant 0 : i32
    %c0_i32_0 = arith.constant 0 : i32
    %c0_i32_1 = arith.constant 0 : i32
    return %c0_i32, %c0_i32_0 : i32, i32
  }
  func.func @transform_1(%arg0: i32, %arg1: i32) -> (i32, i32) {
    %c0_i32 = arith.constant 0 : i32
    %c0_i32_0 = arith.constant 0 : i32
    %c0_i32_1 = arith.constant 0 : i32
    return %c0_i32, %c0_i32_0 : i32, i32
  }
  func.func @transform_2(%arg0: i32, %arg1: i32) -> (i32, i32, i32, i32) {
    %c0_i32 = arith.constant 0 : i32
    %c0_i32_0 = arith.constant 0 : i32
    %c0_i32_1 = arith.constant 0 : i32
    return %arg0, %arg1, %c0_i32, %c0_i32_0 : i32, i32, i32, i32
  }
  func.func @transform_3(%arg0: i32, %arg1: i32) -> (i32, i32, i32, i32) {
    %c0_i32 = arith.constant 0 : i32
    %c0_i32_0 = arith.constant 0 : i32
    %c0_i32_1 = arith.constant 0 : i32
    return %arg0, %arg1, %c0_i32, %c0_i32_0 : i32, i32, i32, i32
  }
}

</mosaic_0001>

<llo_original>
// kernel: double_conv.5
$region0: #{double_conv.5}
  #allocation0 [shape = 'u32[]', space=smem, size = 0x4, offset = 0x4, fixed_abs, tag = 'smem constant byte address 0x4 - core index']
  #allocation1 [shape = 'u32[144,128]{1,0:T(1,128)}', space=vmem, size = 0x12000, scoped, tag = 'internal scratch']
  %s0 = inlined_call_operand.vmem [shape: f32[1,8], index: 0, kind: input, shape index: {}]
  %s1 = inlined_call_operand.vmem [shape: f32[1,8], index: 1, kind: input, shape index: {}]
  %s2 = inlined_call_operand.vmem [shape: bf16[2,16,16,8], index: 2, kind: input, shape index: {}]
  %s3 = inlined_call_operand.vmem [shape: f32[2,16,16,8], index: 3, kind: output, shape index: {}]
  %s4 = sld [smem:[#allocation0]]
  $region45: #{double_conv.5} parent=0
    _
  %s6 = ssub.s32 1, %s4
  %s7 = scalar_select 0, %s6, %s4
  loop: start=0, step=1, limit=6
  $region2: #{double_conv.5} parent=0 // loop_pre_header
    _
  $region3: #{double_conv.5} parent=0 // loop_header
    %s9 = sphi 0, %s13
    %p10 = scmp.ge.s32.totalorder %s9, 6
    %s16 = sphi 0, %s28
    %s17 = sphi 0, %s24
    %s18 = sphi 0, %s16
    %s19 = sphi 0, %s17
    %s20 = sphi 0, %s18
    %s21 = sphi 0, %s19
    %s29 = sphi 0, %s29
    %s31 = sphi 0, %s29
    %s32 = sphi 0, %s31
    %s46 = sphi 0, %s32
    %s50 = sphi 0, %s50
    %s52 = sphi 0, %s50
    %s53 = sphi 0, %s52
    %s67 = sphi 0, %s53
    %s75 = sphi 0, %s77
    %s78 = sphi 0, %s75
    %s79 = sphi 0, %s78
    %s95 = sphi 0, %s79
    %s103 = sphi 0, %s105
    %s106 = sphi 0, %s103
    %s107 = sphi 0, %s106
    %s123 = sphi 0, %s107
  $region4: #{double_conv.5} parent=0 // loop_header_branch
    %12 = sbr.rel (%p10) target = $region8
  $region5: #{double_conv.5} parent=0 // loop_body
    %s14 = ssub.s32 %s9, 1
    %s15 = ssub.s32 %s9, 2
    %s22 = sadd.s32 1, %s17
    %p23 = scmp.ge.s32.totalorder %s22, 2
    %s24 = scalar_select %p23, 0, %s22
    %s25 = sadd.s32 1, %s16
    %s26 = scalar_select %p23, %s25, %s16
    %p27 = scmp.ge.s32.totalorder %s26, 2
    %s28 = scalar_select %p27, 0, %s26
    %s30 = sadd.s32 %s29, 1
    %p33 = scmp.eq.s32.totalorder %s9, 3
    %p34 = scmp.ne.s32.totalorder %s29, %s31
    %p35 = scmp.eq.s32.totalorder %s9, 0
    %p36 = por %p34, %p35
    %p37 = scmp.ne.s32.totalorder %s29, %s31
    %p38 = scmp.eq.s32.totalorder %s14, 3
    %p39 = por %p37, %p38
    %p40 = scmp.ne.s32.totalorder %s31, %s32
    %p41 = scmp.eq.s32.totalorder %s14, 0
    %p42 = por %p40, %p41
    %p43 = scmp.ne.s32.totalorder %s31, %s32
    %p44 = scmp.eq.s32.totalorder %s15, 3
    %p45 = por %p43, %p44
    %p47 = scmp.ne.s32.totalorder %s32, %s46
    %p48 = scmp.eq.s32.totalorder %s15, 0
    %p49 = por %p47, %p48
    %s51 = sadd.s32 %s50, 1
    %p54 = scmp.eq.s32.totalorder %s9, 3
    %p55 = scmp.ne.s32.totalorder %s50, %s52
    %p56 = scmp.eq.s32.totalorder %s9, 0
    %p57 = por %p55, %p56
    %p58 = scmp.ne.s32.totalorder %s50, %s52
    %p59 = scmp.eq.s32.totalorder %s14, 3
    %p60 = por %p58, %p59
    %p61 = scmp.ne.s32.totalorder %s52, %s53
    %p62 = scmp.eq.s32.totalorder %s14, 0
    %p63 = por %p61, %p62
    %p64 = scmp.ne.s32.totalorder %s52, %s53
    %p65 = scmp.eq.s32.totalorder %s15, 3
    %p66 = por %p64, %p65
    %p68 = scmp.ne.s32.totalorder %s53, %s67
    %p69 = scmp.eq.s32.totalorder %s15, 0
    %p70 = por %p68, %p69
    %s71 = ssub.s32 %s16, %s28
    %s72 = ssub.s32 %s17, %s24
    %s73 = sor.u32 %s71, %s72
    %p74 = scmp.eq.s32.totalorder %s73, 0
    %s76 = sadd.s32 %s75, 1
    %s77 = scalar_select %p74, %s75, %s76
    %p80 = pneg %p74
    %p81 = scmp.eq.s32.totalorder %s9, 3
    %p82 = por %p80, %p81
    %p83 = scmp.ne.s32.totalorder %s75, %s78
    %p84 = scmp.eq.s32.totalorder %s9, 0
    %p85 = por %p83, %p84
    %p86 = scmp.ne.s32.totalorder %s75, %s78
    %p87 = scmp.eq.s32.totalorder %s14, 3
    %p88 = por %p86, %p87
    %p89 = scmp.ne.s32.totalorder %s78, %s79
    %p90 = scmp.eq.s32.totalorder %s14, 0
    %p91 = por %p89, %p90
    %p92 = scmp.ne.s32.totalorder %s78, %s79
    %p93 = scmp.eq.s32.totalorder %s15, 3
    %p94 = por %p92, %p93
    %p96 = scmp.ne.s32.totalorder %s79, %s95
    %p97 = scmp.eq.s32.totalorder %s15, 0
    %p98 = por %p96, %p97
    %s99 = ssub.s32 %s16, %s28
    %s100 = ssub.s32 %s17, %s24
    %s101 = sor.u32 %s99, %s100
    %p102 = scmp.eq.s32.totalorder %s101, 0
    %s104 = sadd.s32 %s103, 1
    %s105 = scalar_select %p102, %s103, %s104
    %p108 = pneg %p102
    %p109 = scmp.eq.s32.totalorder %s9, 3
    %p110 = por %p108, %p109
    %p111 = scmp.ne.s32.totalorder %s103, %s106
    %p112 = scmp.eq.s32.totalorder %s9, 0
    %p113 = por %p111, %p112
    %p114 = scmp.ne.s32.totalorder %s103, %s106
    %p115 = scmp.eq.s32.totalorder %s14, 3
    %p116 = por %p114, %p115
    %p117 = scmp.ne.s32.totalorder %s106, %s107
    %p118 = scmp.eq.s32.totalorder %s14, 0
    %p119 = por %p117, %p118
    %p120 = scmp.ne.s32.totalorder %s106, %s107
    %p121 = scmp.eq.s32.totalorder %s15, 3
    %p122 = por %p120, %p121
    %p124 = scmp.ne.s32.totalorder %s107, %s123
    %p125 = scmp.eq.s32.totalorder %s15, 0
    %p126 = por %p124, %p125
    %p127 = scmp.le.s32.totalorder 1, %s9
    %p128 = scmp.lt.s32.totalorder %s9, 5
    %p129 = pnand %p127, %p128
    %p130 = pneg %p129
    // Predicated region
    $region9: #{double_conv.5} parent=5 // pred_check
      _
    $region10: #{double_conv.5} parent=5 // pred_check_branch
      %132 = sbr.rel (%p129) target = $region12
    $region11: #{double_conv.5} parent=5 // pred_region
      %s133 = ssub.s32 %s9, 1
      // Predicated region
      $region13: #{double_conv.5} parent=11 // pred_check
        %p134 = pneg %p42
      $region14: #{double_conv.5} parent=11 // pred_check_branch
        %136 = sbr.rel (%p134) target = $region16
      $region15: #{double_conv.5} parent=11 // pred_region
        _
      $region16: #{double_conv.5} parent=11 // pred_fallthru
        _
      // Predicated region
      $region17: #{double_conv.5} parent=11 // pred_check
        %p137 = pneg %p63
      $region18: #{double_conv.5} parent=11 // pred_check_branch
        %139 = sbr.rel (%p137) target = $region20
      $region19: #{double_conv.5} parent=11 // pred_region
        _
      $region20: #{double_conv.5} parent=11 // pred_fallthru
        _
    $region12: #{double_conv.5} parent=5 // pred_fallthru
      _
    %p140 = scmp.lt.s32.totalorder %s9, 4
    // Predicated region
    $region21: #{double_conv.5} parent=5 // pred_check
      %p141 = pneg %p140
    $region22: #{double_conv.5} parent=5 // pred_check_branch
      %143 = sbr.rel (%p141) target = $region24
    $region23: #{double_conv.5} parent=5 // pred_region
      // Predicated region
      $region25: #{double_conv.5} parent=23 // pred_check
        %p144 = pneg %p85
      $region26: #{double_conv.5} parent=23 // pred_check_branch
        %146 = sbr.rel (%p144) target = $region28
      $region27: #{double_conv.5} parent=23 // pred_region
        %s147 = smul.u32 8, %s17
        %p148 = scmp.lt.s32.totalorder %s16, 1
        %s149 = scalar_select %p148, %s16, 1
        %p150 = scmp.lt.s32.totalorder %s147, 15
        %s151 = scalar_select %p150, %s147, 15
        %s152 = smul.addr %s151, 2
        %s153 = smul.addr %s149, 32
        %s154 = sadd.s32 %s152, %s153
        %s155 = smul.addr %s154, 4
        %s156 = scalar_lea.vmem %s2, %s155
        %s157 = smul.u32 8, %s17
      $region28: #{double_conv.5} parent=23 // pred_fallthru
        _
    $region24: #{double_conv.5} parent=5 // pred_fallthru
      _
    %p158 = scmp.le.s32.totalorder 1, %s9
    %p159 = scmp.lt.s32.totalorder %s9, 5
    %p160 = pnand %p158, %p159
    %p161 = pneg %p160
    // Predicated region
    $region29: #{double_conv.5} parent=5 // pred_check
      _
    $region30: #{double_conv.5} parent=5 // pred_check_branch
      %163 = sbr.rel (%p160) target = $region32
    $region31: #{double_conv.5} parent=5 // pred_region
      %s164 = ssub.s32 %s9, 1
      %p165 = pneg %p42
      %p166 = pneg %p39
      %p167 = pneg %p63
      %p168 = pneg %p60
      %s169 = smul.u32 8, %s19
      %p170 = scmp.lt.s32.totalorder %s18, 1
      %s171 = scalar_select %p170, %s18, 1
      %p172 = scmp.lt.s32.totalorder %s169, 15
      %s173 = scalar_select %p172, %s169, 15
      %s174 = smul.addr %s173, 2
      %s175 = smul.addr %s171, 32
      %s176 = sadd.s32 %s174, %s175
      %s177 = smul.addr %s176, 4
      %s178 = scalar_lea.vmem %s2, %s177
      %p179 = pneg %p91
      %p180 = pneg %p88
      %p181 = pneg %p119
      %p182 = pneg %p116
      %s183 = smul.u32 8, %s19
      %p184 = scmp.lt.s32.totalorder %s18, 1
      %s185 = scalar_select %p184, %s18, 1
      %p186 = scmp.lt.s32.totalorder %s183, 15
      %s187 = scalar_select %p186, %s183, 15
      %s188 = smul.addr %s187, 2
      %s189 = smul.addr %s185, 32
      %s190 = sadd.s32 %s188, %s189
      %s191 = smul.addr %s190, 8
      %s192 = scalar_lea.vmem %s3, %s191
      %s193 = smul.u32 8, %s19
      %p194 = scmp.lt.s32.totalorder %s18, 1
      %s195 = scalar_select %p194, %s18, 1
      %p196 = scmp.lt.s32.totalorder %s193, 15
      %s197 = scalar_select %p196, %s193, 15
      %s198 = smul.addr %s197, 2
      %s199 = smul.addr %s195, 32
      %s200 = sadd.s32 %s198, %s199
      %s201 = smul.addr %s200, 4
      %s202 = scalar_lea.vmem %s2, %s201
      %s203 = smul.u32 8, %s19
      %s204 = smul.u32 8, %s19
      %p205 = scmp.lt.s32.totalorder %s18, 1
      %s206 = scalar_select %p205, %s18, 1
      %p207 = scmp.lt.s32.totalorder %s204, 15
      %s208 = scalar_select %p207, %s204, 15
      %s209 = smul.addr %s208, 2
      %s210 = smul.addr %s206, 32
      %s211 = sadd.s32 %s209, %s210
      %s212 = smul.addr %s211, 8
      %s213 = scalar_lea.vmem %s3, %s212
      %s214 = smul.u32 8, %s19
      %v215 = vld [vmem:[%s202] sm:$0xf]
      %v216 = vld [vmem:[%s202 + $0x4] sm:$0xf]
      %v217 = vld [vmem:[%s202 + $0x8] sm:$0xf]
      %v218 = vld [vmem:[%s202 + $0xc] sm:$0xf]
      %v219 = vld [vmem:[%s202 + $0x10] sm:$0xf]
      %v220 = vld [vmem:[%s202 + $0x14] sm:$0xf]
      %v221 = vld [vmem:[%s202 + $0x18] sm:$0xf]
      %v222 = vld [vmem:[%s202 + $0x1c] sm:$0xf]
      %v223 = vld [vmem:[%s202 + $0x20] sm:$0xf]
      %v224 = vld [vmem:[%s202 + $0x24] sm:$0xf]
      %v225 = vld [vmem:[%s202 + $0x28] sm:$0xf]
      %v226 = vld [vmem:[%s202 + $0x2c] sm:$0xf]
      %v227 = vld [vmem:[%s202 + $0x30] sm:$0xf]
      %v228 = vld [vmem:[%s202 + $0x34] sm:$0xf]
      %v229 = vld [vmem:[%s202 + $0x38] sm:$0xf]
      %v230 = vld [vmem:[%s202 + $0x3c] sm:$0xf]
      %v231 = vunpack.c.l.bf16 %v215
      %v232 = vunpack.c.l.bf16 %v216
      %v233 = vunpack.c.l.bf16 %v217
      %v234 = vunpack.c.l.bf16 %v218
      %v235 = vunpack.c.l.bf16 %v219
      %v236 = vunpack.c.l.bf16 %v220
      %v237 = vunpack.c.l.bf16 %v221
      %v238 = vunpack.c.l.bf16 %v222
      %v239 = vunpack.c.l.bf16 %v223
      %v240 = vunpack.c.l.bf16 %v224
      %v241 = vunpack.c.l.bf16 %v225
      %v242 = vunpack.c.l.bf16 %v226
      %v243 = vunpack.c.l.bf16 %v227
      %v244 = vunpack.c.l.bf16 %v228
      %v245 = vunpack.c.l.bf16 %v229
      %v246 = vunpack.c.l.bf16 %v230
      %v247 = vld [vmem:[%s0] sm:$0x1]
      %v249 = vlaneseq
      %v250 = vshrl.u32 %v249, 7
      %v251 = vsub.s32 0, %v250
      %v252 = vrot.slane %v247, %v251
      %v254 = vmul.f32 %v231, %v252
      %v255 = vmul.f32 %v232, %v252
      %v256 = vmul.f32 %v233, %v252
      %v257 = vmul.f32 %v234, %v252
      %v258 = vmul.f32 %v235, %v252
      %v259 = vmul.f32 %v236, %v252
      %v260 = vmul.f32 %v237, %v252
      %v261 = vmul.f32 %v238, %v252
      %v262 = vmul.f32 %v239, %v252
      %v263 = vmul.f32 %v240, %v252
      %v264 = vmul.f32 %v241, %v252
      %v265 = vmul.f32 %v242, %v252
      %v266 = vmul.f32 %v243, %v252
      %v267 = vmul.f32 %v244, %v252
      %v268 = vmul.f32 %v245, %v252
      %v269 = vmul.f32 %v246, %v252
      %v270 = vld [vmem:[%s1] sm:$0x1]
      %v272 = vlaneseq
      %v273 = vshrl.u32 %v272, 7
      %v274 = vsub.s32 0, %v273
      %v275 = vrot.slane %v270, %v274
      %v277 = vadd.f32 %v254, %v275
      %v278 = vadd.f32 %v255, %v275
      %v279 = vadd.f32 %v256, %v275
      %v280 = vadd.f32 %v257, %v275
      %v281 = vadd.f32 %v258, %v275
      %v282 = vadd.f32 %v259, %v275
      %v283 = vadd.f32 %v260, %v275
      %v284 = vadd.f32 %v261, %v275
      %v285 = vadd.f32 %v262, %v275
      %v286 = vadd.f32 %v263, %v275
      %v287 = vadd.f32 %v264, %v275
      %v288 = vadd.f32 %v265, %v275
      %v289 = vadd.f32 %v266, %v275
      %v290 = vadd.f32 %v267, %v275
      %v291 = vadd.f32 %v268, %v275
      %v292 = vadd.f32 %v269, %v275
      %v293 = vmax.f32 %v277, 0.0
      %v294 = vmax.f32 %v278, 0.0
      %v295 = vmax.f32 %v279, 0.0
      %v296 = vmax.f32 %v280, 0.0
      %v297 = vmax.f32 %v281, 0.0
      %v298 = vmax.f32 %v282, 0.0
      %v299 = vmax.f32 %v283, 0.0
      %v300 = vmax.f32 %v284, 0.0
      %v301 = vmax.f32 %v285, 0.0
      %v302 = vmax.f32 %v286, 0.0
      %v303 = vmax.f32 %v287, 0.0
      %v304 = vmax.f32 %v288, 0.0
      %v305 = vmax.f32 %v289, 0.0
      %v306 = vmax.f32 %v290, 0.0
      %v307 = vmax.f32 %v291, 0.0
      %v308 = vmax.f32 %v292, 0.0
      %vm309 = vcmask 64512
      %310 = vst.msk [vmem:[%s213] sm:$0xff] %vm309, %v293
      %311 = vst.msk [vmem:[%s213 + $0x8] sm:$0xff] %vm309, %v294
      %312 = vst.msk [vmem:[%s213 + $0x10] sm:$0xff] %vm309, %v295
      %313 = vst.msk [vmem:[%s213 + $0x18] sm:$0xff] %vm309, %v296
      %314 = vst.msk [vmem:[%s213 + $0x20] sm:$0xff] %vm309, %v297
      %315 = vst.msk [vmem:[%s213 + $0x28] sm:$0xff] %vm309, %v298
      %316 = vst.msk [vmem:[%s213 + $0x30] sm:$0xff] %vm309, %v299
      %317 = vst.msk [vmem:[%s213 + $0x38] sm:$0xff] %vm309, %v300
      %318 = vst.msk [vmem:[%s213 + $0x40] sm:$0xff] %vm309, %v301
      %319 = vst.msk [vmem:[%s213 + $0x48] sm:$0xff] %vm309, %v302
      %320 = vst.msk [vmem:[%s213 + $0x50] sm:$0xff] %vm309, %v303
      %321 = vst.msk [vmem:[%s213 + $0x58] sm:$0xff] %vm309, %v304
      %322 = vst.msk [vmem:[%s213 + $0x60] sm:$0xff] %vm309, %v305
      %323 = vst.msk [vmem:[%s213 + $0x68] sm:$0xff] %vm309, %v306
      %324 = vst.msk [vmem:[%s213 + $0x70] sm:$0xff] %vm309, %v307
      %325 = vst.msk [vmem:[%s213 + $0x78] sm:$0xff] %vm309, %v308
      %s326 = smul.u32 8, %s19
      %p327 = scmp.lt.s32.totalorder %s18, 1
      %s328 = scalar_select %p327, %s18, 1
      %p329 = scmp.lt.s32.totalorder %s326, 15
      %s330 = scalar_select %p329, %s326, 15
      %s331 = smul.addr %s330, 2
      %s332 = smul.addr %s328, 32
      %s333 = sadd.s32 %s331, %s332
      %s334 = smul.addr %s333, 8
      %s335 = scalar_lea.vmem %s3, %s334
      // Predicated region
      $region33: #{double_conv.5} parent=31 // pred_check
        %p336 = pneg %p116
      $region34: #{double_conv.5} parent=31 // pred_check_branch
        %338 = sbr.rel (%p336) target = $region36
      $region35: #{double_conv.5} parent=31 // pred_region
        %s339 = smul.u32 8, %s19
      $region36: #{double_conv.5} parent=31 // pred_fallthru
        _
    $region32: #{double_conv.5} parent=5 // pred_fallthru
      _
    %p340 = scmp.le.s32.totalorder 2, %s9
    // Predicated region
    $region37: #{double_conv.5} parent=5 // pred_check
      %p341 = pneg %p340
    $region38: #{double_conv.5} parent=5 // pred_check_branch
      %343 = sbr.rel (%p341) target = $region40
    $region39: #{double_conv.5} parent=5 // pred_region
      %s344 = ssub.s32 %s9, 2
      // Predicated region
      $region41: #{double_conv.5} parent=39 // pred_check
        %p345 = pneg %p122
      $region42: #{double_conv.5} parent=39 // pred_check_branch
        %347 = sbr.rel (%p345) target = $region44
      $region43: #{double_conv.5} parent=39 // pred_region
        %s348 = smul.u32 8, %s21
        %p349 = scmp.lt.s32.totalorder %s20, 1
        %s350 = scalar_select %p349, %s20, 1
        %p351 = scmp.lt.s32.totalorder %s348, 15
        %s352 = scalar_select %p351, %s348, 15
        %s353 = smul.addr %s352, 2
        %s354 = smul.addr %s350, 32
        %s355 = sadd.s32 %s353, %s354
        %s356 = smul.addr %s355, 8
        %s357 = scalar_lea.vmem %s3, %s356
      $region44: #{double_conv.5} parent=39 // pred_fallthru
        _
    $region40: #{double_conv.5} parent=5 // pred_fallthru
      _
  $region6: #{double_conv.5} parent=0 // loop_footer
    %s13 = sadd.s32 1, %s9
  $region7: #{double_conv.5} parent=0 // loop_footer_branch
    %8 = sbr.rel target = $region3
  $region8: #{double_conv.5} parent=0 // loop_exit
    _

// kernel: double_conv.4
$region0: #{double_conv.4}
  #allocation0 [shape = 'u32[]', space=smem, size = 0x4, offset = 0x4, fixed_abs, tag = 'smem constant byte address 0x4 - core index']
  #allocation1 [shape = 'u32[144,128]{1,0:T(1,128)}', space=vmem, size = 0x12000, scoped, tag = 'internal scratch']
  %s0 = inlined_call_operand.vmem [shape: f32[1,8], index: 0, kind: input, shape index: {}]
  %s1 = inlined_call_operand.vmem [shape: f32[1,8], index: 1, kind: input, shape index: {}]
  %s2 = inlined_call_operand.vmem [shape: bf16[2,16,16,8], index: 2, kind: input, shape index: {}]
  %s3 = inlined_call_operand.vmem [shape: bf16[3,24,8], index: 3, kind: input, shape index: {}]
  %s4 = inlined_call_operand.vmem [shape: bf16[2,16,16,8], index: 4, kind: output, shape index: {0}]
  %s5 = inlined_call_operand.vmem [shape: f32[2,1,8], index: 5, kind: output, shape index: {1}]
  %s6 = inlined_call_operand.vmem [shape: f32[2,1,8], index: 6, kind: output, shape index: {2}]
  %7 = xla_tuple %s4, %s5, %s6
  %s8 = sld [smem:[#allocation0]]
  $region69: #{double_conv.4} parent=0
    _
  %s10 = ssub.s32 1, %s8
  %s11 = scalar_select 0, %s10, %s8
  loop: start=0, step=1, limit=6
  $region2: #{double_conv.4} parent=0 // loop_pre_header
    _
  $region3: #{double_conv.4} parent=0 // loop_header
    %s13 = sphi 0, %s17
    %p14 = scmp.ge.s32.totalorder %s13, 6
    %s20 = sphi 0, %s32
    %s21 = sphi 0, %s28
    %s22 = sphi 0, %s20
    %s23 = sphi 0, %s21
    %s24 = sphi 0, %s22
    %s25 = sphi 0, %s23
    %s33 = sphi 0, %s33
    %s35 = sphi 0, %s33
    %s36 = sphi 0, %s35
    %s50 = sphi 0, %s36
    %s54 = sphi 0, %s54
    %s56 = sphi 0, %s54
    %s57 = sphi 0, %s56
    %s71 = sphi 0, %s57
    %s77 = sphi 0, %s79
    %s80 = sphi 0, %s77
    %s81 = sphi 0, %s80
    %s97 = sphi 0, %s81
    %s101 = sphi 0, %s101
    %s103 = sphi 0, %s101
    %s104 = sphi 0, %s103
    %s118 = sphi 0, %s104
    %s126 = sphi 0, %s128
    %s129 = sphi 0, %s126
    %s130 = sphi 0, %s129
    %s146 = sphi 0, %s130
    %s152 = sphi 0, %s154
    %s155 = sphi 0, %s152
    %s156 = sphi 0, %s155
    %s172 = sphi 0, %s156
    %s178 = sphi 0, %s180
    %s181 = sphi 0, %s178
    %s182 = sphi 0, %s181
    %s198 = sphi 0, %s182
  $region4: #{double_conv.4} parent=0 // loop_header_branch
    %16 = sbr.rel (%p14) target = $region8
  $region5: #{double_conv.4} parent=0 // loop_body
    %s18 = ssub.s32 %s13, 1
    %s19 = ssub.s32 %s13, 2
    %s26 = sadd.s32 1, %s21
    %p27 = scmp.ge.s32.totalorder %s26, 2
    %s28 = scalar_select %p27, 0, %s26
    %s29 = sadd.s32 1, %s20
    %s30 = scalar_select %p27, %s29, %s20
    %p31 = scmp.ge.s32.totalorder %s30, 2
    %s32 = scalar_select %p31, 0, %s30
    %s34 = sadd.s32 %s33, 1
    %p37 = scmp.eq.s32.totalorder %s13, 3
    %p38 = scmp.ne.s32.totalorder %s33, %s35
    %p39 = scmp.eq.s32.totalorder %s13, 0
    %p40 = por %p38, %p39
    %p41 = scmp.ne.s32.totalorder %s33, %s35
    %p42 = scmp.eq.s32.totalorder %s18, 3
    %p43 = por %p41, %p42
    %p44 = scmp.ne.s32.totalorder %s35, %s36
    %p45 = scmp.eq.s32.totalorder %s18, 0
    %p46 = por %p44, %p45
    %p47 = scmp.ne.s32.totalorder %s35, %s36
    %p48 = scmp.eq.s32.totalorder %s19, 3
    %p49 = por %p47, %p48
    %p51 = scmp.ne.s32.totalorder %s36, %s50
    %p52 = scmp.eq.s32.totalorder %s19, 0
    %p53 = por %p51, %p52
    %s55 = sadd.s32 %s54, 1
    %p58 = scmp.eq.s32.totalorder %s13, 3
    %p59 = scmp.ne.s32.totalorder %s54, %s56
    %p60 = scmp.eq.s32.totalorder %s13, 0
    %p61 = por %p59, %p60
    %p62 = scmp.ne.s32.totalorder %s54, %s56
    %p63 = scmp.eq.s32.totalorder %s18, 3
    %p64 = por %p62, %p63
    %p65 = scmp.ne.s32.totalorder %s56, %s57
    %p66 = scmp.eq.s32.totalorder %s18, 0
    %p67 = por %p65, %p66
    %p68 = scmp.ne.s32.totalorder %s56, %s57
    %p69 = scmp.eq.s32.totalorder %s19, 3
    %p70 = por %p68, %p69
    %p72 = scmp.ne.s32.totalorder %s57, %s71
    %p73 = scmp.eq.s32.totalorder %s19, 0
    %p74 = por %p72, %p73
    %s75 = ssub.s32 %s20, %s32
    %p76 = scmp.eq.s32.totalorder %s75, 0
    %s78 = sadd.s32 %s77, 1
    %s79 = scalar_select %p76, %s77, %s78
    %p82 = pneg %p76
    %p83 = scmp.eq.s32.totalorder %s13, 3
    %p84 = por %p82, %p83
    %p85 = scmp.ne.s32.totalorder %s77, %s80
    %p86 = scmp.eq.s32.totalorder %s13, 0
    %p87 = por %p85, %p86
    %p88 = scmp.ne.s32.totalorder %s77, %s80
    %p89 = scmp.eq.s32.totalorder %s18, 3
    %p90 = por %p88, %p89
    %p91 = scmp.ne.s32.totalorder %s80, %s81
    %p92 = scmp.eq.s32.totalorder %s18, 0
    %p93 = por %p91, %p92
    %p94 = scmp.ne.s32.totalorder %s80, %s81
    %p95 = scmp.eq.s32.totalorder %s19, 3
    %p96 = por %p94, %p95
    %p98 = scmp.ne.s32.totalorder %s81, %s97
    %p99 = scmp.eq.s32.totalorder %s19, 0
    %p100 = por %p98, %p99
    %s102 = sadd.s32 %s101, 1
    %p105 = scmp.eq.s32.totalorder %s13, 3
    %p106 = scmp.ne.s32.totalorder %s101, %s103
    %p107 = scmp.eq.s32.totalorder %s13, 0
    %p108 = por %p106, %p107
    %p109 = scmp.ne.s32.totalorder %s101, %s103
    %p110 = scmp.eq.s32.totalorder %s18, 3
    %p111 = por %p109, %p110
    %p112 = scmp.ne.s32.totalorder %s103, %s104
    %p113 = scmp.eq.s32.totalorder %s18, 0
    %p114 = por %p112, %p113
    %p115 = scmp.ne.s32.totalorder %s103, %s104
    %p116 = scmp.eq.s32.totalorder %s19, 3
    %p117 = por %p115, %p116
    %p119 = scmp.ne.s32.totalorder %s104, %s118
    %p120 = scmp.eq.s32.totalorder %s19, 0
    %p121 = por %p119, %p120
    %s122 = ssub.s32 %s20, %s32
    %s123 = ssub.s32 %s21, %s28
    %s124 = sor.u32 %s122, %s123
    %p125 = scmp.eq.s32.totalorder %s124, 0
    %s127 = sadd.s32 %s126, 1
    %s128 = scalar_select %p125, %s126, %s127
    %p131 = pneg %p125
    %p132 = scmp.eq.s32.totalorder %s13, 3
    %p133 = por %p131, %p132
    %p134 = scmp.ne.s32.totalorder %s126, %s129
    %p135 = scmp.eq.s32.totalorder %s13, 0
    %p136 = por %p134, %p135
    %p137 = scmp.ne.s32.totalorder %s126, %s129
    %p138 = scmp.eq.s32.totalorder %s18, 3
    %p139 = por %p137, %p138
    %p140 = scmp.ne.s32.totalorder %s129, %s130
    %p141 = scmp.eq.s32.totalorder %s18, 0
    %p142 = por %p140, %p141
    %p143 = scmp.ne.s32.totalorder %s129, %s130
    %p144 = scmp.eq.s32.totalorder %s19, 3
    %p145 = por %p143, %p144
    %p147 = scmp.ne.s32.totalorder %s130, %s146
    %p148 = scmp.eq.s32.totalorder %s19, 0
    %p149 = por %p147, %p148
    %s150 = ssub.s32 %s20, %s32
    %p151 = scmp.eq.s32.totalorder %s150, 0
    %s153 = sadd.s32 %s152, 1
    %s154 = scalar_select %p151, %s152, %s153
    %p157 = pneg %p151
    %p158 = scmp.eq.s32.totalorder %s13, 3
    %p159 = por %p157, %p158
    %p160 = scmp.ne.s32.totalorder %s152, %s155
    %p161 = scmp.eq.s32.totalorder %s13, 0
    %p162 = por %p160, %p161
    %p163 = scmp.ne.s32.totalorder %s152, %s155
    %p164 = scmp.eq.s32.totalorder %s18, 3
    %p165 = por %p163, %p164
    %p166 = scmp.ne.s32.totalorder %s155, %s156
    %p167 = scmp.eq.s32.totalorder %s18, 0
    %p168 = por %p166, %p167
    %p169 = scmp.ne.s32.totalorder %s155, %s156
    %p170 = scmp.eq.s32.totalorder %s19, 3
    %p171 = por %p169, %p170
    %p173 = scmp.ne.s32.totalorder %s156, %s172
    %p174 = scmp.eq.s32.totalorder %s19, 0
    %p175 = por %p173, %p174
    %s176 = ssub.s32 %s20, %s32
    %p177 = scmp.eq.s32.totalorder %s176, 0
    %s179 = sadd.s32 %s178, 1
    %s180 = scalar_select %p177, %s178, %s179
    %p183 = pneg %p177
    %p184 = scmp.eq.s32.totalorder %s13, 3
    %p185 = por %p183, %p184
    %p186 = scmp.ne.s32.totalorder %s178, %s181
    %p187 = scmp.eq.s32.totalorder %s13, 0
    %p188 = por %p186, %p187
    %p189 = scmp.ne.s32.totalorder %s178, %s181
    %p190 = scmp.eq.s32.totalorder %s18, 3
    %p191 = por %p189, %p190
    %p192 = scmp.ne.s32.totalorder %s181, %s182
    %p193 = scmp.eq.s32.totalorder %s18, 0
    %p194 = por %p192, %p193
    %p195 = scmp.ne.s32.totalorder %s181, %s182
    %p196 = scmp.eq.s32.totalorder %s19, 3
    %p197 = por %p195, %p196
    %p199 = scmp.ne.s32.totalorder %s182, %s198
    %p200 = scmp.eq.s32.totalorder %s19, 0
    %p201 = por %p199, %p200
    %p202 = scmp.le.s32.totalorder 1, %s13
    %p203 = scmp.lt.s32.totalorder %s13, 5
    %p204 = pnand %p202, %p203
    %p205 = pneg %p204
    // Predicated region
    $region9: #{double_conv.4} parent=5 // pred_check
      _
    $region10: #{double_conv.4} parent=5 // pred_check_branch
      %207 = sbr.rel (%p204) target = $region12
    $region11: #{double_conv.4} parent=5 // pred_region
      %s208 = ssub.s32 %s13, 1
      // Predicated region
      $region13: #{double_conv.4} parent=11 // pred_check
        %p209 = pneg %p46
      $region14: #{double_conv.4} parent=11 // pred_check_branch
        %211 = sbr.rel (%p209) target = $region16
      $region15: #{double_conv.4} parent=11 // pred_region
        _
      $region16: #{double_conv.4} parent=11 // pred_fallthru
        _
      // Predicated region
      $region17: #{double_conv.4} parent=11 // pred_check
        %p212 = pneg %p67
      $region18: #{double_conv.4} parent=11 // pred_check_branch
        %214 = sbr.rel (%p212) target = $region20
      $region19: #{double_conv.4} parent=11 // pred_region
        _
      $region20: #{double_conv.4} parent=11 // pred_fallthru
        _
      // Predicated region
      $region21: #{double_conv.4} parent=11 // pred_check
        %p215 = pneg %p114
      $region22: #{double_conv.4} parent=11 // pred_check_branch
        %217 = sbr.rel (%p215) target = $region24
      $region23: #{double_conv.4} parent=11 // pred_region
        _
      $region24: #{double_conv.4} parent=11 // pred_fallthru
        _
    $region12: #{double_conv.4} parent=5 // pred_fallthru
      _
    %p218 = scmp.lt.s32.totalorder %s13, 4
    // Predicated region
    $region25: #{double_conv.4} parent=5 // pred_check
      %p219 = pneg %p218
    $region26: #{double_conv.4} parent=5 // pred_check_branch
      %221 = sbr.rel (%p219) target = $region28
    $region27: #{double_conv.4} parent=5 // pred_region
      // Predicated region
      $region29: #{double_conv.4} parent=27 // pred_check
        %p222 = pneg %p87
      $region30: #{double_conv.4} parent=27 // pred_check_branch
        %224 = sbr.rel (%p222) target = $region32
      $region31: #{double_conv.4} parent=27 // pred_region
        %p225 = scmp.lt.s32.totalorder %s20, 1
        %s226 = scalar_select %p225, %s20, 1
        %s227 = smul.addr %s226, 32
        %s228 = smul.addr %s227, 4
        %s229 = scalar_lea.vmem %s2, %s228
      $region32: #{double_conv.4} parent=27 // pred_fallthru
        _
    $region28: #{double_conv.4} parent=5 // pred_fallthru
      _
    %p230 = scmp.le.s32.totalorder 1, %s13
    %p231 = scmp.lt.s32.totalorder %s13, 5
    %p232 = pnand %p230, %p231
    %p233 = pneg %p232
    // Predicated region
    $region33: #{double_conv.4} parent=5 // pred_check
      _
    $region34: #{double_conv.4} parent=5 // pred_check_branch
      %235 = sbr.rel (%p232) target = $region36
    $region35: #{double_conv.4} parent=5 // pred_region
      %s236 = ssub.s32 %s13, 1
      %p237 = pneg %p46
      %p238 = pneg %p43
      %p239 = pneg %p67
      %p240 = pneg %p64
      %p241 = scmp.lt.s32.totalorder %s22, 1
      %s242 = scalar_select %p241, %s22, 1
      %s243 = smul.addr %s242, 32
      %s244 = smul.addr %s243, 4
      %s245 = scalar_lea.vmem %s2, %s244
      %p246 = pneg %p93
      %p247 = pneg %p90
      %p248 = pneg %p114
      %p249 = pneg %p111
      %p250 = pneg %p142
      %p251 = pneg %p139
      %s252 = smul.u32 8, %s23
      %p253 = scmp.lt.s32.totalorder %s22, 1
      %s254 = scalar_select %p253, %s22, 1
      %p255 = scmp.lt.s32.totalorder %s252, 15
      %s256 = scalar_select %p255, %s252, 15
      %s257 = smul.addr %s256, 2
      %s258 = smul.addr %s254, 32
      %s259 = sadd.s32 %s257, %s258
      %s260 = smul.addr %s259, 4
      %s261 = scalar_lea.vmem %s4, %s260
      %p262 = pneg %p168
      %p263 = pneg %p165
      %p264 = scmp.lt.s32.totalorder %s22, 1
      %s265 = scalar_select %p264, %s22, 1
      %s266 = scalar_lea.vmem %s5, %s265
      %p267 = pneg %p194
      %p268 = pneg %p191
      %p269 = scmp.lt.s32.totalorder %s22, 1
      %s270 = scalar_select %p269, %s22, 1
      %s271 = scalar_lea.vmem %s6, %s270
      %p272 = scmp.lt.s32.totalorder %s22, 1
      %s273 = scalar_select %p272, %s22, 1
      %s274 = smul.addr %s273, 32
      %s275 = smul.addr %s274, 4
      %s276 = scalar_lea.vmem %s2, %s275
      %s277 = smul.u32 8, %s23
      %p278 = scmp.lt.s32.totalorder %s22, 1
      %s279 = scalar_select %p278, %s22, 1
      %p280 = scmp.lt.s32.totalorder %s277, 15
      %s281 = scalar_select %p280, %s277, 15
      %s282 = smul.addr %s281, 2
      %s283 = smul.addr %s279, 32
      %s284 = sadd.s32 %s282, %s283
      %s285 = smul.addr %s284, 4
      %s286 = scalar_lea.vmem %s4, %s285
      %s287 = smul.u32 8, %s23
      %p288 = scmp.lt.s32.totalorder %s22, 1
      %s289 = scalar_select %p288, %s22, 1
      %s290 = scalar_lea.vmem %s5, %s289
      %p291 = scmp.lt.s32.totalorder %s22, 1
      %s292 = scalar_select %p291, %s22, 1
      %s293 = scalar_lea.vmem %s6, %s292
      %s295 = smul.u32 %s23, 8
      %s296 = smul.u32 %s295, 2
      %s297 = smul.addr %s296, 4
      %s298 = scalar_lea.vmem %s276, %s297
      %v299 = vld [vmem:[%s298] sm:$0xf]
      %v300 = vld [vmem:[%s298 + $0x4] sm:$0xf]
      %v301 = vld [vmem:[%s298 + $0x8] sm:$0xf]
      %v302 = vld [vmem:[%s298 + $0xc] sm:$0xf]
      %v303 = vld [vmem:[%s298 + $0x10] sm:$0xf]
      %v304 = vld [vmem:[%s298 + $0x14] sm:$0xf]
      %v305 = vld [vmem:[%s298 + $0x18] sm:$0xf]
      %v306 = vld [vmem:[%s298 + $0x1c] sm:$0xf]
      %v307 = vld [vmem:[%s298 + $0x20] sm:$0xf]
      %v308 = vld [vmem:[%s298 + $0x24] sm:$0xf]
      %v309 = vld [vmem:[%s298 + $0x28] sm:$0xf]
      %v310 = vld [vmem:[%s298 + $0x2c] sm:$0xf]
      %v311 = vld [vmem:[%s298 + $0x30] sm:$0xf]
      %v312 = vld [vmem:[%s298 + $0x34] sm:$0xf]
      %v313 = vld [vmem:[%s298 + $0x38] sm:$0xf]
      %v314 = vld [vmem:[%s298 + $0x3c] sm:$0xf]
      %v315 = vunpack.c.l.bf16 %v299
      %v316 = vunpack.c.l.bf16 %v300
      %v317 = vunpack.c.l.bf16 %v301
      %v318 = vunpack.c.l.bf16 %v302
      %v319 = vunpack.c.l.bf16 %v303
      %v320 = vunpack.c.l.bf16 %v304
      %v321 = vunpack.c.l.bf16 %v305
      %v322 = vunpack.c.l.bf16 %v306
      %v323 = vunpack.c.l.bf16 %v307
      %v324 = vunpack.c.l.bf16 %v308
      %v325 = vunpack.c.l.bf16 %v309
      %v326 = vunpack.c.l.bf16 %v310
      %v327 = vunpack.c.l.bf16 %v311
      %v328 = vunpack.c.l.bf16 %v312
      %v329 = vunpack.c.l.bf16 %v313
      %v330 = vunpack.c.l.bf16 %v314
      %v331 = vld [vmem:[%s0] sm:$0x1]
      %v333 = vlaneseq
      %v334 = vshrl.u32 %v333, 7
      %v335 = vsub.s32 0, %v334
      %v336 = vrot.slane %v331, %v335
      %v338 = vmul.f32 %v315, %v336
      %v339 = vmul.f32 %v316, %v336
      %v340 = vmul.f32 %v317, %v336
      %v341 = vmul.f32 %v318, %v336
      %v342 = vmul.f32 %v319, %v336
      %v343 = vmul.f32 %v320, %v336
      %v344 = vmul.f32 %v321, %v336
      %v345 = vmul.f32 %v322, %v336
      %v346 = vmul.f32 %v323, %v336
      %v347 = vmul.f32 %v324, %v336
      %v348 = vmul.f32 %v325, %v336
      %v349 = vmul.f32 %v326, %v336
      %v350 = vmul.f32 %v327, %v336
      %v351 = vmul.f32 %v328, %v336
      %v352 = vmul.f32 %v329, %v336
      %v353 = vmul.f32 %v330, %v336
      %v354 = vld [vmem:[%s1] sm:$0x1]
      %v356 = vlaneseq
      %v357 = vshrl.u32 %v356, 7
      %v358 = vsub.s32 0, %v357
      %v359 = vrot.slane %v354, %v358
      %v361 = vadd.f32 %v338, %v359
      %v362 = vadd.f32 %v339, %v359
      %v363 = vadd.f32 %v340, %v359
      %v364 = vadd.f32 %v341, %v359
      %v365 = vadd.f32 %v342, %v359
      %v366 = vadd.f32 %v343, %v359
      %v367 = vadd.f32 %v344, %v359
      %v368 = vadd.f32 %v345, %v359
      %v369 = vadd.f32 %v346, %v359
      %v370 = vadd.f32 %v347, %v359
      %v371 = vadd.f32 %v348, %v359
      %v372 = vadd.f32 %v349, %v359
      %v373 = vadd.f32 %v350, %v359
      %v374 = vadd.f32 %v351, %v359
      %v375 = vadd.f32 %v352, %v359
      %v376 = vadd.f32 %v353, %v359
      %v377 = vmax.f32 %v361, 0.0
      %v378 = vmax.f32 %v362, 0.0
      %v379 = vmax.f32 %v363, 0.0
      %v380 = vmax.f32 %v364, 0.0
      %v381 = vmax.f32 %v365, 0.0
      %v382 = vmax.f32 %v366, 0.0
      %v383 = vmax.f32 %v367, 0.0
      %v384 = vmax.f32 %v368, 0.0
      %v385 = vmax.f32 %v369, 0.0
      %v386 = vmax.f32 %v370, 0.0
      %v387 = vmax.f32 %v371, 0.0
      %v388 = vmax.f32 %v372, 0.0
      %v389 = vmax.f32 %v373, 0.0
      %v390 = vmax.f32 %v374, 0.0
      %v391 = vmax.f32 %v375, 0.0
      %v392 = vmax.f32 %v376, 0.0
      %s393 = ssub.s32 %s295, 1
      %p394 = scmp.gt.s32.totalorder %s393, 0
      %s395 = scalar_select %p394, %s393, 0
      %s396 = smul.u32 %s395, 2
      %s397 = smul.addr %s396, 4
      %s398 = scalar_lea.vmem %s276, %s397
      %v399 = vld [vmem:[%s398] sm:$0xf]
      %v400 = vld [vmem:[%s398 + $0x4] sm:$0xf]
      %v401 = vunpack.c.l.bf16 %v399
      %v402 = vunpack.c.l.bf16 %v400
      %v403 = vmul.f32 %v401, %v336
      %v404 = vmul.f32 %v402, %v336
      %v405 = vadd.f32 %v403, %v359
      %v406 = vadd.f32 %v404, %v359
      %v407 = vmax.f32 %v405, 0.0
      %v408 = vmax.f32 %v406, 0.0
      %s409 = sadd.s32 %s295, 8
      %p410 = scmp.lt.s32.totalorder %s409, 15
      %s411 = scalar_select %p410, %s409, 15
      %s412 = smul.u32 %s411, 2
      %s413 = smul.addr %s412, 4
      %s414 = scalar_lea.vmem %s276, %s413
      %v415 = vld [vmem:[%s414] sm:$0xf]
      %v416 = vld [vmem:[%s414 + $0x4] sm:$0xf]
      %v417 = vunpack.c.l.bf16 %v415
      %v418 = vunpack.c.l.bf16 %v416
      %v419 = vmul.f32 %v417, %v336
      %v420 = vmul.f32 %v418, %v336
      %v421 = vadd.f32 %v419, %v359
      %v422 = vadd.f32 %v420, %v359
      %v423 = vmax.f32 %v421, 0.0
      %v424 = vmax.f32 %v422, 0.0
      %p425 = scmp.gt.s32.totalorder %s23, 0
      %s426 = scalar_select %p425, 1, 0
      %v427 = vstv %s426
      %vm428 = vcmp.eq.s32.totalorder %v427, 1
      %v429 = vsel %vm428, %v407, 0.0
      %v430 = vsel %vm428, %v408, 0.0
      %p431 = scmp.lt.s32.totalorder %s23, 1
      %s432 = scalar_select %p431, 1, 0
      %v433 = vstv %s432
      %vm434 = vcmp.eq.s32.totalorder %v433, 1
      %v435 = vsel %vm434, %v423, 0.0
      %v436 = vsel %vm434, %v424, 0.0
      %vm457 = vcmask 1040384
      %v458 = vrot.slane %v429, 7
      %v459 = vrot.slane %v430, 7
      %v460 = vsel %vm457, %v458, %v459
      %v461 = vrot.slane %v377, 7
      %v462 = vrot.slane %v378, 7
      %v463 = vsel %vm457, %v461, %v462
      %v464 = vrot.slane %v379, 7
      %v465 = vrot.slane %v380, 7
      %v466 = vsel %vm457, %v464, %v465
      %v467 = vrot.slane %v381, 7
      %v468 = vrot.slane %v382, 7
      %v469 = vsel %vm457, %v467, %v468
      %v470 = vrot.slane %v383, 7
      %v471 = vrot.slane %v384, 7
      %v472 = vsel %vm457, %v470, %v471
      %v473 = vrot.slane %v385, 7
      %v474 = vrot.slane %v386, 7
      %v475 = vsel %vm457, %v473, %v474
      %v476 = vrot.slane %v387, 7
      %v477 = vrot.slane %v388, 7
      %v478 = vsel %vm457, %v476, %v477
      %v479 = vrot.slane %v389, 7
      %v480 = vrot.slane %v390, 7
      %v481 = vsel %vm457, %v479, %v480
      %v482 = vrot.slane %v391, 7
      %v483 = vrot.slane %v392, 7
      %v484 = vsel %vm457, %v482, %v483
      %v485 = vrot.slane %v435, 7
      %v486 = vrot.slane %v436, 7
      %v487 = vsel %vm457, %v485, %v486
      %v508 = vsel %vm457, 0.0, %v458
      %v509 = vsel %vm457, 0.0, %v461
      %v510 = vsel %vm457, 0.0, %v464
      %v511 = vsel %vm457, 0.0, %v467
      %v512 = vsel %vm457, 0.0, %v470
      %v513 = vsel %vm457, 0.0, %v473
      %v514 = vsel %vm457, 0.0, %v476
      %v515 = vsel %vm457, 0.0, %v479
      %v516 = vsel %vm457, 0.0, %v482
      %v517 = vsel %vm457, 0.0, %v485
      %vm518 = vcmask 1046528
      %v519 = vrot.slane %v429, 1
      %v520 = vrot.slane %v430, 1
      %v521 = vsel %vm518, %v519, %v520
      %v522 = vrot.slane %v377, 1
      %v523 = vrot.slane %v378, 1
      %v524 = vsel %vm518, %v522, %v523
      %v525 = vrot.slane %v379, 1
      %v526 = vrot.slane %v380, 1
      %v527 = vsel %vm518, %v525, %v526
      %v528 = vrot.slane %v381, 1
      %v529 = vrot.slane %v382, 1
      %v530 = vsel %vm518, %v528, %v529
      %v531 = vrot.slane %v383, 1
      %v532 = vrot.slane %v384, 1
      %v533 = vsel %vm518, %v531, %v532
      %v534 = vrot.slane %v385, 1
      %v535 = vrot.slane %v386, 1
      %v536 = vsel %vm518, %v534, %v535
      %v537 = vrot.slane %v387, 1
      %v538 = vrot.slane %v388, 1
      %v539 = vsel %vm518, %v537, %v538
      %v540 = vrot.slane %v389, 1
      %v541 = vrot.slane %v390, 1
      %v542 = vsel %vm518, %v540, %v541
      %v543 = vrot.slane %v391, 1
      %v544 = vrot.slane %v392, 1
      %v545 = vsel %vm518, %v543, %v544
      %v546 = vrot.slane %v435, 1
      %v547 = vrot.slane %v436, 1
      %v548 = vsel %vm518, %v546, %v547
      %v559 = vsel %vm518, %v520, 0.0
      %v560 = vsel %vm518, %v523, 0.0
      %v561 = vsel %vm518, %v526, 0.0
      %v562 = vsel %vm518, %v529, 0.0
      %v563 = vsel %vm518, %v532, 0.0
      %v564 = vsel %vm518, %v535, 0.0
      %v565 = vsel %vm518, %v538, 0.0
      %v566 = vsel %vm518, %v541, 0.0
      %v567 = vsel %vm518, %v544, 0.0
      %v568 = vsel %vm518, %v547, 0.0
      %569 = vrot.lane.b32.xlu0 %v429, 8
      %v570 = vpop.permute.xlu0 %569
      %571 = vrot.lane.b32.xlu0 %v430, 8
      %v572 = vpop.permute.xlu0 %571
      %573 = vrot.lane.b32.xlu0 %v377, 8
      %v574 = vpop.permute.xlu0 %573
      %575 = vrot.lane.b32.xlu0 %v378, 8
      %v576 = vpop.permute.xlu0 %575
      %577 = vrot.lane.b32.xlu0 %v379, 8
      %v578 = vpop.permute.xlu0 %577
      %579 = vrot.lane.b32.xlu0 %v380, 8
      %v580 = vpop.permute.xlu0 %579
      %581 = vrot.lane.b32.xlu0 %v381, 8
      %v582 = vpop.permute.xlu0 %581
      %583 = vrot.lane.b32.xlu0 %v382, 8
      %v584 = vpop.permute.xlu0 %583
      %585 = vrot.lane.b32.xlu0 %v383, 8
      %v586 = vpop.permute.xlu0 %585
      %587 = vrot.lane.b32.xlu0 %v384, 8
      %v588 = vpop.permute.xlu0 %587
      %589 = vrot.lane.b32.xlu0 %v385, 8
      %v590 = vpop.permute.xlu0 %589
      %591 = vrot.lane.b32.xlu0 %v386, 8
      %v592 = vpop.permute.xlu0 %591
      %593 = vrot.lane.b32.xlu0 %v387, 8
      %v594 = vpop.permute.xlu0 %593
      %595 = vrot.lane.b32.xlu0 %v388, 8
      %v596 = vpop.permute.xlu0 %595
      %597 = vrot.lane.b32.xlu0 %v389, 8
      %v598 = vpop.permute.xlu0 %597
      %599 = vrot.lane.b32.xlu0 %v390, 8
      %v600 = vpop.permute.xlu0 %599
      %601 = vrot.lane.b32.xlu0 %v391, 8
      %v602 = vpop.permute.xlu0 %601
      %603 = vrot.lane.b32.xlu0 %v392, 8
      %v604 = vpop.permute.xlu0 %603
      %605 = vrot.lane.b32.xlu0 %v435, 8
      %v606 = vpop.permute.xlu0 %605
      %607 = vrot.lane.b32.xlu0 %v436, 8
      %v608 = vpop.permute.xlu0 %607
      %639 = vrot.lane.b32.xlu0 %v521, 16
      %v640 = vpop.permute.xlu0 %639
      %641 = vrot.lane.b32.xlu0 %v559, 16
      %v642 = vpop.permute.xlu0 %641
      %643 = vrot.lane.b32.xlu0 %v524, 16
      %v644 = vpop.permute.xlu0 %643
      %645 = vrot.lane.b32.xlu0 %v560, 16
      %v646 = vpop.permute.xlu0 %645
      %647 = vrot.lane.b32.xlu0 %v527, 16
      %v648 = vpop.permute.xlu0 %647
      %649 = vrot.lane.b32.xlu0 %v561, 16
      %v650 = vpop.permute.xlu0 %649
      %651 = vrot.lane.b32.xlu0 %v530, 16
      %v652 = vpop.permute.xlu0 %651
      %653 = vrot.lane.b32.xlu0 %v562, 16
      %v654 = vpop.permute.xlu0 %653
      %655 = vrot.lane.b32.xlu0 %v533, 16
      %v656 = vpop.permute.xlu0 %655
      %657 = vrot.lane.b32.xlu0 %v563, 16
      %v658 = vpop.permute.xlu0 %657
      %659 = vrot.lane.b32.xlu0 %v536, 16
      %v660 = vpop.permute.xlu0 %659
      %661 = vrot.lane.b32.xlu0 %v564, 16
      %v662 = vpop.permute.xlu0 %661
      %663 = vrot.lane.b32.xlu0 %v539, 16
      %v664 = vpop.permute.xlu0 %663
      %665 = vrot.lane.b32.xlu0 %v565, 16
      %v666 = vpop.permute.xlu0 %665
      %667 = vrot.lane.b32.xlu0 %v542, 16
      %v668 = vpop.permute.xlu0 %667
      %669 = vrot.lane.b32.xlu0 %v566, 16
      %v670 = vpop.permute.xlu0 %669
      %671 = vrot.lane.b32.xlu0 %v545, 16
      %v672 = vpop.permute.xlu0 %671
      %673 = vrot.lane.b32.xlu0 %v567, 16
      %v674 = vpop.permute.xlu0 %673
      %675 = vrot.lane.b32.xlu0 %v548, 16
      %v676 = vpop.permute.xlu0 %675
      %677 = vrot.lane.b32.xlu0 %v568, 16
      %v678 = vpop.permute.xlu0 %677
      %vm699 = vcmask 64512
      %v700 = vsel %vm699, %v508, %v570
      %v701 = vsel %vm699, %v460, %v572
      %v702 = vsel %vm699, %v509, %v574
      %v703 = vsel %vm699, %v463, %v576
      %v704 = vsel %vm699, %v510, %v578
      %v705 = vsel %vm699, %v466, %v580
      %v706 = vsel %vm699, %v511, %v582
      %v707 = vsel %vm699, %v469, %v584
      %v708 = vsel %vm699, %v512, %v586
      %v709 = vsel %vm699, %v472, %v588
      %v710 = vsel %vm699, %v513, %v590
      %v711 = vsel %vm699, %v475, %v592
      %v712 = vsel %vm699, %v514, %v594
      %v713 = vsel %vm699, %v478, %v596
      %v714 = vsel %vm699, %v515, %v598
      %v715 = vsel %vm699, %v481, %v600
      %v716 = vsel %vm699, %v516, %v602
      %v717 = vsel %vm699, %v484, %v604
      %v718 = vsel %vm699, %v517, %v606
      %v719 = vsel %vm699, %v487, %v608
      %vm720 = vcmask 130048
      %v721 = vsel %vm720, %v700, %v640
      %v722 = vsel %vm720, %v701, %v642
      %v723 = vsel %vm720, %v702, %v644
      %v724 = vsel %vm720, %v703, %v646
      %v725 = vsel %vm720, %v704, %v648
      %v726 = vsel %vm720, %v705, %v650
      %v727 = vsel %vm720, %v706, %v652
      %v728 = vsel %vm720, %v707, %v654
      %v729 = vsel %vm720, %v708, %v656
      %v730 = vsel %vm720, %v709, %v658
      %v731 = vsel %vm720, %v710, %v660
      %v732 = vsel %vm720, %v711, %v662
      %v733 = vsel %vm720, %v712, %v664
      %v734 = vsel %vm720, %v713, %v666
      %v735 = vsel %vm720, %v714, %v668
      %v736 = vsel %vm720, %v715, %v670
      %v737 = vsel %vm720, %v716, %v672
      %v738 = vsel %vm720, %v717, %v674
      %v739 = vsel %vm720, %v718, %v676
      %v740 = vsel %vm720, %v719, %v678
      %v741 = vpack.c.bf16 %v722, %v721
      %v742 = vpack.c.bf16 %v724, %v723
      %v743 = vpack.c.bf16 %v726, %v725
      %v744 = vpack.c.bf16 %v728, %v727
      %v745 = vpack.c.bf16 %v730, %v729
      %v746 = vpack.c.bf16 %v732, %v731
      %v747 = vpack.c.bf16 %v734, %v733
      %v748 = vpack.c.bf16 %v736, %v735
      %v749 = vpack.c.bf16 %v738, %v737
      %v750 = vpack.c.bf16 %v740, %v739
      %v751 = vld [vmem:[%s3] sm:$0xf]
      %v752 = vld [vmem:[%s3 + $0x4] sm:$0xf]
      %v753 = vld [vmem:[%s3 + $0x8] sm:$0xf]
      %s754 = scalar_lea.vmem %s3, 12
      %v755 = vld [vmem:[%s754] sm:$0xf]
      %v756 = vld [vmem:[%s754 + $0x4] sm:$0xf]
      %v757 = vld [vmem:[%s754 + $0x8] sm:$0xf]
      %v761 = vunpack.c.l.b16 %v755
      %v762 = vunpack.c.l.b16 %v756
      %v763 = vunpack.c.l.b16 %v757
      %v764 = vpack.c.b16 %v762, %v761
      %v765 = vpack.c.b16 %v763, %v763
      %vm767 = vcmask 195584
      %v769 = vsel %vm767, %v742, 0
      %v772 = vsel %vm767, %v743, 0
      %v775 = vsel %vm767, %v744, 0
      %v778 = vsel %vm767, %v745, 0
      %v781 = vsel %vm767, %v746, 0
      %v784 = vsel %vm767, %v747, 0
      %v787 = vsel %vm767, %v748, 0
      %v790 = vsel %vm767, %v749, 0
      %vm792 = vcmask 1043456
      %v794 = vsel %vm792, %v765, 0
      %796 = vmatprep.subr.bf16.mxu0 0
      %797 = vmatpush1.bf16.msra.mxu0 %v764
      %798 = vmatprep.subr.bf16.mxu0 0
      %799 = vmatpush1.bf16.msra.mxu0 %v794
      %800 = vmatprep.subr.bf16.mxu0 0
      %801 = vmatpush1.bf16.msra.mxu0 0
      %802 = vmatprep.subr.bf16.mxu0 0
      %803 = vmatpush1.bf16.msra.mxu0 0
      %804 = vmatprep.subr.bf16.mxu0 0
      %805 = vmatpush1.bf16.msra.mxu0 0
      %806 = vmatprep.subr.bf16.mxu0 0
      %807 = vmatpush1.bf16.msra.mxu0 0
      %808 = vmatprep.subr.bf16.mxu0 0
      %809 = vmatpush1.bf16.msra.mxu0 0
      %810 = vmatprep.subr.bf16.mxu0 0
      %811 = vmatpush1.bf16.msra.mxu0 0
      %812 = vmatprep.subr.bf16.mxu0 0
      %813 = vmatpush1.bf16.msra.mxu0 0
      %814 = vmatprep.subr.bf16.mxu0 0
      %815 = vmatpush1.bf16.msra.mxu0 0
      %816 = vmatprep.subr.bf16.mxu0 0
      %817 = vmatpush1.bf16.msra.mxu0 0
      %818 = vmatprep.subr.bf16.mxu0 0
      %819 = vmatpush1.bf16.msra.mxu0 0
      %820 = vmatprep.subr.bf16.mxu0 0
      %821 = vmatpush1.bf16.msra.mxu0 0
      %822 = vmatprep.subr.bf16.mxu0 0
      %823 = vmatpush1.bf16.msra.mxu0 0
      %824 = vmatprep.subr.bf16.mxu0 0
      %825 = vmatpush1.bf16.msra.mxu0 0
      %826 = vmatprep.subr.bf16.mxu0 0
      %827 = vmatpush1.bf16.msra.mxu0 0
      %828 = vmatprep.mubr.bf16.mxu0 0
      %829 = vmatmul.mubr.bf16.gmra.mrb[0].mxu0 %v769
      %v830 = vpop.f32.mrb[0].mxu0
      %v831 = vadd.f32 0.0, %v830
      %v832 = vpop.f32.mrb[0].mxu0
      %v833 = vpop.f32.mrb[0].mxu0
      %v834 = vadd.f32 0.0, %v833
      %v835 = vpop.f32.mrb[0].mxu0
      %836 = vmatprep.mubr.bf16.mxu0 0
      %837 = vmatmul.mubr.bf16.gmra.mrb[0].mxu0 %v772
      %v838 = vpop.f32.mrb[0].mxu0
      %v839 = vadd.f32 0.0, %v838
      %v840 = vpop.f32.mrb[0].mxu0
      %v841 = vpop.f32.mrb[0].mxu0
      %v842 = vadd.f32 0.0, %v841
      %v843 = vpop.f32.mrb[0].mxu0
      %844 = vmatprep.mubr.bf16.mxu0 0
      %845 = vmatmul.mubr.bf16.gmra.mrb[0].mxu0 %v775
      %v846 = vpop.f32.mrb[0].mxu0
      %v847 = vadd.f32 0.0, %v846
      %v848 = vpop.f32.mrb[0].mxu0
      %v849 = vpop.f32.mrb[0].mxu0
      %v850 = vadd.f32 0.0, %v849
      %v851 = vpop.f32.mrb[0].mxu0
      %852 = vmatprep.mubr.bf16.mxu0 0
      %853 = vmatmul.mubr.bf16.gmra.mrb[0].mxu0 %v778
      %v854 = vpop.f32.mrb[0].mxu0
      %v855 = vadd.f32 0.0, %v854
      %v856 = vpop.f32.mrb[0].mxu0
      %v857 = vpop.f32.mrb[0].mxu0
      %v858 = vadd.f32 0.0, %v857
      %v859 = vpop.f32.mrb[0].mxu0
      %860 = vmatprep.mubr.bf16.mxu0 0
      %861 = vmatmul.mubr.bf16.gmra.mrb[0].mxu0 %v781
      %v862 = vpop.f32.mrb[0].mxu0
      %v863 = vadd.f32 0.0, %v862
      %v864 = vpop.f32.mrb[0].mxu0
      %v865 = vpop.f32.mrb[0].mxu0
      %v866 = vadd.f32 0.0, %v865
      %v867 = vpop.f32.mrb[0].mxu0
      %868 = vmatprep.mubr.bf16.mxu0 0
      %869 = vmatmul.mubr.bf16.gmra.mrb[0].mxu0 %v784
      %v870 = vpop.f32.mrb[0].mxu0
      %v871 = vadd.f32 0.0, %v870
      %v872 = vpop.f32.mrb[0].mxu0
      %v873 = vpop.f32.mrb[0].mxu0
      %v874 = vadd.f32 0.0, %v873
      %v875 = vpop.f32.mrb[0].mxu0
      %876 = vmatprep.mubr.bf16.mxu0 0
      %877 = vmatmul.mubr.bf16.gmra.mrb[0].mxu0 %v787
      %v878 = vpop.f32.mrb[0].mxu0
      %v879 = vadd.f32 0.0, %v878
      %v880 = vpop.f32.mrb[0].mxu0
      %v881 = vpop.f32.mrb[0].mxu0
      %v882 = vadd.f32 0.0, %v881
      %v883 = vpop.f32.mrb[0].mxu0
      %884 = vmatprep.mubr.bf16.mxu0 0
      %885 = vmatmul.mubr.bf16.gmra.mrb[0].mxu0 %v790
      %v886 = vpop.f32.mrb[0].mxu0
      %v887 = vadd.f32 0.0, %v886
      %v888 = vpop.f32.mrb[0].mxu0
      %v889 = vpop.f32.mrb[0].mxu0
      %v890 = vadd.f32 0.0, %v889
      %v891 = vpop.f32.mrb[0].mxu0
      %892 = vdwg.mxu0
      %v896 = vunpack.c.l.b16 %v751
      %v897 = vunpack.c.l.b16 %v752
      %v898 = vunpack.c.l.b16 %v753
      %v899 = vpack.c.b16 %v897, %v896
      %v900 = vpack.c.b16 %v898, %v898
      %v903 = vsel %vm767, %v741, 0
      %v906 = vsel %vm792, %v900, 0
      %908 = vmatprep.subr.bf16.mxu0 0
      %909 = vmatpush1.bf16.msra.mxu0 %v899
      %910 = vmatprep.subr.bf16.mxu0 0
      %911 = vmatpush1.bf16.msra.mxu0 %v906
      %912 = vmatprep.subr.bf16.mxu0 0
      %913 = vmatpush1.bf16.msra.mxu0 0
      %914 = vmatprep.subr.bf16.mxu0 0
      %915 = vmatpush1.bf16.msra.mxu0 0
      %916 = vmatprep.subr.bf16.mxu0 0
      %917 = vmatpush1.bf16.msra.mxu0 0
      %918 = vmatprep.subr.bf16.mxu0 0
      %919 = vmatpush1.bf16.msra.mxu0 0
      %920 = vmatprep.subr.bf16.mxu0 0
      %921 = vmatpush1.bf16.msra.mxu0 0
      %922 = vmatprep.subr.bf16.mxu0 0
      %923 = vmatpush1.bf16.msra.mxu0 0
      %924 = vmatprep.subr.bf16.mxu0 0
      %925 = vmatpush1.bf16.msra.mxu0 0
      %926 = vmatprep.subr.bf16.mxu0 0
      %927 = vmatpush1.bf16.msra.mxu0 0
      %928 = vmatprep.subr.bf16.mxu0 0
      %929 = vmatpush1.bf16.msra.mxu0 0
      %930 = vmatprep.subr.bf16.mxu0 0
      %931 = vmatpush1.bf16.msra.mxu0 0
      %932 = vmatprep.subr.bf16.mxu0 0
      %933 = vmatpush1.bf16.msra.mxu0 0
      %934 = vmatprep.subr.bf16.mxu0 0
      %935 = vmatpush1.bf16.msra.mxu0 0
      %936 = vmatprep.subr.bf16.mxu0 0
      %937 = vmatpush1.bf16.msra.mxu0 0
      %938 = vmatprep.subr.bf16.mxu0 0
      %939 = vmatpush1.bf16.msra.mxu0 0
      %940 = vmatprep.mubr.bf16.mxu0 0
      %941 = vmatmul.mubr.bf16.gmra.mrb[0].mxu0 %v903
      %v942 = vpop.f32.mrb[0].mxu0
      %v943 = vadd.f32 %v831, %v942
      %v944 = vpop.f32.mrb[0].mxu0
      %v945 = vpop.f32.mrb[0].mxu0
      %v946 = vadd.f32 %v834, %v945
      %v947 = vpop.f32.mrb[0].mxu0
      %948 = vmatprep.mubr.bf16.mxu0 0
      %949 = vmatmul.mubr.bf16.gmra.mrb[0].mxu0 %v769
      %v950 = vpop.f32.mrb[0].mxu0
      %v951 = vadd.f32 %v839, %v950
      %v952 = vpop.f32.mrb[0].mxu0
      %v953 = vpop.f32.mrb[0].mxu0
      %v954 = vadd.f32 %v842, %v953
      %v955 = vpop.f32.mrb[0].mxu0
      %956 = vmatprep.mubr.bf16.mxu0 0
      %957 = vmatmul.mubr.bf16.gmra.mrb[0].mxu0 %v772
      %v958 = vpop.f32.mrb[0].mxu0
      %v959 = vadd.f32 %v847, %v958
      %v960 = vpop.f32.mrb[0].mxu0
      %v961 = vpop.f32.mrb[0].mxu0
      %v962 = vadd.f32 %v850, %v961
      %v963 = vpop.f32.mrb[0].mxu0
      %964 = vmatprep.mubr.bf16.mxu0 0
      %965 = vmatmul.mubr.bf16.gmra.mrb[0].mxu0 %v775
      %v966 = vpop.f32.mrb[0].mxu0
      %v967 = vadd.f32 %v855, %v966
      %v968 = vpop.f32.mrb[0].mxu0
      %v969 = vpop.f32.mrb[0].mxu0
      %v970 = vadd.f32 %v858, %v969
      %v971 = vpop.f32.mrb[0].mxu0
      %972 = vmatprep.mubr.bf16.mxu0 0
      %973 = vmatmul.mubr.bf16.gmra.mrb[0].mxu0 %v778
      %v974 = vpop.f32.mrb[0].mxu0
      %v975 = vadd.f32 %v863, %v974
      %v976 = vpop.f32.mrb[0].mxu0
      %v977 = vpop.f32.mrb[0].mxu0
      %v978 = vadd.f32 %v866, %v977
      %v979 = vpop.f32.mrb[0].mxu0
      %980 = vmatprep.mubr.bf16.mxu0 0
      %981 = vmatmul.mubr.bf16.gmra.mrb[0].mxu0 %v781
      %v982 = vpop.f32.mrb[0].mxu0
      %v983 = vadd.f32 %v871, %v982
      %v984 = vpop.f32.mrb[0].mxu0
      %v985 = vpop.f32.mrb[0].mxu0
      %v986 = vadd.f32 %v874, %v985
      %v987 = vpop.f32.mrb[0].mxu0
      %988 = vmatprep.mubr.bf16.mxu0 0
      %989 = vmatmul.mubr.bf16.gmra.mrb[0].mxu0 %v784
      %v990 = vpop.f32.mrb[0].mxu0
      %v991 = vadd.f32 %v879, %v990
      %v992 = vpop.f32.mrb[0].mxu0
      %v993 = vpop.f32.mrb[0].mxu0
      %v994 = vadd.f32 %v882, %v993
      %v995 = vpop.f32.mrb[0].mxu0
      %996 = vmatprep.mubr.bf16.mxu0 0
      %997 = vmatmul.mubr.bf16.gmra.mrb[0].mxu0 %v787
      %v998 = vpop.f32.mrb[0].mxu0
      %v999 = vadd.f32 %v887, %v998
      %v1000 = vpop.f32.mrb[0].mxu0
      %v1001 = vpop.f32.mrb[0].mxu0
      %v1002 = vadd.f32 %v890, %v1001
      %v1003 = vpop.f32.mrb[0].mxu0
      %1004 = vdwg.mxu0
      %s1005 = scalar_lea.vmem %s3, 24
      %v1006 = vld [vmem:[%s1005] sm:$0xf]
      %v1007 = vld [vmem:[%s1005 + $0x4] sm:$0xf]
      %v1008 = vld [vmem:[%s1005 + $0x8] sm:$0xf]
      %v1012 = vunpack.c.l.b16 %v1006
      %v1013 = vunpack.c.l.b16 %v1007
      %v1014 = vunpack.c.l.b16 %v1008
      %v1015 = vpack.c.b16 %v1013, %v1012
      %v1016 = vpack.c.b16 %v1014, %v1014
      %v1019 = vsel %vm767, %v750, 0
      %v1022 = vsel %vm792, %v1016, 0
      %1024 = vmatprep.subr.bf16.mxu0 0
      %1025 = vmatpush1.bf16.msra.mxu0 %v1015
      %1026 = vmatprep.subr.bf16.mxu0 0
      %1027 = vmatpush1.bf16.msra.mxu0 %v1022
      %1028 = vmatprep.subr.bf16.mxu0 0
      %1029 = vmatpush1.bf16.msra.mxu0 0
      %1030 = vmatprep.subr.bf16.mxu0 0
      %1031 = vmatpush1.bf16.msra.mxu0 0
      %1032 = vmatprep.subr.bf16.mxu0 0
      %1033 = vmatpush1.bf16.msra.mxu0 0
      %1034 = vmatprep.subr.bf16.mxu0 0
      %1035 = vmatpush1.bf16.msra.mxu0 0
      %1036 = vmatprep.subr.bf16.mxu0 0
      %1037 = vmatpush1.bf16.msra.mxu0 0
      %1038 = vmatprep.subr.bf16.mxu0 0
      %1039 = vmatpush1.bf16.msra.mxu0 0
      %1040 = vmatprep.subr.bf16.mxu0 0
      %1041 = vmatpush1.bf16.msra.mxu0 0
      %1042 = vmatprep.subr.bf16.mxu0 0
      %1043 = vmatpush1.bf16.msra.mxu0 0
      %1044 = vmatprep.subr.bf16.mxu0 0
      %1045 = vmatpush1.bf16.msra.mxu0 0
      %1046 = vmatprep.subr.bf16.mxu0 0
      %1047 = vmatpush1.bf16.msra.mxu0 0
      %1048 = vmatprep.subr.bf16.mxu0 0
      %1049 = vmatpush1.bf16.msra.mxu0 0
      %1050 = vmatprep.subr.bf16.mxu0 0
      %1051 = vmatpush1.bf16.msra.mxu0 0
      %1052 = vmatprep.subr.bf16.mxu0 0
      %1053 = vmatpush1.bf16.msra.mxu0 0
      %1054 = vmatprep.subr.bf16.mxu0 0
      %1055 = vmatpush1.bf16.msra.mxu0 0
      %1056 = vmatprep.mubr.bf16.mxu0 0
      %1057 = vmatmul.mubr.bf16.gmra.mrb[0].mxu0 %v772
      %v1058 = vpop.f32.mrb[0].mxu0
      %v1059 = vadd.f32 0.0, %v1058
      %v1060 = vpop.f32.mrb[0].mxu0
      %v1061 = vpop.f32.mrb[0].mxu0
      %v1062 = vadd.f32 0.0, %v1061
      %v1063 = vpop.f32.mrb[0].mxu0
      %1064 = vmatprep.mubr.bf16.mxu0 0
      %1065 = vmatmul.mubr.bf16.gmra.mrb[0].mxu0 %v775
      %v1066 = vpop.f32.mrb[0].mxu0
      %v1067 = vadd.f32 0.0, %v1066
      %v1068 = vpop.f32.mrb[0].mxu0
      %v1069 = vpop.f32.mrb[0].mxu0
      %v1070 = vadd.f32 0.0, %v1069
      %v1071 = vpop.f32.mrb[0].mxu0
      %1072 = vmatprep.mubr.bf16.mxu0 0
      %1073 = vmatmul.mubr.bf16.gmra.mrb[0].mxu0 %v778
      %v1074 = vpop.f32.mrb[0].mxu0
      %v1075 = vadd.f32 0.0, %v1074
      %v1076 = vpop.f32.mrb[0].mxu0
      %v1077 = vpop.f32.mrb[0].mxu0
      %v1078 = vadd.f32 0.0, %v1077
      %v1079 = vpop.f32.mrb[0].mxu0
      %1080 = vmatprep.mubr.bf16.mxu0 0
      %1081 = vmatmul.mubr.bf16.gmra.mrb[0].mxu0 %v781
      %v1082 = vpop.f32.mrb[0].mxu0
      %v1083 = vadd.f32 0.0, %v1082
      %v1084 = vpop.f32.mrb[0].mxu0
      %v1085 = vpop.f32.mrb[0].mxu0
      %v1086 = vadd.f32 0.0, %v1085
      %v1087 = vpop.f32.mrb[0].mxu0
      %1088 = vmatprep.mubr.bf16.mxu0 0
      %1089 = vmatmul.mubr.bf16.gmra.mrb[0].mxu0 %v784
      %v1090 = vpop.f32.mrb[0].mxu0
      %v1091 = vadd.f32 0.0, %v1090
      %v1092 = vpop.f32.mrb[0].mxu0
      %v1093 = vpop.f32.mrb[0].mxu0
      %v1094 = vadd.f32 0.0, %v1093
      %v1095 = vpop.f32.mrb[0].mxu0
      %1096 = vmatprep.mubr.bf16.mxu0 0
      %1097 = vmatmul.mubr.bf16.gmra.mrb[0].mxu0 %v787
      %v1098 = vpop.f32.mrb[0].mxu0
      %v1099 = vadd.f32 0.0, %v1098
      %v1100 = vpop.f32.mrb[0].mxu0
      %v1101 = vpop.f32.mrb[0].mxu0
      %v1102 = vadd.f32 0.0, %v1101
      %v1103 = vpop.f32.mrb[0].mxu0
      %1104 = vmatprep.mubr.bf16.mxu0 0
      %1105 = vmatmul.mubr.bf16.gmra.mrb[0].mxu0 %v790
      %v1106 = vpop.f32.mrb[0].mxu0
      %v1107 = vadd.f32 0.0, %v1106
      %v1108 = vpop.f32.mrb[0].mxu0
      %v1109 = vpop.f32.mrb[0].mxu0
      %v1110 = vadd.f32 0.0, %v1109
      %v1111 = vpop.f32.mrb[0].mxu0
      %1112 = vmatprep.mubr.bf16.mxu0 0
      %1113 = vmatmul.mubr.bf16.gmra.mrb[0].mxu0 %v1019
      %v1114 = vpop.f32.mrb[0].mxu0
      %v1115 = vadd.f32 0.0, %v1114
      %v1116 = vpop.f32.mrb[0].mxu0
      %v1117 = vpop.f32.mrb[0].mxu0
      %v1118 = vadd.f32 0.0, %v1117
      %v1119 = vpop.f32.mrb[0].mxu0
      %1120 = vdwg.mxu0
      %v1121 = vadd.f32 %v943, %v1059
      %v1122 = vadd.f32 %v946, %v1062
      %v1123 = vadd.f32 %v951, %v1067
      %v1124 = vadd.f32 %v954, %v1070
      %v1125 = vadd.f32 %v959, %v1075
      %v1126 = vadd.f32 %v962, %v1078
      %v1127 = vadd.f32 %v967, %v1083
      %v1128 = vadd.f32 %v970, %v1086
      %v1129 = vadd.f32 %v975, %v1091
      %v1130 = vadd.f32 %v978, %v1094
      %v1131 = vadd.f32 %v983, %v1099
      %v1132 = vadd.f32 %v986, %v1102
      %v1133 = vadd.f32 %v991, %v1107
      %v1134 = vadd.f32 %v994, %v1110
      %v1135 = vadd.f32 %v999, %v1115
      %v1136 = vadd.f32 %v1002, %v1118
      %v1137 = vpack.c.bf16 %v1122, %v1121
      %v1138 = vpack.c.bf16 %v1124, %v1123
      %v1139 = vpack.c.bf16 %v1126, %v1125
      %v1140 = vpack.c.bf16 %v1128, %v1127
      %v1141 = vpack.c.bf16 %v1130, %v1129
      %v1142 = vpack.c.bf16 %v1132, %v1131
      %v1143 = vpack.c.bf16 %v1134, %v1133
      %v1144 = vpack.c.bf16 %v1136, %v1135
      %v1153 = vunpack.c.l.b16 %v1137
      %v1154 = vunpack.c.h.b16 %v1137
      %v1155 = vunpack.c.l.b16 %v1138
      %v1156 = vunpack.c.h.b16 %v1138
      %v1157 = vunpack.c.l.b16 %v1139
      %v1158 = vunpack.c.h.b16 %v1139
      %v1159 = vunpack.c.l.b16 %v1140
      %v1160 = vunpack.c.h.b16 %v1140
      %v1161 = vunpack.c.l.b16 %v1141
      %v1162 = vunpack.c.h.b16 %v1141
      %v1163 = vunpack.c.l.b16 %v1142
      %v1164 = vunpack.c.h.b16 %v1142
      %v1165 = vunpack.c.l.b16 %v1143
      %v1166 = vunpack.c.h.b16 %v1143
      %v1167 = vunpack.c.l.b16 %v1144
      %v1168 = vunpack.c.h.b16 %v1144
      %v1169 = vpack.c.b16 %v1153, %v1153
      %v1170 = vpack.c.b16 %v1154, %v1154
      %v1171 = vpack.c.b16 %v1155, %v1155
      %v1172 = vpack.c.b16 %v1156, %v1156
      %v1173 = vpack.c.b16 %v1157, %v1157
      %v1174 = vpack.c.b16 %v1158, %v1158
      %v1175 = vpack.c.b16 %v1159, %v1159
      %v1176 = vpack.c.b16 %v1160, %v1160
      %v1177 = vpack.c.b16 %v1161, %v1161
      %v1178 = vpack.c.b16 %v1162, %v1162
      %v1179 = vpack.c.b16 %v1163, %v1163
      %v1180 = vpack.c.b16 %v1164, %v1164
      %v1181 = vpack.c.b16 %v1165, %v1165
      %v1182 = vpack.c.b16 %v1166, %v1166
      %v1183 = vpack.c.b16 %v1167, %v1167
      %v1184 = vpack.c.b16 %v1168, %v1168
      %vm1201 = vcmask 60416
      %1202 = vst.msk [vmem:[%s286] sm:$0xf] %vm1201, %v1169
      %1203 = vst.msk [vmem:[%s286 + $0x4] sm:$0xf] %vm1201, %v1170
      %1204 = vst.msk [vmem:[%s286 + $0x8] sm:$0xf] %vm1201, %v1171
      %1205 = vst.msk [vmem:[%s286 + $0xc] sm:$0xf] %vm1201, %v1172
      %1206 = vst.msk [vmem:[%s286 + $0x10] sm:$0xf] %vm1201, %v1173
      %1207 = vst.msk [vmem:[%s286 + $0x14] sm:$0xf] %vm1201, %v1174
      %1208 = vst.msk [vmem:[%s286 + $0x18] sm:$0xf] %vm1201, %v1175
      %1209 = vst.msk [vmem:[%s286 + $0x1c] sm:$0xf] %vm1201, %v1176
      %1210 = vst.msk [vmem:[%s286 + $0x20] sm:$0xf] %vm1201, %v1177
      %1211 = vst.msk [vmem:[%s286 + $0x24] sm:$0xf] %vm1201, %v1178
      %1212 = vst.msk [vmem:[%s286 + $0x28] sm:$0xf] %vm1201, %v1179
      %1213 = vst.msk [vmem:[%s286 + $0x2c] sm:$0xf] %vm1201, %v1180
      %1214 = vst.msk [vmem:[%s286 + $0x30] sm:$0xf] %vm1201, %v1181
      %1215 = vst.msk [vmem:[%s286 + $0x34] sm:$0xf] %vm1201, %v1182
      %1216 = vst.msk [vmem:[%s286 + $0x38] sm:$0xf] %vm1201, %v1183
      %1217 = vst.msk [vmem:[%s286 + $0x3c] sm:$0xf] %vm1201, %v1184
      %p1218 = scmp.eq.s32.totalorder %s23, 0
      // Predicated region
      $region37: #{double_conv.4} parent=35 // pred_check
        %p1219 = pneg %p1218
      $region38: #{double_conv.4} parent=35 // pred_check_branch
        %1221 = sbr.rel (%p1219) target = $region40
      $region39: #{double_conv.4} parent=35 // pred_region
        %vm1222 = vcmask 57344
        %1223 = vst.msk [vmem:[%s290] sm:$0x1] %vm1222, 0.0
        %1224 = vst.msk [vmem:[%s293] sm:$0x1] %vm1222, 0.0
      $region40: #{double_conv.4} parent=35 // pred_fallthru
        _
      %v1225 = vld [vmem:[%s290] sm:$0x1]
      %v1226 = vsel %vm699, %v1121, 0.0
      %v1227 = vsel %vm699, %v1122, 0.0
      %v1228 = vadd.f32 %v1226, %v1227
      %v1229 = vsel %vm699, %v1123, 0.0
      %v1230 = vadd.f32 %v1228, %v1229
      %v1231 = vsel %vm699, %v1124, 0.0
      %v1232 = vadd.f32 %v1230, %v1231
      %v1233 = vsel %vm699, %v1125, 0.0
      %v1234 = vadd.f32 %v1232, %v1233
      %v1235 = vsel %vm699, %v1126, 0.0
      %v1236 = vadd.f32 %v1234, %v1235
      %v1237 = vsel %vm699, %v1127, 0.0
      %v1238 = vadd.f32 %v1236, %v1237
      %v1239 = vsel %vm699, %v1128, 0.0
      %v1240 = vadd.f32 %v1238, %v1239
      %v1241 = vsel %vm699, %v1129, 0.0
      %v1242 = vadd.f32 %v1240, %v1241
      %v1243 = vsel %vm699, %v1130, 0.0
      %v1244 = vadd.f32 %v1242, %v1243
      %v1245 = vsel %vm699, %v1131, 0.0
      %v1246 = vadd.f32 %v1244, %v1245
      %v1247 = vsel %vm699, %v1132, 0.0
      %v1248 = vadd.f32 %v1246, %v1247
      %v1249 = vsel %vm699, %v1133, 0.0
      %v1250 = vadd.f32 %v1248, %v1249
      %v1251 = vsel %vm699, %v1134, 0.0
      %v1252 = vadd.f32 %v1250, %v1251
      %v1253 = vsel %vm699, %v1135, 0.0
      %v1254 = vadd.f32 %v1252, %v1253
      %v1255 = vsel %vm699, %v1136, 0.0
      %v1256 = vadd.f32 %v1254, %v1255
      %v1257 = vrot.slane %v1256, 4
      %v1258 = vadd.f32 %v1256, %v1257
      %v1259 = vrot.slane %v1258, 2
      %v1260 = vadd.f32 %v1258, %v1259
      %v1261 = vrot.slane %v1260, 1
      %v1262 = vadd.f32 %v1260, %v1261
      %v1263 = vadd.f32 %v1225, %v1262
      %vm1264 = vcmask 57344
      %1265 = vst.msk [vmem:[%s290] sm:$0x1] %vm1264, %v1263
      %v1266 = vld [vmem:[%s293] sm:$0x1]
      %v1267 = vmul.f32 %v1121, %v1121
      %v1268 = vmul.f32 %v1122, %v1122
      %v1269 = vmul.f32 %v1123, %v1123
      %v1270 = vmul.f32 %v1124, %v1124
      %v1271 = vmul.f32 %v1125, %v1125
      %v1272 = vmul.f32 %v1126, %v1126
      %v1273 = vmul.f32 %v1127, %v1127
      %v1274 = vmul.f32 %v1128, %v1128
      %v1275 = vmul.f32 %v1129, %v1129
      %v1276 = vmul.f32 %v1130, %v1130
      %v1277 = vmul.f32 %v1131, %v1131
      %v1278 = vmul.f32 %v1132, %v1132
      %v1279 = vmul.f32 %v1133, %v1133
      %v1280 = vmul.f32 %v1134, %v1134
      %v1281 = vmul.f32 %v1135, %v1135
      %v1282 = vmul.f32 %v1136, %v1136
      %v1283 = vsel %vm699, %v1267, 0.0
      %v1284 = vsel %vm699, %v1268, 0.0
      %v1285 = vadd.f32 %v1283, %v1284
      %v1286 = vsel %vm699, %v1269, 0.0
      %v1287 = vadd.f32 %v1285, %v1286
      %v1288 = vsel %vm699, %v1270, 0.0
      %v1289 = vadd.f32 %v1287, %v1288
      %v1290 = vsel %vm699, %v1271, 0.0
      %v1291 = vadd.f32 %v1289, %v1290
      %v1292 = vsel %vm699, %v1272, 0.0
      %v1293 = vadd.f32 %v1291, %v1292
      %v1294 = vsel %vm699, %v1273, 0.0
      %v1295 = vadd.f32 %v1293, %v1294
      %v1296 = vsel %vm699, %v1274, 0.0
      %v1297 = vadd.f32 %v1295, %v1296
      %v1298 = vsel %vm699, %v1275, 0.0
      %v1299 = vadd.f32 %v1297, %v1298
      %v1300 = vsel %vm699, %v1276, 0.0
      %v1301 = vadd.f32 %v1299, %v1300
      %v1302 = vsel %vm699, %v1277, 0.0
      %v1303 = vadd.f32 %v1301, %v1302
      %v1304 = vsel %vm699, %v1278, 0.0
      %v1305 = vadd.f32 %v1303, %v1304
      %v1306 = vsel %vm699, %v1279, 0.0
      %v1307 = vadd.f32 %v1305, %v1306
      %v1308 = vsel %vm699, %v1280, 0.0
      %v1309 = vadd.f32 %v1307, %v1308
      %v1310 = vsel %vm699, %v1281, 0.0
      %v1311 = vadd.f32 %v1309, %v1310
      %v1312 = vsel %vm699, %v1282, 0.0
      %v1313 = vadd.f32 %v1311, %v1312
      %v1314 = vrot.slane %v1313, 4
      %v1315 = vadd.f32 %v1313, %v1314
      %v1316 = vrot.slane %v1315, 2
      %v1317 = vadd.f32 %v1315, %v1316
      %v1318 = vrot.slane %v1317, 1
      %v1319 = vadd.f32 %v1317, %v1318
      %v1320 = vadd.f32 %v1266, %v1319
      %1321 = vst.msk [vmem:[%s293] sm:$0x1] %vm1264, %v1320
      %s1322 = smul.u32 8, %s23
      %p1323 = scmp.lt.s32.totalorder %s22, 1
      %s1324 = scalar_select %p1323, %s22, 1
      %p1325 = scmp.lt.s32.totalorder %s1322, 15
      %s1326 = scalar_select %p1325, %s1322, 15
      %s1327 = smul.addr %s1326, 2
      %s1328 = smul.addr %s1324, 32
      %s1329 = sadd.s32 %s1327, %s1328
      %s1330 = smul.addr %s1329, 4
      %s1331 = scalar_lea.vmem %s4, %s1330
      %p1332 = scmp.lt.s32.totalorder %s22, 1
      %s1333 = scalar_select %p1332, %s22, 1
      %s1334 = scalar_lea.vmem %s5, %s1333
      %p1335 = scmp.lt.s32.totalorder %s22, 1
      %s1336 = scalar_select %p1335, %s22, 1
      %s1337 = scalar_lea.vmem %s6, %s1336
      // Predicated region
      $region41: #{double_conv.4} parent=35 // pred_check
        %p1338 = pneg %p139
      $region42: #{double_conv.4} parent=35 // pred_check_branch
        %1340 = sbr.rel (%p1338) target = $region44
      $region43: #{double_conv.4} parent=35 // pred_region
        %s1341 = smul.u32 8, %s23
      $region44: #{double_conv.4} parent=35 // pred_fallthru
        _
      // Predicated region
      $region45: #{double_conv.4} parent=35 // pred_check
        %p1342 = pneg %p165
      $region46: #{double_conv.4} parent=35 // pred_check_branch
        %1344 = sbr.rel (%p1342) target = $region48
      $region47: #{double_conv.4} parent=35 // pred_region
        _
      $region48: #{double_conv.4} parent=35 // pred_fallthru
        _
      // Predicated region
      $region49: #{double_conv.4} parent=35 // pred_check
        %p1345 = pneg %p191
      $region50: #{double_conv.4} parent=35 // pred_check_branch
        %1347 = sbr.rel (%p1345) target = $region52
      $region51: #{double_conv.4} parent=35 // pred_region
        _
      $region52: #{double_conv.4} parent=35 // pred_fallthru
        _
    $region36: #{double_conv.4} parent=5 // pred_fallthru
      _
    %p1348 = scmp.le.s32.totalorder 2, %s13
    // Predicated region
    $region53: #{double_conv.4} parent=5 // pred_check
      %p1349 = pneg %p1348
    $region54: #{double_conv.4} parent=5 // pred_check_branch
      %1351 = sbr.rel (%p1349) target = $region56
    $region55: #{double_conv.4} parent=5 // pred_region
      %s1352 = ssub.s32 %s13, 2
      // Predicated region
      $region57: #{double_conv.4} parent=55 // pred_check
        %p1353 = pneg %p145
      $region58: #{double_conv.4} parent=55 // pred_check_branch
        %1355 = sbr.rel (%p1353) target = $region60
      $region59: #{double_conv.4} parent=55 // pred_region
        %s1356 = smul.u32 8, %s25
        %p1357 = scmp.lt.s32.totalorder %s24, 1
        %s1358 = scalar_select %p1357, %s24, 1
        %p1359 = scmp.lt.s32.totalorder %s1356, 15
        %s1360 = scalar_select %p1359, %s1356, 15
        %s1361 = smul.addr %s1360, 2
        %s1362 = smul.addr %s1358, 32
        %s1363 = sadd.s32 %s1361, %s1362
        %s1364 = smul.addr %s1363, 4
        %s1365 = scalar_lea.vmem %s4, %s1364
      $region60: #{double_conv.4} parent=55 // pred_fallthru
        _
      // Predicated region
      $region61: #{double_conv.4} parent=55 // pred_check
        %p1366 = pneg %p171
      $region62: #{double_conv.4} parent=55 // pred_check_branch
        %1368 = sbr.rel (%p1366) target = $region64
      $region63: #{double_conv.4} parent=55 // pred_region
        %p1369 = scmp.lt.s32.totalorder %s24, 1
        %s1370 = scalar_select %p1369, %s24, 1
        %s1371 = scalar_lea.vmem %s5, %s1370
      $region64: #{double_conv.4} parent=55 // pred_fallthru
        _
      // Predicated region
      $region65: #{double_conv.4} parent=55 // pred_check
        %p1372 = pneg %p197
      $region66: #{double_conv.4} parent=55 // pred_check_branch
        %1374 = sbr.rel (%p1372) target = $region68
      $region67: #{double_conv.4} parent=55 // pred_region
        %p1375 = scmp.lt.s32.totalorder %s24, 1
        %s1376 = scalar_select %p1375, %s24, 1
        %s1377 = scalar_lea.vmem %s6, %s1376
      $region68: #{double_conv.4} parent=55 // pred_fallthru
        _
    $region56: #{double_conv.4} parent=5 // pred_fallthru
      _
  $region6: #{double_conv.4} parent=0 // loop_footer
    %s17 = sadd.s32 1, %s13
  $region7: #{double_conv.4} parent=0 // loop_footer_branch
    %12 = sbr.rel target = $region3
  $region8: #{double_conv.4} parent=0 // loop_exit
    _

// kernel: double_conv.3
$region0: #{double_conv.3}
  #allocation0 [shape = 'u32[]', space=smem, size = 0x4, offset = 0x4, fixed_abs, tag = 'smem constant byte address 0x4 - core index']
  #allocation1 [shape = 'u32[144,128]{1,0:T(1,128)}', space=vmem, size = 0x12000, scoped, tag = 'internal scratch']
  %s0 = inlined_call_operand.vmem [shape: f32[1,4], index: 0, kind: input, shape index: {}]
  %s1 = inlined_call_operand.vmem [shape: f32[1,4], index: 1, kind: input, shape index: {}]
  %s2 = inlined_call_operand.vmem [shape: bf16[2,16,16,4], index: 2, kind: input, shape index: {}]
  %s3 = inlined_call_operand.vmem [shape: bf16[3,12,8], index: 3, kind: input, shape index: {}]
  %s4 = inlined_call_operand.vmem [shape: bf16[2,16,16,8], index: 4, kind: output, shape index: {0}]
  %s5 = inlined_call_operand.vmem [shape: f32[2,1,8], index: 5, kind: output, shape index: {1}]
  %s6 = inlined_call_operand.vmem [shape: f32[2,1,8], index: 6, kind: output, shape index: {2}]
  %7 = xla_tuple %s4, %s5, %s6
  %s8 = sld [smem:[#allocation0]]
  $region69: #{double_conv.3} parent=0
    _
  %s10 = ssub.s32 1, %s8
  %s11 = scalar_select 0, %s10, %s8
  loop: start=0, step=1, limit=6
  $region2: #{double_conv.3} parent=0 // loop_pre_header
    _
  $region3: #{double_conv.3} parent=0 // loop_header
    %s13 = sphi 0, %s17
    %p14 = scmp.ge.s32.totalorder %s13, 6
    %s20 = sphi 0, %s32
    %s21 = sphi 0, %s28
    %s22 = sphi 0, %s20
    %s23 = sphi 0, %s21
    %s24 = sphi 0, %s22
    %s25 = sphi 0, %s23
    %s33 = sphi 0, %s33
    %s35 = sphi 0, %s33
    %s36 = sphi 0, %s35
    %s50 = sphi 0, %s36
    %s54 = sphi 0, %s54
    %s56 = sphi 0, %s54
    %s57 = sphi 0, %s56
    %s71 = sphi 0, %s57
    %s77 = sphi 0, %s79
    %s80 = sphi 0, %s77
    %s81 = sphi 0, %s80
    %s97 = sphi 0, %s81
    %s101 = sphi 0, %s101
    %s103 = sphi 0, %s101
    %s104 = sphi 0, %s103
    %s118 = sphi 0, %s104
    %s126 = sphi 0, %s128
    %s129 = sphi 0, %s126
    %s130 = sphi 0, %s129
    %s146 = sphi 0, %s130
    %s152 = sphi 0, %s154
    %s155 = sphi 0, %s152
    %s156 = sphi 0, %s155
    %s172 = sphi 0, %s156
    %s178 = sphi 0, %s180
    %s181 = sphi 0, %s178
    %s182 = sphi 0, %s181
    %s198 = sphi 0, %s182
  $region4: #{double_conv.3} parent=0 // loop_header_branch
    %16 = sbr.rel (%p14) target = $region8
  $region5: #{double_conv.3} parent=0 // loop_body
    %s18 = ssub.s32 %s13, 1
    %s19 = ssub.s32 %s13, 2
    %s26 = sadd.s32 1, %s21
    %p27 = scmp.ge.s32.totalorder %s26, 2
    %s28 = scalar_select %p27, 0, %s26
    %s29 = sadd.s32 1, %s20
    %s30 = scalar_select %p27, %s29, %s20
    %p31 = scmp.ge.s32.totalorder %s30, 2
    %s32 = scalar_select %p31, 0, %s30
    %s34 = sadd.s32 %s33, 1
    %p37 = scmp.eq.s32.totalorder %s13, 3
    %p38 = scmp.ne.s32.totalorder %s33, %s35
    %p39 = scmp.eq.s32.totalorder %s13, 0
    %p40 = por %p38, %p39
    %p41 = scmp.ne.s32.totalorder %s33, %s35
    %p42 = scmp.eq.s32.totalorder %s18, 3
    %p43 = por %p41, %p42
    %p44 = scmp.ne.s32.totalorder %s35, %s36
    %p45 = scmp.eq.s32.totalorder %s18, 0
    %p46 = por %p44, %p45
    %p47 = scmp.ne.s32.totalorder %s35, %s36
    %p48 = scmp.eq.s32.totalorder %s19, 3
    %p49 = por %p47, %p48
    %p51 = scmp.ne.s32.totalorder %s36, %s50
    %p52 = scmp.eq.s32.totalorder %s19, 0
    %p53 = por %p51, %p52
    %s55 = sadd.s32 %s54, 1
    %p58 = scmp.eq.s32.totalorder %s13, 3
    %p59 = scmp.ne.s32.totalorder %s54, %s56
    %p60 = scmp.eq.s32.totalorder %s13, 0
    %p61 = por %p59, %p60
    %p62 = scmp.ne.s32.totalorder %s54, %s56
    %p63 = scmp.eq.s32.totalorder %s18, 3
    %p64 = por %p62, %p63
    %p65 = scmp.ne.s32.totalorder %s56, %s57
    %p66 = scmp.eq.s32.totalorder %s18, 0
    %p67 = por %p65, %p66
    %p68 = scmp.ne.s32.totalorder %s56, %s57
    %p69 = scmp.eq.s32.totalorder %s19, 3
    %p70 = por %p68, %p69
    %p72 = scmp.ne.s32.totalorder %s57, %s71
    %p73 = scmp.eq.s32.totalorder %s19, 0
    %p74 = por %p72, %p73
    %s75 = ssub.s32 %s20, %s32
    %p76 = scmp.eq.s32.totalorder %s75, 0
    %s78 = sadd.s32 %s77, 1
    %s79 = scalar_select %p76, %s77, %s78
    %p82 = pneg %p76
    %p83 = scmp.eq.s32.totalorder %s13, 3
    %p84 = por %p82, %p83
    %p85 = scmp.ne.s32.totalorder %s77, %s80
    %p86 = scmp.eq.s32.totalorder %s13, 0
    %p87 = por %p85, %p86
    %p88 = scmp.ne.s32.totalorder %s77, %s80
    %p89 = scmp.eq.s32.totalorder %s18, 3
    %p90 = por %p88, %p89
    %p91 = scmp.ne.s32.totalorder %s80, %s81
    %p92 = scmp.eq.s32.totalorder %s18, 0
    %p93 = por %p91, %p92
    %p94 = scmp.ne.s32.totalorder %s80, %s81
    %p95 = scmp.eq.s32.totalorder %s19, 3
    %p96 = por %p94, %p95
    %p98 = scmp.ne.s32.totalorder %s81, %s97
    %p99 = scmp.eq.s32.totalorder %s19, 0
    %p100 = por %p98, %p99
    %s102 = sadd.s32 %s101, 1
    %p105 = scmp.eq.s32.totalorder %s13, 3
    %p106 = scmp.ne.s32.totalorder %s101, %s103
    %p107 = scmp.eq.s32.totalorder %s13, 0
    %p108 = por %p106, %p107
    %p109 = scmp.ne.s32.totalorder %s101, %s103
    %p110 = scmp.eq.s32.totalorder %s18, 3
    %p111 = por %p109, %p110
    %p112 = scmp.ne.s32.totalorder %s103, %s104
    %p113 = scmp.eq.s32.totalorder %s18, 0
    %p114 = por %p112, %p113
    %p115 = scmp.ne.s32.totalorder %s103, %s104
    %p116 = scmp.eq.s32.totalorder %s19, 3
    %p117 = por %p115, %p116
    %p119 = scmp.ne.s32.totalorder %s104, %s118
    %p120 = scmp.eq.s32.totalorder %s19, 0
    %p121 = por %p119, %p120
    %s122 = ssub.s32 %s20, %s32
    %s123 = ssub.s32 %s21, %s28
    %s124 = sor.u32 %s122, %s123
    %p125 = scmp.eq.s32.totalorder %s124, 0
    %s127 = sadd.s32 %s126, 1
    %s128 = scalar_select %p125, %s126, %s127
    %p131 = pneg %p125
    %p132 = scmp.eq.s32.totalorder %s13, 3
    %p133 = por %p131, %p132
    %p134 = scmp.ne.s32.totalorder %s126, %s129
    %p135 = scmp.eq.s32.totalorder %s13, 0
    %p136 = por %p134, %p135
    %p137 = scmp.ne.s32.totalorder %s126, %s129
    %p138 = scmp.eq.s32.totalorder %s18, 3
    %p139 = por %p137, %p138
    %p140 = scmp.ne.s32.totalorder %s129, %s130
    %p141 = scmp.eq.s32.totalorder %s18, 0
    %p142 = por %p140, %p141
    %p143 = scmp.ne.s32.totalorder %s129, %s130
    %p144 = scmp.eq.s32.totalorder %s19, 3
    %p145 = por %p143, %p144
    %p147 = scmp.ne.s32.totalorder %s130, %s146
    %p148 = scmp.eq.s32.totalorder %s19, 0
    %p149 = por %p147, %p148
    %s150 = ssub.s32 %s20, %s32
    %p151 = scmp.eq.s32.totalorder %s150, 0
    %s153 = sadd.s32 %s152, 1
    %s154 = scalar_select %p151, %s152, %s153
    %p157 = pneg %p151
    %p158 = scmp.eq.s32.totalorder %s13, 3
    %p159 = por %p157, %p158
    %p160 = scmp.ne.s32.totalorder %s152, %s155
    %p161 = scmp.eq.s32.totalorder %s13, 0
    %p162 = por %p160, %p161
    %p163 = scmp.ne.s32.totalorder %s152, %s155
    %p164 = scmp.eq.s32.totalorder %s18, 3
    %p165 = por %p163, %p164
    %p166 = scmp.ne.s32.totalorder %s155, %s156
    %p167 = scmp.eq.s32.totalorder %s18, 0
    %p168 = por %p166, %p167
    %p169 = scmp.ne.s32.totalorder %s155, %s156
    %p170 = scmp.eq.s32.totalorder %s19, 3
    %p171 = por %p169, %p170
    %p173 = scmp.ne.s32.totalorder %s156, %s172
    %p174 = scmp.eq.s32.totalorder %s19, 0
    %p175 = por %p173, %p174
    %s176 = ssub.s32 %s20, %s32
    %p177 = scmp.eq.s32.totalorder %s176, 0
    %s179 = sadd.s32 %s178, 1
    %s180 = scalar_select %p177, %s178, %s179
    %p183 = pneg %p177
    %p184 = scmp.eq.s32.totalorder %s13, 3
    %p185 = por %p183, %p184
    %p186 = scmp.ne.s32.totalorder %s178, %s181
    %p187 = scmp.eq.s32.totalorder %s13, 0
    %p188 = por %p186, %p187
    %p189 = scmp.ne.s32.totalorder %s178, %s181
    %p190 = scmp.eq.s32.totalorder %s18, 3
    %p191 = por %p189, %p190
    %p192 = scmp.ne.s32.totalorder %s181, %s182
    %p193 = scmp.eq.s32.totalorder %s18, 0
    %p194 = por %p192, %p193
    %p195 = scmp.ne.s32.totalorder %s181, %s182
    %p196 = scmp.eq.s32.totalorder %s19, 3
    %p197 = por %p195, %p196
    %p199 = scmp.ne.s32.totalorder %s182, %s198
    %p200 = scmp.eq.s32.totalorder %s19, 0
    %p201 = por %p199, %p200
    %p202 = scmp.le.s32.totalorder 1, %s13
    %p203 = scmp.lt.s32.totalorder %s13, 5
    %p204 = pnand %p202, %p203
    %p205 = pneg %p204
    // Predicated region
    $region9: #{double_conv.3} parent=5 // pred_check
      _
    $region10: #{double_conv.3} parent=5 // pred_check_branch
      %207 = sbr.rel (%p204) target = $region12
    $region11: #{double_conv.3} parent=5 // pred_region
      %s208 = ssub.s32 %s13, 1
      // Predicated region
      $region13: #{double_conv.3} parent=11 // pred_check
        %p209 = pneg %p46
      $region14: #{double_conv.3} parent=11 // pred_check_branch
        %211 = sbr.rel (%p209) target = $region16
      $region15: #{double_conv.3} parent=11 // pred_region
        _
      $region16: #{double_conv.3} parent=11 // pred_fallthru
        _
      // Predicated region
      $region17: #{double_conv.3} parent=11 // pred_check
        %p212 = pneg %p67
      $region18: #{double_conv.3} parent=11 // pred_check_branch
        %214 = sbr.rel (%p212) target = $region20
      $region19: #{double_conv.3} parent=11 // pred_region
        _
      $region20: #{double_conv.3} parent=11 // pred_fallthru
        _
      // Predicated region
      $region21: #{double_conv.3} parent=11 // pred_check
        %p215 = pneg %p114
      $region22: #{double_conv.3} parent=11 // pred_check_branch
        %217 = sbr.rel (%p215) target = $region24
      $region23: #{double_conv.3} parent=11 // pred_region
        _
      $region24: #{double_conv.3} parent=11 // pred_fallthru
        _
    $region12: #{double_conv.3} parent=5 // pred_fallthru
      _
    %p218 = scmp.lt.s32.totalorder %s13, 4
    // Predicated region
    $region25: #{double_conv.3} parent=5 // pred_check
      %p219 = pneg %p218
    $region26: #{double_conv.3} parent=5 // pred_check_branch
      %221 = sbr.rel (%p219) target = $region28
    $region27: #{double_conv.3} parent=5 // pred_region
      // Predicated region
      $region29: #{double_conv.3} parent=27 // pred_check
        %p222 = pneg %p87
      $region30: #{double_conv.3} parent=27 // pred_check_branch
        %224 = sbr.rel (%p222) target = $region32
      $region31: #{double_conv.3} parent=27 // pred_region
        %p225 = scmp.lt.s32.totalorder %s20, 1
        %s226 = scalar_select %p225, %s20, 1
        %s227 = smul.addr %s226, 32
        %s228 = smul.addr %s227, 4
        %s229 = scalar_lea.vmem %s2, %s228
      $region32: #{double_conv.3} parent=27 // pred_fallthru
        _
    $region28: #{double_conv.3} parent=5 // pred_fallthru
      _
    %p230 = scmp.le.s32.totalorder 1, %s13
    %p231 = scmp.lt.s32.totalorder %s13, 5
    %p232 = pnand %p230, %p231
    %p233 = pneg %p232
    // Predicated region
    $region33: #{double_conv.3} parent=5 // pred_check
      _
    $region34: #{double_conv.3} parent=5 // pred_check_branch
      %235 = sbr.rel (%p232) target = $region36
    $region35: #{double_conv.3} parent=5 // pred_region
      %s236 = ssub.s32 %s13, 1
      %p237 = pneg %p46
      %p238 = pneg %p43
      %p239 = pneg %p67
      %p240 = pneg %p64
      %p241 = scmp.lt.s32.totalorder %s22, 1
      %s242 = scalar_select %p241, %s22, 1
      %s243 = smul.addr %s242, 32
      %s244 = smul.addr %s243, 4
      %s245 = scalar_lea.vmem %s2, %s244
      %p246 = pneg %p93
      %p247 = pneg %p90
      %p248 = pneg %p114
      %p249 = pneg %p111
      %p250 = pneg %p142
      %p251 = pneg %p139
      %s252 = smul.u32 8, %s23
      %p253 = scmp.lt.s32.totalorder %s22, 1
      %s254 = scalar_select %p253, %s22, 1
      %p255 = scmp.lt.s32.totalorder %s252, 15
      %s256 = scalar_select %p255, %s252, 15
      %s257 = smul.addr %s256, 2
      %s258 = smul.addr %s254, 32
      %s259 = sadd.s32 %s257, %s258
      %s260 = smul.addr %s259, 4
      %s261 = scalar_lea.vmem %s4, %s260
      %p262 = pneg %p168
      %p263 = pneg %p165
      %p264 = scmp.lt.s32.totalorder %s22, 1
      %s265 = scalar_select %p264, %s22, 1
      %s266 = scalar_lea.vmem %s5, %s265
      %p267 = pneg %p194
      %p268 = pneg %p191
      %p269 = scmp.lt.s32.totalorder %s22, 1
      %s270 = scalar_select %p269, %s22, 1
      %s271 = scalar_lea.vmem %s6, %s270
      %p272 = scmp.lt.s32.totalorder %s22, 1
      %s273 = scalar_select %p272, %s22, 1
      %s274 = smul.addr %s273, 32
      %s275 = smul.addr %s274, 4
      %s276 = scalar_lea.vmem %s2, %s275
      %s277 = smul.u32 8, %s23
      %p278 = scmp.lt.s32.totalorder %s22, 1
      %s279 = scalar_select %p278, %s22, 1
      %p280 = scmp.lt.s32.totalorder %s277, 15
      %s281 = scalar_select %p280, %s277, 15
      %s282 = smul.addr %s281, 2
      %s283 = smul.addr %s279, 32
      %s284 = sadd.s32 %s282, %s283
      %s285 = smul.addr %s284, 4
      %s286 = scalar_lea.vmem %s4, %s285
      %s287 = smul.u32 8, %s23
      %p288 = scmp.lt.s32.totalorder %s22, 1
      %s289 = scalar_select %p288, %s22, 1
      %s290 = scalar_lea.vmem %s5, %s289
      %p291 = scmp.lt.s32.totalorder %s22, 1
      %s292 = scalar_select %p291, %s22, 1
      %s293 = scalar_lea.vmem %s6, %s292
      %s295 = smul.u32 %s23, 8
      %s296 = smul.u32 %s295, 2
      %s297 = smul.addr %s296, 4
      %s298 = scalar_lea.vmem %s276, %s297
      %v299 = vld [vmem:[%s298] sm:$0xf]
      %v300 = vld [vmem:[%s298 + $0x4] sm:$0xf]
      %v301 = vld [vmem:[%s298 + $0x8] sm:$0xf]
      %v302 = vld [vmem:[%s298 + $0xc] sm:$0xf]
      %v303 = vld [vmem:[%s298 + $0x10] sm:$0xf]
      %v304 = vld [vmem:[%s298 + $0x14] sm:$0xf]
      %v305 = vld [vmem:[%s298 + $0x18] sm:$0xf]
      %v306 = vld [vmem:[%s298 + $0x1c] sm:$0xf]
      %v307 = vld [vmem:[%s298 + $0x20] sm:$0xf]
      %v308 = vld [vmem:[%s298 + $0x24] sm:$0xf]
      %v309 = vld [vmem:[%s298 + $0x28] sm:$0xf]
      %v310 = vld [vmem:[%s298 + $0x2c] sm:$0xf]
      %v311 = vld [vmem:[%s298 + $0x30] sm:$0xf]
      %v312 = vld [vmem:[%s298 + $0x34] sm:$0xf]
      %v313 = vld [vmem:[%s298 + $0x38] sm:$0xf]
      %v314 = vld [vmem:[%s298 + $0x3c] sm:$0xf]
      %v315 = vunpack.c.l.bf16 %v299
      %v316 = vunpack.c.l.bf16 %v300
      %v317 = vunpack.c.l.bf16 %v301
      %v318 = vunpack.c.l.bf16 %v302
      %v319 = vunpack.c.l.bf16 %v303
      %v320 = vunpack.c.l.bf16 %v304
      %v321 = vunpack.c.l.bf16 %v305
      %v322 = vunpack.c.l.bf16 %v306
      %v323 = vunpack.c.l.bf16 %v307
      %v324 = vunpack.c.l.bf16 %v308
      %v325 = vunpack.c.l.bf16 %v309
      %v326 = vunpack.c.l.bf16 %v310
      %v327 = vunpack.c.l.bf16 %v311
      %v328 = vunpack.c.l.bf16 %v312
      %v329 = vunpack.c.l.bf16 %v313
      %v330 = vunpack.c.l.bf16 %v314
      %s331 = ssub.s32 %s295, 1
      %p332 = scmp.gt.s32.totalorder %s331, 0
      %s333 = scalar_select %p332, %s331, 0
      %s334 = smul.u32 %s333, 2
      %s335 = smul.addr %s334, 4
      %s336 = scalar_lea.vmem %s276, %s335
      %v337 = vld [vmem:[%s336] sm:$0xf]
      %v338 = vld [vmem:[%s336 + $0x4] sm:$0xf]
      %v339 = vunpack.c.l.bf16 %v337
      %v340 = vunpack.c.l.bf16 %v338
      %s341 = sadd.s32 %s295, 8
      %p342 = scmp.lt.s32.totalorder %s341, 15
      %s343 = scalar_select %p342, %s341, 15
      %s344 = smul.u32 %s343, 2
      %s345 = smul.addr %s344, 4
      %s346 = scalar_lea.vmem %s276, %s345
      %v347 = vld [vmem:[%s346] sm:$0xf]
      %v348 = vld [vmem:[%s346 + $0x4] sm:$0xf]
      %v349 = vunpack.c.l.bf16 %v347
      %v350 = vunpack.c.l.bf16 %v348
      %p351 = scmp.gt.s32.totalorder %s23, 0
      %s352 = scalar_select %p351, 1, 0
      %v353 = vstv %s352
      %vm354 = vcmp.eq.s32.totalorder %v353, 1
      %v355 = vsel %vm354, %v339, 0.0
      %v356 = vsel %vm354, %v340, 0.0
      %p357 = scmp.lt.s32.totalorder %s23, 1
      %s358 = scalar_select %p357, 1, 0
      %v359 = vstv %s358
      %vm360 = vcmp.eq.s32.totalorder %v359, 1
      %v361 = vsel %vm360, %v349, 0.0
      %v362 = vsel %vm360, %v350, 0.0
      %vm383 = vcmask 1040384
      %v384 = vrot.slane %v355, 7
      %v385 = vrot.slane %v356, 7
      %v386 = vsel %vm383, %v384, %v385
      %v387 = vrot.slane %v315, 7
      %v388 = vrot.slane %v316, 7
      %v389 = vsel %vm383, %v387, %v388
      %v390 = vrot.slane %v317, 7
      %v391 = vrot.slane %v318, 7
      %v392 = vsel %vm383, %v390, %v391
      %v393 = vrot.slane %v319, 7
      %v394 = vrot.slane %v320, 7
      %v395 = vsel %vm383, %v393, %v394
      %v396 = vrot.slane %v321, 7
      %v397 = vrot.slane %v322, 7
      %v398 = vsel %vm383, %v396, %v397
      %v399 = vrot.slane %v323, 7
      %v400 = vrot.slane %v324, 7
      %v401 = vsel %vm383, %v399, %v400
      %v402 = vrot.slane %v325, 7
      %v403 = vrot.slane %v326, 7
      %v404 = vsel %vm383, %v402, %v403
      %v405 = vrot.slane %v327, 7
      %v406 = vrot.slane %v328, 7
      %v407 = vsel %vm383, %v405, %v406
      %v408 = vrot.slane %v329, 7
      %v409 = vrot.slane %v330, 7
      %v410 = vsel %vm383, %v408, %v409
      %v411 = vrot.slane %v361, 7
      %v412 = vrot.slane %v362, 7
      %v413 = vsel %vm383, %v411, %v412
      %v434 = vsel %vm383, 0.0, %v384
      %v435 = vsel %vm383, 0.0, %v387
      %v436 = vsel %vm383, 0.0, %v390
      %v437 = vsel %vm383, 0.0, %v393
      %v438 = vsel %vm383, 0.0, %v396
      %v439 = vsel %vm383, 0.0, %v399
      %v440 = vsel %vm383, 0.0, %v402
      %v441 = vsel %vm383, 0.0, %v405
      %v442 = vsel %vm383, 0.0, %v408
      %v443 = vsel %vm383, 0.0, %v411
      %vm444 = vcmask 1046528
      %v445 = vrot.slane %v355, 1
      %v446 = vrot.slane %v356, 1
      %v447 = vsel %vm444, %v445, %v446
      %v448 = vrot.slane %v315, 1
      %v449 = vrot.slane %v316, 1
      %v450 = vsel %vm444, %v448, %v449
      %v451 = vrot.slane %v317, 1
      %v452 = vrot.slane %v318, 1
      %v453 = vsel %vm444, %v451, %v452
      %v454 = vrot.slane %v319, 1
      %v455 = vrot.slane %v320, 1
      %v456 = vsel %vm444, %v454, %v455
      %v457 = vrot.slane %v321, 1
      %v458 = vrot.slane %v322, 1
      %v459 = vsel %vm444, %v457, %v458
      %v460 = vrot.slane %v323, 1
      %v461 = vrot.slane %v324, 1
      %v462 = vsel %vm444, %v460, %v461
      %v463 = vrot.slane %v325, 1
      %v464 = vrot.slane %v326, 1
      %v465 = vsel %vm444, %v463, %v464
      %v466 = vrot.slane %v327, 1
      %v467 = vrot.slane %v328, 1
      %v468 = vsel %vm444, %v466, %v467
      %v469 = vrot.slane %v329, 1
      %v470 = vrot.slane %v330, 1
      %v471 = vsel %vm444, %v469, %v470
      %v472 = vrot.slane %v361, 1
      %v473 = vrot.slane %v362, 1
      %v474 = vsel %vm444, %v472, %v473
      %v485 = vsel %vm444, %v446, 0.0
      %v486 = vsel %vm444, %v449, 0.0
      %v487 = vsel %vm444, %v452, 0.0
      %v488 = vsel %vm444, %v455, 0.0
      %v489 = vsel %vm444, %v458, 0.0
      %v490 = vsel %vm444, %v461, 0.0
      %v491 = vsel %vm444, %v464, 0.0
      %v492 = vsel %vm444, %v467, 0.0
      %v493 = vsel %vm444, %v470, 0.0
      %v494 = vsel %vm444, %v473, 0.0
      %495 = vrot.lane.b32.xlu0 %v355, 4
      %v496 = vpop.permute.xlu0 %495
      %497 = vrot.lane.b32.xlu0 %v356, 4
      %v498 = vpop.permute.xlu0 %497
      %499 = vrot.lane.b32.xlu0 %v315, 4
      %v500 = vpop.permute.xlu0 %499
      %501 = vrot.lane.b32.xlu0 %v316, 4
      %v502 = vpop.permute.xlu0 %501
      %503 = vrot.lane.b32.xlu0 %v317, 4
      %v504 = vpop.permute.xlu0 %503
      %505 = vrot.lane.b32.xlu0 %v318, 4
      %v506 = vpop.permute.xlu0 %505
      %507 = vrot.lane.b32.xlu0 %v319, 4
      %v508 = vpop.permute.xlu0 %507
      %509 = vrot.lane.b32.xlu0 %v320, 4
      %v510 = vpop.permute.xlu0 %509
      %511 = vrot.lane.b32.xlu0 %v321, 4
      %v512 = vpop.permute.xlu0 %511
      %513 = vrot.lane.b32.xlu0 %v322, 4
      %v514 = vpop.permute.xlu0 %513
      %515 = vrot.lane.b32.xlu0 %v323, 4
      %v516 = vpop.permute.xlu0 %515
      %517 = vrot.lane.b32.xlu0 %v324, 4
      %v518 = vpop.permute.xlu0 %517
      %519 = vrot.lane.b32.xlu0 %v325, 4
      %v520 = vpop.permute.xlu0 %519
      %521 = vrot.lane.b32.xlu0 %v326, 4
      %v522 = vpop.permute.xlu0 %521
      %523 = vrot.lane.b32.xlu0 %v327, 4
      %v524 = vpop.permute.xlu0 %523
      %525 = vrot.lane.b32.xlu0 %v328, 4
      %v526 = vpop.permute.xlu0 %525
      %527 = vrot.lane.b32.xlu0 %v329, 4
      %v528 = vpop.permute.xlu0 %527
      %529 = vrot.lane.b32.xlu0 %v330, 4
      %v530 = vpop.permute.xlu0 %529
      %531 = vrot.lane.b32.xlu0 %v361, 4
      %v532 = vpop.permute.xlu0 %531
      %533 = vrot.lane.b32.xlu0 %v362, 4
      %v534 = vpop.permute.xlu0 %533
      %565 = vrot.lane.b32.xlu0 %v447, 8
      %v566 = vpop.permute.xlu0 %565
      %567 = vrot.lane.b32.xlu0 %v485, 8
      %v568 = vpop.permute.xlu0 %567
      %569 = vrot.lane.b32.xlu0 %v450, 8
      %v570 = vpop.permute.xlu0 %569
      %571 = vrot.lane.b32.xlu0 %v486, 8
      %v572 = vpop.permute.xlu0 %571
      %573 = vrot.lane.b32.xlu0 %v453, 8
      %v574 = vpop.permute.xlu0 %573
      %575 = vrot.lane.b32.xlu0 %v487, 8
      %v576 = vpop.permute.xlu0 %575
      %577 = vrot.lane.b32.xlu0 %v456, 8
      %v578 = vpop.permute.xlu0 %577
      %579 = vrot.lane.b32.xlu0 %v488, 8
      %v580 = vpop.permute.xlu0 %579
      %581 = vrot.lane.b32.xlu0 %v459, 8
      %v582 = vpop.permute.xlu0 %581
      %583 = vrot.lane.b32.xlu0 %v489, 8
      %v584 = vpop.permute.xlu0 %583
      %585 = vrot.lane.b32.xlu0 %v462, 8
      %v586 = vpop.permute.xlu0 %585
      %587 = vrot.lane.b32.xlu0 %v490, 8
      %v588 = vpop.permute.xlu0 %587
      %589 = vrot.lane.b32.xlu0 %v465, 8
      %v590 = vpop.permute.xlu0 %589
      %591 = vrot.lane.b32.xlu0 %v491, 8
      %v592 = vpop.permute.xlu0 %591
      %593 = vrot.lane.b32.xlu0 %v468, 8
      %v594 = vpop.permute.xlu0 %593
      %595 = vrot.lane.b32.xlu0 %v492, 8
      %v596 = vpop.permute.xlu0 %595
      %597 = vrot.lane.b32.xlu0 %v471, 8
      %v598 = vpop.permute.xlu0 %597
      %599 = vrot.lane.b32.xlu0 %v493, 8
      %v600 = vpop.permute.xlu0 %599
      %601 = vrot.lane.b32.xlu0 %v474, 8
      %v602 = vpop.permute.xlu0 %601
      %603 = vrot.lane.b32.xlu0 %v494, 8
      %v604 = vpop.permute.xlu0 %603
      %vm625 = vcmask 31744
      %v626 = vsel %vm625, %v434, %v496
      %v627 = vsel %vm625, %v386, %v498
      %v628 = vsel %vm625, %v435, %v500
      %v629 = vsel %vm625, %v389, %v502
      %v630 = vsel %vm625, %v436, %v504
      %v631 = vsel %vm625, %v392, %v506
      %v632 = vsel %vm625, %v437, %v508
      %v633 = vsel %vm625, %v395, %v510
      %v634 = vsel %vm625, %v438, %v512
      %v635 = vsel %vm625, %v398, %v514
      %v636 = vsel %vm625, %v439, %v516
      %v637 = vsel %vm625, %v401, %v518
      %v638 = vsel %vm625, %v440, %v520
      %v639 = vsel %vm625, %v404, %v522
      %v640 = vsel %vm625, %v441, %v524
      %v641 = vsel %vm625, %v407, %v526
      %v642 = vsel %vm625, %v442, %v528
      %v643 = vsel %vm625, %v410, %v530
      %v644 = vsel %vm625, %v443, %v532
      %v645 = vsel %vm625, %v413, %v534
      %vm646 = vcmask 64512
      %v647 = vsel %vm646, %v626, %v566
      %v648 = vsel %vm646, %v627, %v568
      %v649 = vsel %vm646, %v628, %v570
      %v650 = vsel %vm646, %v629, %v572
      %v651 = vsel %vm646, %v630, %v574
      %v652 = vsel %vm646, %v631, %v576
      %v653 = vsel %vm646, %v632, %v578
      %v654 = vsel %vm646, %v633, %v580
      %v655 = vsel %vm646, %v634, %v582
      %v656 = vsel %vm646, %v635, %v584
      %v657 = vsel %vm646, %v636, %v586
      %v658 = vsel %vm646, %v637, %v588
      %v659 = vsel %vm646, %v638, %v590
      %v660 = vsel %vm646, %v639, %v592
      %v661 = vsel %vm646, %v640, %v594
      %v662 = vsel %vm646, %v641, %v596
      %v663 = vsel %vm646, %v642, %v598
      %v664 = vsel %vm646, %v643, %v600
      %v665 = vsel %vm646, %v644, %v602
      %v666 = vsel %vm646, %v645, %v604
      %v667 = vpack.c.bf16 %v648, %v647
      %v668 = vpack.c.bf16 %v650, %v649
      %v669 = vpack.c.bf16 %v652, %v651
      %v670 = vpack.c.bf16 %v654, %v653
      %v671 = vpack.c.bf16 %v656, %v655
      %v672 = vpack.c.bf16 %v658, %v657
      %v673 = vpack.c.bf16 %v660, %v659
      %v674 = vpack.c.bf16 %v662, %v661
      %v675 = vpack.c.bf16 %v664, %v663
      %v676 = vpack.c.bf16 %v666, %v665
      %v677 = vld [vmem:[%s3] sm:$0xf]
      %v678 = vld [vmem:[%s3 + $0x4] sm:$0x3]
      %s679 = scalar_lea.vmem %s3, 8
      %v680 = vld [vmem:[%s679] sm:$0xf]
      %v681 = vld [vmem:[%s679 + $0x4] sm:$0x3]
      %v684 = vunpack.c.l.b16 %v680
      %v685 = vunpack.c.l.b16 %v681
      %v686 = vpack.c.b16 %v685, %v684
      %vm687 = vcmask 97280
      %v689 = vsel %vm687, %v668, 0
      %v692 = vsel %vm687, %v669, 0
      %v695 = vsel %vm687, %v670, 0
      %v698 = vsel %vm687, %v671, 0
      %v701 = vsel %vm687, %v672, 0
      %v704 = vsel %vm687, %v673, 0
      %v707 = vsel %vm687, %v674, 0
      %v710 = vsel %vm687, %v675, 0
      %vm712 = vcmask 1045504
      %v714 = vsel %vm712, %v686, 0
      %716 = vmatprep.subr.bf16.mxu0 0
      %717 = vmatpush1.bf16.msra.mxu0 %v714
      %718 = vmatprep.subr.bf16.mxu0 0
      %719 = vmatpush1.bf16.msra.mxu0 0
      %720 = vmatprep.subr.bf16.mxu0 0
      %721 = vmatpush1.bf16.msra.mxu0 0
      %722 = vmatprep.subr.bf16.mxu0 0
      %723 = vmatpush1.bf16.msra.mxu0 0
      %724 = vmatprep.subr.bf16.mxu0 0
      %725 = vmatpush1.bf16.msra.mxu0 0
      %726 = vmatprep.subr.bf16.mxu0 0
      %727 = vmatpush1.bf16.msra.mxu0 0
      %728 = vmatprep.subr.bf16.mxu0 0
      %729 = vmatpush1.bf16.msra.mxu0 0
      %730 = vmatprep.subr.bf16.mxu0 0
      %731 = vmatpush1.bf16.msra.mxu0 0
      %732 = vmatprep.subr.bf16.mxu0 0
      %733 = vmatpush1.bf16.msra.mxu0 0
      %734 = vmatprep.subr.bf16.mxu0 0
      %735 = vmatpush1.bf16.msra.mxu0 0
      %736 = vmatprep.subr.bf16.mxu0 0
      %737 = vmatpush1.bf16.msra.mxu0 0
      %738 = vmatprep.subr.bf16.mxu0 0
      %739 = vmatpush1.bf16.msra.mxu0 0
      %740 = vmatprep.subr.bf16.mxu0 0
      %741 = vmatpush1.bf16.msra.mxu0 0
      %742 = vmatprep.subr.bf16.mxu0 0
      %743 = vmatpush1.bf16.msra.mxu0 0
      %744 = vmatprep.subr.bf16.mxu0 0
      %745 = vmatpush1.bf16.msra.mxu0 0
      %746 = vmatprep.subr.bf16.mxu0 0
      %747 = vmatpush1.bf16.msra.mxu0 0
      %748 = vmatprep.mubr.bf16.mxu0 0
      %749 = vmatmul.mubr.bf16.gmra.mrb[0].mxu0 %v689
      %v750 = vpop.f32.mrb[0].mxu0
      %v751 = vadd.f32 0.0, %v750
      %v752 = vpop.f32.mrb[0].mxu0
      %v753 = vpop.f32.mrb[0].mxu0
      %v754 = vadd.f32 0.0, %v753
      %v755 = vpop.f32.mrb[0].mxu0
      %756 = vmatprep.mubr.bf16.mxu0 0
      %757 = vmatmul.mubr.bf16.gmra.mrb[0].mxu0 %v692
      %v758 = vpop.f32.mrb[0].mxu0
      %v759 = vadd.f32 0.0, %v758
      %v760 = vpop.f32.mrb[0].mxu0
      %v761 = vpop.f32.mrb[0].mxu0
      %v762 = vadd.f32 0.0, %v761
      %v763 = vpop.f32.mrb[0].mxu0
      %764 = vmatprep.mubr.bf16.mxu0 0
      %765 = vmatmul.mubr.bf16.gmra.mrb[0].mxu0 %v695
      %v766 = vpop.f32.mrb[0].mxu0
      %v767 = vadd.f32 0.0, %v766
      %v768 = vpop.f32.mrb[0].mxu0
      %v769 = vpop.f32.mrb[0].mxu0
      %v770 = vadd.f32 0.0, %v769
      %v771 = vpop.f32.mrb[0].mxu0
      %772 = vmatprep.mubr.bf16.mxu0 0
      %773 = vmatmul.mubr.bf16.gmra.mrb[0].mxu0 %v698
      %v774 = vpop.f32.mrb[0].mxu0
      %v775 = vadd.f32 0.0, %v774
      %v776 = vpop.f32.mrb[0].mxu0
      %v777 = vpop.f32.mrb[0].mxu0
      %v778 = vadd.f32 0.0, %v777
      %v779 = vpop.f32.mrb[0].mxu0
      %780 = vmatprep.mubr.bf16.mxu0 0
      %781 = vmatmul.mubr.bf16.gmra.mrb[0].mxu0 %v701
      %v782 = vpop.f32.mrb[0].mxu0
      %v783 = vadd.f32 0.0, %v782
      %v784 = vpop.f32.mrb[0].mxu0
      %v785 = vpop.f32.mrb[0].mxu0
      %v786 = vadd.f32 0.0, %v785
      %v787 = vpop.f32.mrb[0].mxu0
      %788 = vmatprep.mubr.bf16.mxu0 0
      %789 = vmatmul.mubr.bf16.gmra.mrb[0].mxu0 %v704
      %v790 = vpop.f32.mrb[0].mxu0
      %v791 = vadd.f32 0.0, %v790
      %v792 = vpop.f32.mrb[0].mxu0
      %v793 = vpop.f32.mrb[0].mxu0
      %v794 = vadd.f32 0.0, %v793
      %v795 = vpop.f32.mrb[0].mxu0
      %796 = vmatprep.mubr.bf16.mxu0 0
      %797 = vmatmul.mubr.bf16.gmra.mrb[0].mxu0 %v707
      %v798 = vpop.f32.mrb[0].mxu0
      %v799 = vadd.f32 0.0, %v798
      %v800 = vpop.f32.mrb[0].mxu0
      %v801 = vpop.f32.mrb[0].mxu0
      %v802 = vadd.f32 0.0, %v801
      %v803 = vpop.f32.mrb[0].mxu0
      %804 = vmatprep.mubr.bf16.mxu0 0
      %805 = vmatmul.mubr.bf16.gmra.mrb[0].mxu0 %v710
      %v806 = vpop.f32.mrb[0].mxu0
      %v807 = vadd.f32 0.0, %v806
      %v808 = vpop.f32.mrb[0].mxu0
      %v809 = vpop.f32.mrb[0].mxu0
      %v810 = vadd.f32 0.0, %v809
      %v811 = vpop.f32.mrb[0].mxu0
      %812 = vdwg.mxu0
      %v815 = vunpack.c.l.b16 %v677
      %v816 = vunpack.c.l.b16 %v678
      %v817 = vpack.c.b16 %v816, %v815
      %v819 = vsel %vm687, %v667, 0
      %v822 = vsel %vm712, %v817, 0
      %824 = vmatprep.subr.bf16.mxu0 0
      %825 = vmatpush1.bf16.msra.mxu0 %v822
      %826 = vmatprep.subr.bf16.mxu0 0
      %827 = vmatpush1.bf16.msra.mxu0 0
      %828 = vmatprep.subr.bf16.mxu0 0
      %829 = vmatpush1.bf16.msra.mxu0 0
      %830 = vmatprep.subr.bf16.mxu0 0
      %831 = vmatpush1.bf16.msra.mxu0 0
      %832 = vmatprep.subr.bf16.mxu0 0
      %833 = vmatpush1.bf16.msra.mxu0 0
      %834 = vmatprep.subr.bf16.mxu0 0
      %835 = vmatpush1.bf16.msra.mxu0 0
      %836 = vmatprep.subr.bf16.mxu0 0
      %837 = vmatpush1.bf16.msra.mxu0 0
      %838 = vmatprep.subr.bf16.mxu0 0
      %839 = vmatpush1.bf16.msra.mxu0 0
      %840 = vmatprep.subr.bf16.mxu0 0
      %841 = vmatpush1.bf16.msra.mxu0 0
      %842 = vmatprep.subr.bf16.mxu0 0
      %843 = vmatpush1.bf16.msra.mxu0 0
      %844 = vmatprep.subr.bf16.mxu0 0
      %845 = vmatpush1.bf16.msra.mxu0 0
      %846 = vmatprep.subr.bf16.mxu0 0
      %847 = vmatpush1.bf16.msra.mxu0 0
      %848 = vmatprep.subr.bf16.mxu0 0
      %849 = vmatpush1.bf16.msra.mxu0 0
      %850 = vmatprep.subr.bf16.mxu0 0
      %851 = vmatpush1.bf16.msra.mxu0 0
      %852 = vmatprep.subr.bf16.mxu0 0
      %853 = vmatpush1.bf16.msra.mxu0 0
      %854 = vmatprep.subr.bf16.mxu0 0
      %855 = vmatpush1.bf16.msra.mxu0 0
      %856 = vmatprep.mubr.bf16.mxu0 0
      %857 = vmatmul.mubr.bf16.gmra.mrb[0].mxu0 %v819
      %v858 = vpop.f32.mrb[0].mxu0
      %v859 = vadd.f32 %v751, %v858
      %v860 = vpop.f32.mrb[0].mxu0
      %v861 = vpop.f32.mrb[0].mxu0
      %v862 = vadd.f32 %v754, %v861
      %v863 = vpop.f32.mrb[0].mxu0
      %864 = vmatprep.mubr.bf16.mxu0 0
      %865 = vmatmul.mubr.bf16.gmra.mrb[0].mxu0 %v689
      %v866 = vpop.f32.mrb[0].mxu0
      %v867 = vadd.f32 %v759, %v866
      %v868 = vpop.f32.mrb[0].mxu0
      %v869 = vpop.f32.mrb[0].mxu0
      %v870 = vadd.f32 %v762, %v869
      %v871 = vpop.f32.mrb[0].mxu0
      %872 = vmatprep.mubr.bf16.mxu0 0
      %873 = vmatmul.mubr.bf16.gmra.mrb[0].mxu0 %v692
      %v874 = vpop.f32.mrb[0].mxu0
      %v875 = vadd.f32 %v767, %v874
      %v876 = vpop.f32.mrb[0].mxu0
      %v877 = vpop.f32.mrb[0].mxu0
      %v878 = vadd.f32 %v770, %v877
      %v879 = vpop.f32.mrb[0].mxu0
      %880 = vmatprep.mubr.bf16.mxu0 0
      %881 = vmatmul.mubr.bf16.gmra.mrb[0].mxu0 %v695
      %v882 = vpop.f32.mrb[0].mxu0
      %v883 = vadd.f32 %v775, %v882
      %v884 = vpop.f32.mrb[0].mxu0
      %v885 = vpop.f32.mrb[0].mxu0
      %v886 = vadd.f32 %v778, %v885
      %v887 = vpop.f32.mrb[0].mxu0
      %888 = vmatprep.mubr.bf16.mxu0 0
      %889 = vmatmul.mubr.bf16.gmra.mrb[0].mxu0 %v698
      %v890 = vpop.f32.mrb[0].mxu0
      %v891 = vadd.f32 %v783, %v890
      %v892 = vpop.f32.mrb[0].mxu0
      %v893 = vpop.f32.mrb[0].mxu0
      %v894 = vadd.f32 %v786, %v893
      %v895 = vpop.f32.mrb[0].mxu0
      %896 = vmatprep.mubr.bf16.mxu0 0
      %897 = vmatmul.mubr.bf16.gmra.mrb[0].mxu0 %v701
      %v898 = vpop.f32.mrb[0].mxu0
      %v899 = vadd.f32 %v791, %v898
      %v900 = vpop.f32.mrb[0].mxu0
      %v901 = vpop.f32.mrb[0].mxu0
      %v902 = vadd.f32 %v794, %v901
      %v903 = vpop.f32.mrb[0].mxu0
      %904 = vmatprep.mubr.bf16.mxu0 0
      %905 = vmatmul.mubr.bf16.gmra.mrb[0].mxu0 %v704
      %v906 = vpop.f32.mrb[0].mxu0
      %v907 = vadd.f32 %v799, %v906
      %v908 = vpop.f32.mrb[0].mxu0
      %v909 = vpop.f32.mrb[0].mxu0
      %v910 = vadd.f32 %v802, %v909
      %v911 = vpop.f32.mrb[0].mxu0
      %912 = vmatprep.mubr.bf16.mxu0 0
      %913 = vmatmul.mubr.bf16.gmra.mrb[0].mxu0 %v707
      %v914 = vpop.f32.mrb[0].mxu0
      %v915 = vadd.f32 %v807, %v914
      %v916 = vpop.f32.mrb[0].mxu0
      %v917 = vpop.f32.mrb[0].mxu0
      %v918 = vadd.f32 %v810, %v917
      %v919 = vpop.f32.mrb[0].mxu0
      %920 = vdwg.mxu0
      %s921 = scalar_lea.vmem %s3, 16
      %v922 = vld [vmem:[%s921] sm:$0xf]
      %v923 = vld [vmem:[%s921 + $0x4] sm:$0x3]
      %v926 = vunpack.c.l.b16 %v922
      %v927 = vunpack.c.l.b16 %v923
      %v928 = vpack.c.b16 %v927, %v926
      %v930 = vsel %vm687, %v676, 0
      %v933 = vsel %vm712, %v928, 0
      %935 = vmatprep.subr.bf16.mxu0 0
      %936 = vmatpush1.bf16.msra.mxu0 %v933
      %937 = vmatprep.subr.bf16.mxu0 0
      %938 = vmatpush1.bf16.msra.mxu0 0
      %939 = vmatprep.subr.bf16.mxu0 0
      %940 = vmatpush1.bf16.msra.mxu0 0
      %941 = vmatprep.subr.bf16.mxu0 0
      %942 = vmatpush1.bf16.msra.mxu0 0
      %943 = vmatprep.subr.bf16.mxu0 0
      %944 = vmatpush1.bf16.msra.mxu0 0
      %945 = vmatprep.subr.bf16.mxu0 0
      %946 = vmatpush1.bf16.msra.mxu0 0
      %947 = vmatprep.subr.bf16.mxu0 0
      %948 = vmatpush1.bf16.msra.mxu0 0
      %949 = vmatprep.subr.bf16.mxu0 0
      %950 = vmatpush1.bf16.msra.mxu0 0
      %951 = vmatprep.subr.bf16.mxu0 0
      %952 = vmatpush1.bf16.msra.mxu0 0
      %953 = vmatprep.subr.bf16.mxu0 0
      %954 = vmatpush1.bf16.msra.mxu0 0
      %955 = vmatprep.subr.bf16.mxu0 0
      %956 = vmatpush1.bf16.msra.mxu0 0
      %957 = vmatprep.subr.bf16.mxu0 0
      %958 = vmatpush1.bf16.msra.mxu0 0
      %959 = vmatprep.subr.bf16.mxu0 0
      %960 = vmatpush1.bf16.msra.mxu0 0
      %961 = vmatprep.subr.bf16.mxu0 0
      %962 = vmatpush1.bf16.msra.mxu0 0
      %963 = vmatprep.subr.bf16.mxu0 0
      %964 = vmatpush1.bf16.msra.mxu0 0
      %965 = vmatprep.subr.bf16.mxu0 0
      %966 = vmatpush1.bf16.msra.mxu0 0
      %967 = vmatprep.mubr.bf16.mxu0 0
      %968 = vmatmul.mubr.bf16.gmra.mrb[0].mxu0 %v692
      %v969 = vpop.f32.mrb[0].mxu0
      %v970 = vadd.f32 0.0, %v969
      %v971 = vpop.f32.mrb[0].mxu0
      %v972 = vpop.f32.mrb[0].mxu0
      %v973 = vadd.f32 0.0, %v972
      %v974 = vpop.f32.mrb[0].mxu0
      %975 = vmatprep.mubr.bf16.mxu0 0
      %976 = vmatmul.mubr.bf16.gmra.mrb[0].mxu0 %v695
      %v977 = vpop.f32.mrb[0].mxu0
      %v978 = vadd.f32 0.0, %v977
      %v979 = vpop.f32.mrb[0].mxu0
      %v980 = vpop.f32.mrb[0].mxu0
      %v981 = vadd.f32 0.0, %v980
      %v982 = vpop.f32.mrb[0].mxu0
      %983 = vmatprep.mubr.bf16.mxu0 0
      %984 = vmatmul.mubr.bf16.gmra.mrb[0].mxu0 %v698
      %v985 = vpop.f32.mrb[0].mxu0
      %v986 = vadd.f32 0.0, %v985
      %v987 = vpop.f32.mrb[0].mxu0
      %v988 = vpop.f32.mrb[0].mxu0
      %v989 = vadd.f32 0.0, %v988
      %v990 = vpop.f32.mrb[0].mxu0
      %991 = vmatprep.mubr.bf16.mxu0 0
      %992 = vmatmul.mubr.bf16.gmra.mrb[0].mxu0 %v701
      %v993 = vpop.f32.mrb[0].mxu0
      %v994 = vadd.f32 0.0, %v993
      %v995 = vpop.f32.mrb[0].mxu0
      %v996 = vpop.f32.mrb[0].mxu0
      %v997 = vadd.f32 0.0, %v996
      %v998 = vpop.f32.mrb[0].mxu0
      %999 = vmatprep.mubr.bf16.mxu0 0
      %1000 = vmatmul.mubr.bf16.gmra.mrb[0].mxu0 %v704
      %v1001 = vpop.f32.mrb[0].mxu0
      %v1002 = vadd.f32 0.0, %v1001
      %v1003 = vpop.f32.mrb[0].mxu0
      %v1004 = vpop.f32.mrb[0].mxu0
      %v1005 = vadd.f32 0.0, %v1004
      %v1006 = vpop.f32.mrb[0].mxu0
      %1007 = vmatprep.mubr.bf16.mxu0 0
      %1008 = vmatmul.mubr.bf16.gmra.mrb[0].mxu0 %v707
      %v1009 = vpop.f32.mrb[0].mxu0
      %v1010 = vadd.f32 0.0, %v1009
      %v1011 = vpop.f32.mrb[0].mxu0
      %v1012 = vpop.f32.mrb[0].mxu0
      %v1013 = vadd.f32 0.0, %v1012
      %v1014 = vpop.f32.mrb[0].mxu0
      %1015 = vmatprep.mubr.bf16.mxu0 0
      %1016 = vmatmul.mubr.bf16.gmra.mrb[0].mxu0 %v710
      %v1017 = vpop.f32.mrb[0].mxu0
      %v1018 = vadd.f32 0.0, %v1017
      %v1019 = vpop.f32.mrb[0].mxu0
      %v1020 = vpop.f32.mrb[0].mxu0
      %v1021 = vadd.f32 0.0, %v1020
      %v1022 = vpop.f32.mrb[0].mxu0
      %1023 = vmatprep.mubr.bf16.mxu0 0
      %1024 = vmatmul.mubr.bf16.gmra.mrb[0].mxu0 %v930
      %v1025 = vpop.f32.mrb[0].mxu0
      %v1026 = vadd.f32 0.0, %v1025
      %v1027 = vpop.f32.mrb[0].mxu0
      %v1028 = vpop.f32.mrb[0].mxu0
      %v1029 = vadd.f32 0.0, %v1028
      %v1030 = vpop.f32.mrb[0].mxu0
      %1031 = vdwg.mxu0
      %v1032 = vadd.f32 %v859, %v970
      %v1033 = vadd.f32 %v862, %v973
      %v1034 = vadd.f32 %v867, %v978
      %v1035 = vadd.f32 %v870, %v981
      %v1036 = vadd.f32 %v875, %v986
      %v1037 = vadd.f32 %v878, %v989
      %v1038 = vadd.f32 %v883, %v994
      %v1039 = vadd.f32 %v886, %v997
      %v1040 = vadd.f32 %v891, %v1002
      %v1041 = vadd.f32 %v894, %v1005
      %v1042 = vadd.f32 %v899, %v1010
      %v1043 = vadd.f32 %v902, %v1013
      %v1044 = vadd.f32 %v907, %v1018
      %v1045 = vadd.f32 %v910, %v1021
      %v1046 = vadd.f32 %v915, %v1026
      %v1047 = vadd.f32 %v918, %v1029
      %v1048 = vpack.c.bf16 %v1033, %v1032
      %v1049 = vpack.c.bf16 %v1035, %v1034
      %v1050 = vpack.c.bf16 %v1037, %v1036
      %v1051 = vpack.c.bf16 %v1039, %v1038
      %v1052 = vpack.c.bf16 %v1041, %v1040
      %v1053 = vpack.c.bf16 %v1043, %v1042
      %v1054 = vpack.c.bf16 %v1045, %v1044
      %v1055 = vpack.c.bf16 %v1047, %v1046
      %v1064 = vunpack.c.l.b16 %v1048
      %v1065 = vunpack.c.h.b16 %v1048
      %v1066 = vunpack.c.l.b16 %v1049
      %v1067 = vunpack.c.h.b16 %v1049
      %v1068 = vunpack.c.l.b16 %v1050
      %v1069 = vunpack.c.h.b16 %v1050
      %v1070 = vunpack.c.l.b16 %v1051
      %v1071 = vunpack.c.h.b16 %v1051
      %v1072 = vunpack.c.l.b16 %v1052
      %v1073 = vunpack.c.h.b16 %v1052
      %v1074 = vunpack.c.l.b16 %v1053
      %v1075 = vunpack.c.h.b16 %v1053
      %v1076 = vunpack.c.l.b16 %v1054
      %v1077 = vunpack.c.h.b16 %v1054
      %v1078 = vunpack.c.l.b16 %v1055
      %v1079 = vunpack.c.h.b16 %v1055
      %v1080 = vpack.c.b16 %v1064, %v1064
      %v1081 = vpack.c.b16 %v1065, %v1065
      %v1082 = vpack.c.b16 %v1066, %v1066
      %v1083 = vpack.c.b16 %v1067, %v1067
      %v1084 = vpack.c.b16 %v1068, %v1068
      %v1085 = vpack.c.b16 %v1069, %v1069
      %v1086 = vpack.c.b16 %v1070, %v1070
      %v1087 = vpack.c.b16 %v1071, %v1071
      %v1088 = vpack.c.b16 %v1072, %v1072
      %v1089 = vpack.c.b16 %v1073, %v1073
      %v1090 = vpack.c.b16 %v1074, %v1074
      %v1091 = vpack.c.b16 %v1075, %v1075
      %v1092 = vpack.c.b16 %v1076, %v1076
      %v1093 = vpack.c.b16 %v1077, %v1077
      %v1094 = vpack.c.b16 %v1078, %v1078
      %v1095 = vpack.c.b16 %v1079, %v1079
      %vm1112 = vcmask 60416
      %1113 = vst.msk [vmem:[%s286] sm:$0xf] %vm1112, %v1080
      %1114 = vst.msk [vmem:[%s286 + $0x4] sm:$0xf] %vm1112, %v1081
      %1115 = vst.msk [vmem:[%s286 + $0x8] sm:$0xf] %vm1112, %v1082
      %1116 = vst.msk [vmem:[%s286 + $0xc] sm:$0xf] %vm1112, %v1083
      %1117 = vst.msk [vmem:[%s286 + $0x10] sm:$0xf] %vm1112, %v1084
      %1118 = vst.msk [vmem:[%s286 + $0x14] sm:$0xf] %vm1112, %v1085
      %1119 = vst.msk [vmem:[%s286 + $0x18] sm:$0xf] %vm1112, %v1086
      %1120 = vst.msk [vmem:[%s286 + $0x1c] sm:$0xf] %vm1112, %v1087
      %1121 = vst.msk [vmem:[%s286 + $0x20] sm:$0xf] %vm1112, %v1088
      %1122 = vst.msk [vmem:[%s286 + $0x24] sm:$0xf] %vm1112, %v1089
      %1123 = vst.msk [vmem:[%s286 + $0x28] sm:$0xf] %vm1112, %v1090
      %1124 = vst.msk [vmem:[%s286 + $0x2c] sm:$0xf] %vm1112, %v1091
      %1125 = vst.msk [vmem:[%s286 + $0x30] sm:$0xf] %vm1112, %v1092
      %1126 = vst.msk [vmem:[%s286 + $0x34] sm:$0xf] %vm1112, %v1093
      %1127 = vst.msk [vmem:[%s286 + $0x38] sm:$0xf] %vm1112, %v1094
      %1128 = vst.msk [vmem:[%s286 + $0x3c] sm:$0xf] %vm1112, %v1095
      %p1129 = scmp.eq.s32.totalorder %s23, 0
      // Predicated region
      $region37: #{double_conv.3} parent=35 // pred_check
        %p1130 = pneg %p1129
      $region38: #{double_conv.3} parent=35 // pred_check_branch
        %1132 = sbr.rel (%p1130) target = $region40
      $region39: #{double_conv.3} parent=35 // pred_region
        %vm1133 = vcmask 57344
        %1134 = vst.msk [vmem:[%s290] sm:$0x1] %vm1133, 0.0
        %1135 = vst.msk [vmem:[%s293] sm:$0x1] %vm1133, 0.0
      $region40: #{double_conv.3} parent=35 // pred_fallthru
        _
      %v1136 = vld [vmem:[%s290] sm:$0x1]
      %v1137 = vsel %vm646, %v1032, 0.0
      %v1138 = vsel %vm646, %v1033, 0.0
      %v1139 = vadd.f32 %v1137, %v1138
      %v1140 = vsel %vm646, %v1034, 0.0
      %v1141 = vadd.f32 %v1139, %v1140
      %v1142 = vsel %vm646, %v1035, 0.0
      %v1143 = vadd.f32 %v1141, %v1142
      %v1144 = vsel %vm646, %v1036, 0.0
      %v1145 = vadd.f32 %v1143, %v1144
      %v1146 = vsel %vm646, %v1037, 0.0
      %v1147 = vadd.f32 %v1145, %v1146
      %v1148 = vsel %vm646, %v1038, 0.0
      %v1149 = vadd.f32 %v1147, %v1148
      %v1150 = vsel %vm646, %v1039, 0.0
      %v1151 = vadd.f32 %v1149, %v1150
      %v1152 = vsel %vm646, %v1040, 0.0
      %v1153 = vadd.f32 %v1151, %v1152
      %v1154 = vsel %vm646, %v1041, 0.0
      %v1155 = vadd.f32 %v1153, %v1154
      %v1156 = vsel %vm646, %v1042, 0.0
      %v1157 = vadd.f32 %v1155, %v1156
      %v1158 = vsel %vm646, %v1043, 0.0
      %v1159 = vadd.f32 %v1157, %v1158
      %v1160 = vsel %vm646, %v1044, 0.0
      %v1161 = vadd.f32 %v1159, %v1160
      %v1162 = vsel %vm646, %v1045, 0.0
      %v1163 = vadd.f32 %v1161, %v1162
      %v1164 = vsel %vm646, %v1046, 0.0
      %v1165 = vadd.f32 %v1163, %v1164
      %v1166 = vsel %vm646, %v1047, 0.0
      %v1167 = vadd.f32 %v1165, %v1166
      %v1168 = vrot.slane %v1167, 4
      %v1169 = vadd.f32 %v1167, %v1168
      %v1170 = vrot.slane %v1169, 2
      %v1171 = vadd.f32 %v1169, %v1170
      %v1172 = vrot.slane %v1171, 1
      %v1173 = vadd.f32 %v1171, %v1172
      %v1174 = vadd.f32 %v1136, %v1173
      %vm1175 = vcmask 57344
      %1176 = vst.msk [vmem:[%s290] sm:$0x1] %vm1175, %v1174
      %v1177 = vld [vmem:[%s293] sm:$0x1]
      %v1178 = vmul.f32 %v1032, %v1032
      %v1179 = vmul.f32 %v1033, %v1033
      %v1180 = vmul.f32 %v1034, %v1034
      %v1181 = vmul.f32 %v1035, %v1035
      %v1182 = vmul.f32 %v1036, %v1036
      %v1183 = vmul.f32 %v1037, %v1037
      %v1184 = vmul.f32 %v1038, %v1038
      %v1185 = vmul.f32 %v1039, %v1039
      %v1186 = vmul.f32 %v1040, %v1040
      %v1187 = vmul.f32 %v1041, %v1041
      %v1188 = vmul.f32 %v1042, %v1042
      %v1189 = vmul.f32 %v1043, %v1043
      %v1190 = vmul.f32 %v1044, %v1044
      %v1191 = vmul.f32 %v1045, %v1045
      %v1192 = vmul.f32 %v1046, %v1046
      %v1193 = vmul.f32 %v1047, %v1047
      %v1194 = vsel %vm646, %v1178, 0.0
      %v1195 = vsel %vm646, %v1179, 0.0
      %v1196 = vadd.f32 %v1194, %v1195
      %v1197 = vsel %vm646, %v1180, 0.0
      %v1198 = vadd.f32 %v1196, %v1197
      %v1199 = vsel %vm646, %v1181, 0.0
      %v1200 = vadd.f32 %v1198, %v1199
      %v1201 = vsel %vm646, %v1182, 0.0
      %v1202 = vadd.f32 %v1200, %v1201
      %v1203 = vsel %vm646, %v1183, 0.0
      %v1204 = vadd.f32 %v1202, %v1203
      %v1205 = vsel %vm646, %v1184, 0.0
      %v1206 = vadd.f32 %v1204, %v1205
      %v1207 = vsel %vm646, %v1185, 0.0
      %v1208 = vadd.f32 %v1206, %v1207
      %v1209 = vsel %vm646, %v1186, 0.0
      %v1210 = vadd.f32 %v1208, %v1209
      %v1211 = vsel %vm646, %v1187, 0.0
      %v1212 = vadd.f32 %v1210, %v1211
      %v1213 = vsel %vm646, %v1188, 0.0
      %v1214 = vadd.f32 %v1212, %v1213
      %v1215 = vsel %vm646, %v1189, 0.0
      %v1216 = vadd.f32 %v1214, %v1215
      %v1217 = vsel %vm646, %v1190, 0.0
      %v1218 = vadd.f32 %v1216, %v1217
      %v1219 = vsel %vm646, %v1191, 0.0
      %v1220 = vadd.f32 %v1218, %v1219
      %v1221 = vsel %vm646, %v1192, 0.0
      %v1222 = vadd.f32 %v1220, %v1221
      %v1223 = vsel %vm646, %v1193, 0.0
      %v1224 = vadd.f32 %v1222, %v1223
      %v1225 = vrot.slane %v1224, 4
      %v1226 = vadd.f32 %v1224, %v1225
      %v1227 = vrot.slane %v1226, 2
      %v1228 = vadd.f32 %v1226, %v1227
      %v1229 = vrot.slane %v1228, 1
      %v1230 = vadd.f32 %v1228, %v1229
      %v1231 = vadd.f32 %v1177, %v1230
      %1232 = vst.msk [vmem:[%s293] sm:$0x1] %vm1175, %v1231
      %s1233 = smul.u32 8, %s23
      %p1234 = scmp.lt.s32.totalorder %s22, 1
      %s1235 = scalar_select %p1234, %s22, 1
      %p1236 = scmp.lt.s32.totalorder %s1233, 15
      %s1237 = scalar_select %p1236, %s1233, 15
      %s1238 = smul.addr %s1237, 2
      %s1239 = smul.addr %s1235, 32
      %s1240 = sadd.s32 %s1238, %s1239
      %s1241 = smul.addr %s1240, 4
      %s1242 = scalar_lea.vmem %s4, %s1241
      %p1243 = scmp.lt.s32.totalorder %s22, 1
      %s1244 = scalar_select %p1243, %s22, 1
      %s1245 = scalar_lea.vmem %s5, %s1244
      %p1246 = scmp.lt.s32.totalorder %s22, 1
      %s1247 = scalar_select %p1246, %s22, 1
      %s1248 = scalar_lea.vmem %s6, %s1247
      // Predicated region
      $region41: #{double_conv.3} parent=35 // pred_check
        %p1249 = pneg %p139
      $region42: #{double_conv.3} parent=35 // pred_check_branch
        %1251 = sbr.rel (%p1249) target = $region44
      $region43: #{double_conv.3} parent=35 // pred_region
        %s1252 = smul.u32 8, %s23
      $region44: #{double_conv.3} parent=35 // pred_fallthru
        _
      // Predicated region
      $region45: #{double_conv.3} parent=35 // pred_check
        %p1253 = pneg %p165
      $region46: #{double_conv.3} parent=35 // pred_check_branch
        %1255 = sbr.rel (%p1253) target = $region48
      $region47: #{double_conv.3} parent=35 // pred_region
        _
      $region48: #{double_conv.3} parent=35 // pred_fallthru
        _
      // Predicated region
      $region49: #{double_conv.3} parent=35 // pred_check
        %p1256 = pneg %p191
      $region50: #{double_conv.3} parent=35 // pred_check_branch
        %1258 = sbr.rel (%p1256) target = $region52
      $region51: #{double_conv.3} parent=35 // pred_region
        _
      $region52: #{double_conv.3} parent=35 // pred_fallthru
        _
    $region36: #{double_conv.3} parent=5 // pred_fallthru
      _
    %p1259 = scmp.le.s32.totalorder 2, %s13
    // Predicated region
    $region53: #{double_conv.3} parent=5 // pred_check
      %p1260 = pneg %p1259
    $region54: #{double_conv.3} parent=5 // pred_check_branch
      %1262 = sbr.rel (%p1260) target = $region56
    $region55: #{double_conv.3} parent=5 // pred_region
      %s1263 = ssub.s32 %s13, 2
      // Predicated region
      $region57: #{double_conv.3} parent=55 // pred_check
        %p1264 = pneg %p145
      $region58: #{double_conv.3} parent=55 // pred_check_branch
        %1266 = sbr.rel (%p1264) target = $region60
      $region59: #{double_conv.3} parent=55 // pred_region
        %s1267 = smul.u32 8, %s25
        %p1268 = scmp.lt.s32.totalorder %s24, 1
        %s1269 = scalar_select %p1268, %s24, 1
        %p1270 = scmp.lt.s32.totalorder %s1267, 15
        %s1271 = scalar_select %p1270, %s1267, 15
        %s1272 = smul.addr %s1271, 2
        %s1273 = smul.addr %s1269, 32
        %s1274 = sadd.s32 %s1272, %s1273
        %s1275 = smul.addr %s1274, 4
        %s1276 = scalar_lea.vmem %s4, %s1275
      $region60: #{double_conv.3} parent=55 // pred_fallthru
        _
      // Predicated region
      $region61: #{double_conv.3} parent=55 // pred_check
        %p1277 = pneg %p171
      $region62: #{double_conv.3} parent=55 // pred_check_branch
        %1279 = sbr.rel (%p1277) target = $region64
      $region63: #{double_conv.3} parent=55 // pred_region
        %p1280 = scmp.lt.s32.totalorder %s24, 1
        %s1281 = scalar_select %p1280, %s24, 1
        %s1282 = scalar_lea.vmem %s5, %s1281
      $region64: #{double_conv.3} parent=55 // pred_fallthru
        _
      // Predicated region
      $region65: #{double_conv.3} parent=55 // pred_check
        %p1283 = pneg %p197
      $region66: #{double_conv.3} parent=55 // pred_check_branch
        %1285 = sbr.rel (%p1283) target = $region68
      $region67: #{double_conv.3} parent=55 // pred_region
        %p1286 = scmp.lt.s32.totalorder %s24, 1
        %s1287 = scalar_select %p1286, %s24, 1
        %s1288 = scalar_lea.vmem %s6, %s1287
      $region68: #{double_conv.3} parent=55 // pred_fallthru
        _
    $region56: #{double_conv.3} parent=5 // pred_fallthru
      _
  $region6: #{double_conv.3} parent=0 // loop_footer
    %s17 = sadd.s32 1, %s13
  $region7: #{double_conv.3} parent=0 // loop_footer_branch
    %12 = sbr.rel target = $region3
  $region8: #{double_conv.3} parent=0 // loop_exit
    _

</llo_original>
